<compile_context>
chip_gen: v7x
topology: tpu7x:2x2x1
jax: 0.10.0
libtpu: 0.0.40
codegen_flags: <defaults>
</compile_context>

<pallas_src>
import functools

import jax
import jax.numpy as jnp
from jax.experimental import pallas as pl
from jax.experimental.pallas import tpu as pltpu  # noqa: F401  (no TPU-specific params needed)

F32 = jnp.float32
BF16 = jnp.bfloat16
NEG_INF = -1e30     # finite stand-in for -inf (PyTorch would NaN on fully-masked rows)
USE_BF16 = True     # bf16 matmul-weight/operand path, f32 accumulation


def _layernorm(x, g, b, eps=1e-5):
    mu = jnp.mean(x, axis=-1, keepdims=True)
    var = jnp.mean((x - mu) ** 2, axis=-1, keepdims=True)
    return (x - mu) * jax.lax.rsqrt(var + eps) * g + b


# ----------------------------------------------------------------- fused kernel
def _fused_kernel(n_layers, n_heads,
                  xin_ref, mask_ref, wemb_ref, bemb_ref,
                  wqkv_ref, bqkv_ref, wo_ref, bo_ref,
                  g1_ref, be1_ref, b1_ref, b2_ref, g2_ref, be2_ref,
                  mw1_ref, mb1_ref, mw2_ref, mb2_ref, mw3_ref, mb3_ref,
                  w1_ref, w2_ref,
                  out_ref):
    E = wemb_ref.shape[1]
    BN = xin_ref.shape[0]
    D = E // n_heads
    wdt = wemb_ref.dtype          # bf16 (or f32 if USE_BF16 is off)

    # ---- embedding: one block-structured matmul (no in-kernel concat) -------
    x = jnp.dot(xin_ref[...], wemb_ref[...],
                preferred_element_type=F32) + bemb_ref[...]            # (BN, E) f32
    mask_h = mask_ref[...]                                             # (H*BN, BN)

    for l in range(n_layers):
        # ---- fused QKV projection: one (BN,E)x(E,3E) dot ---------------------
        qkv = jnp.dot(x.astype(wdt), wqkv_ref[l],
                      preferred_element_type=F32) + bqkv_ref[l]        # (BN, 3E)
        qb = qkv[:, 0:E].astype(wdt)          # scale already folded into wq/bq
        kb = qkv[:, E:2 * E].astype(wdt)
        vb = qkv[:, 2 * E:3 * E].astype(wdt)

        # ---- per-head scores, stacked to (H*BN, BN) for ONE batched softmax --
        s = jnp.concatenate(
            [jax.lax.dot_general(qb[:, h * D:(h + 1) * D],
                                 kb[:, h * D:(h + 1) * D],
                                 (((1,), (1,)), ((), ())),
                                 preferred_element_type=F32)
             for h in range(n_heads)], axis=0)                         # (H*BN, BN)
        s = s + mask_h
        s = s - jnp.max(s, axis=-1, keepdims=True)
        p = jnp.exp(s)
        p = p * pl.reciprocal(jnp.sum(p, axis=-1, keepdims=True), approx=True)
        pb = p.astype(wdt)

        # ---- attention values: lane-concat heads, single Wo dot --------------
        o = jnp.concatenate(
            [jnp.dot(pb[h * BN:(h + 1) * BN], vb[:, h * D:(h + 1) * D],
                     preferred_element_type=F32)
             for h in range(n_heads)], axis=1)                         # (BN, E)
        attn = jnp.dot(o.astype(wdt), wo_ref[l],
                       preferred_element_type=F32) + bo_ref[l]

        y = _layernorm(x + attn, g1_ref[l], be1_ref[l])

        # ---- feed-forward (bf16 weights + bf16 hidden, f32 accumulation) -----
        h1 = jnp.maximum(
            jnp.dot(y.astype(wdt), w1_ref[l], preferred_element_type=F32)
            + b1_ref[l], 0.0).astype(wdt)                              # (BN, FF) bf16
        ff = jnp.dot(h1, w2_ref[l], preferred_element_type=F32) + b2_ref[l]
        x = _layernorm(y + ff, g2_ref[l], be2_ref[l])

    # ---- output MLP: Linear-ReLU-Linear-ReLU-Linear (padded to lane-dense) ---
    h = jnp.maximum(
        jnp.dot(x.astype(wdt), mw1_ref[...], preferred_element_type=F32)
        + mb1_ref[...], 0.0).astype(wdt)
    h = jnp.maximum(
        jnp.dot(h, mw2_ref[...], preferred_element_type=F32)
        + mb2_ref[...], 0.0).astype(wdt)
    gi = jnp.dot(h, mw3_ref[...], preferred_element_type=F32) + mb3_ref[...]

    # single lane-dense (BN, 128) store: [ transformer_out | graph_init_padded ]
    out_ref[...] = jnp.concatenate([x, gi], axis=-1)


# --------------------------------------------------------------- param packing
def pack_params(params, n_heads):
    """Host-side repack of module parameters into the fused-kernel layout."""
    E = params["embed_dim"]
    layers = params["layers"]
    n_layers = len(layers)
    D = E // n_heads
    scale = 1.0 / float(D) ** 0.5
    wdt = BF16 if USE_BF16 else F32

    L = params["wl"].shape[0]
    n_rest = E - 8 - params["wl"].shape[1]        # = 18 (per module definition)
    Fn = 1 + n_rest                               # node-feature dim
    K = Fn + L
    K_pad = ((K + 7) // 8) * 8                    # pad contraction dim to x8

    # Block-structured fused embedding weight:
    #   row 0     (type)    -> out cols [0:8)        (type_embedd)
    #   rows 1:Fn (rest)    -> out cols [8:8+rest)   (identity passthrough)
    #   rows Fn:K (latent)  -> out cols [8+rest:E)   (latent_linear)
    w_emb = jnp.zeros((K_pad, E), F32)
    w_emb = w_emb.at[0, 0:8].set(params["wt"][0])
    w_emb = w_emb.at[1:Fn, 8:8 + n_rest].set(jnp.eye(n_rest, dtype=F32))
    w_emb = w_emb.at[Fn:K, 8 + n_rest:].set(params["wl"])
    b_emb = jnp.zeros((1, E), F32)
    b_emb = b_emb.at[:, 0:8].set(params["bt"])
    b_emb = b_emb.at[:, 8 + n_rest:].set(params["bl"])

    # Fused QKV (scale folded into q columns) + original Wo.
    wqkv, bqkv, wo = [], [], []
    for lp in layers:
        wqkv.append(jnp.concatenate([lp["wq"] * scale, lp["wk"], lp["wv"]], axis=1))
        bqkv.append(jnp.concatenate([lp["bq"] * scale, lp["bk"], lp["bv"]], axis=1))
        wo.append(lp["wo"])

    stk = lambda name: jnp.stack([lp[name] for lp in layers], axis=0)

    # Pad the output-MLP final layer so [transformer_out | graph_init] forms a
    # lane-dense slab whose width is a multiple of 128.
    n_out = params["mlp"]["w3"].shape[1]
    slab_w = ((E + n_out + 127) // 128) * 128
    gi_pad = slab_w - E
    mw3 = jnp.zeros((params["mlp"]["w3"].shape[0], gi_pad), F32)
    mw3 = mw3.at[:, :n_out].set(params["mlp"]["w3"])
    mb3 = jnp.zeros((1, gi_pad), F32).at[:, :n_out].set(params["mlp"]["b3"])

    weights = dict(
        w_emb=w_emb.astype(wdt), b_emb=b_emb,
        wqkv=jnp.stack(wqkv, 0).astype(wdt), bqkv=jnp.stack(bqkv, 0),
        wo=jnp.stack(wo, 0).astype(wdt), bo=stk("bo"),
        g1=stk("g1"), be1=stk("be1"), g2=stk("g2"), be2=stk("be2"),
        b1=stk("b1"), b2=stk("b2"),
        w1=stk("w1").astype(wdt), w2=stk("w2").astype(wdt),
        mw1=params["mlp"]["w1"].astype(wdt), mb1=params["mlp"]["b1"],
        mw2=params["mlp"]["w2"].astype(wdt), mb2=params["mlp"]["b2"],
        mw3=mw3.astype(wdt), mb3=mb3,
    )
    return dict(weights=weights, n_layers=n_layers, n_heads=n_heads, n_out=n_out)


# ------------------------------------------------------------------ full module
@functools.partial(jax.jit, static_argnums=(0, 1, 2))
def _forward(n_layers, n_heads, n_out, weights,
             node_features, latent_vector, src_key_padding_mask):
    # Everything here (concat/repeat, mask build, pallas_call, split) fuses
    # into a single jitted dispatch.  If B/N/padding mask are static across
    # calls, the caller may additionally precompute mask/x_in layout.
    B, N, Fn = node_features.shape
    BN = B * N
    L = latent_vector.shape[-1]
    E = weights["w_emb"].shape[1]
    K_pad = weights["w_emb"].shape[0]
    wdt = weights["w_emb"].dtype
    slab_w = E + weights["mw3"].shape[1]

    # fused embedding input: [node_features | latent (repeated over N) | 0-pad]
    x_in = jnp.concatenate(
        [node_features.reshape(BN, Fn).astype(F32),
         jnp.repeat(latent_vector.astype(F32), N, axis=0),
         jnp.zeros((BN, K_pad - Fn - L), F32)], axis=1).astype(wdt)

    # block-diagonal (cross-batch) + key-padding additive mask, replicated per
    # head so the kernel's batched (H*BN, BN) softmax needs no in-kernel tiling.
    batch_ids = jnp.repeat(jnp.arange(B), N)
    same_batch = batch_ids[:, None] == batch_ids[None, :]
    key_valid = jnp.logical_not(src_key_padding_mask).reshape(BN)
    mask2d = jnp.where(same_batch & key_valid[None, :], 0.0, NEG_INF).astype(F32)
    mask_h = jnp.tile(mask2d, (n_heads, 1))                            # (H*BN, BN)

    # Single program, no grid: every operand / result is one whole-array VMEM
    # block (total ~1 MiB), so no BlockSpec tiling is needed on any generation.
    slab = pl.pallas_call(
        functools.partial(_fused_kernel, n_layers, n_heads),
        out_shape=jax.ShapeDtypeStruct((BN, slab_w), F32),
    )(x_in, mask_h,
      weights["w_emb"], weights["b_emb"],
      weights["wqkv"], weights["bqkv"], weights["wo"], weights["bo"],
      weights["g1"], weights["be1"], weights["b1"], weights["b2"],
      weights["g2"], weights["be2"],
      weights["mw1"], weights["mb1"], weights["mw2"], weights["mb2"],
      weights["mw3"], weights["mb3"],
      weights["w1"], weights["w2"])

    transformer_out = slab[:, :E].reshape(B, N, E)
    graph_init = slab[:, E:E + n_out].reshape(B, N, n_out)
    return graph_init, transformer_out


def transformer_graph_init(packed, node_features, latent_vector, src_key_padding_mask):
    return _forward(packed["n_layers"], packed["n_heads"], packed["n_out"],
                    packed["weights"], node_features, latent_vector,
                    src_key_padding_mask)


# --------------------------------------------------------------- parameter init
def init_params(key, latent_dim, embed_dim, n_heads, n_layers, ff_dim=2048):
    def lin(k, fi, fo):
        k1, k2 = jax.random.split(k)
        w = jax.random.normal(k1, (fi, fo), F32) * (1.0 / float(fi) ** 0.5)
        b = 0.01 * jax.random.normal(k2, (1, fo), F32)
        return w, b

    keys = jax.random.split(key, 4 + n_layers)
    p = {"embed_dim": embed_dim}
    p["wt"], p["bt"] = lin(keys[0], 1, 8)
    p["wl"], p["bl"] = lin(keys[1], latent_dim, embed_dim - 8 - 18)
    layers = []
    for i in range(n_layers):
        lk = jax.random.split(keys[2 + i], 10)
        lp = {}
        lp["wq"], lp["bq"] = lin(lk[0], embed_dim, embed_dim)
        lp["wk"], lp["bk"] = lin(lk[1], embed_dim, embed_dim)
        lp["wv"], lp["bv"] = lin(lk[2], embed_dim, embed_dim)
        lp["wo"], lp["bo"] = lin(lk[3], embed_dim, embed_dim)
        lp["w1"], lp["b1"] = lin(lk[4], embed_dim, ff_dim)
        lp["w2"], lp["b2"] = lin(lk[5], ff_dim, embed_dim)
        lp["g1"] = 1.0 + 0.05 * jax.random.normal(lk[6], (1, embed_dim), F32)
        lp["be1"] = 0.05 * jax.random.normal(lk[7], (1, embed_dim), F32)
        lp["g2"] = 1.0 + 0.05 * jax.random.normal(lk[8], (1, embed_dim), F32)
        lp["be2"] = 0.05 * jax.random.normal(lk[9], (1, embed_dim), F32)
        layers.append(lp)
    p["layers"] = layers
    mk = jax.random.split(keys[2 + n_layers], 3)
    mlp = {}
    mlp["w1"], mlp["b1"] = lin(mk[0], embed_dim, 256)
    mlp["w2"], mlp["b2"] = lin(mk[1], 256, 256)
    mlp["w3"], mlp["b3"] = lin(mk[2], 256, 5)
    p["mlp"] = mlp
    return p


# ---------------------------------------------------------- pure-JAX reference
def ref_forward(params, node_features, latent_vector, src_key_padding_mask, n_heads):
    B, N, _ = node_features.shape
    E = params["embed_dim"]
    te = node_features[..., 0:1] * params["wt"] + params["bt"]          # (B,N,8)
    rest = node_features[..., 1:]
    le = latent_vector @ params["wl"] + params["bl"]
    le = jnp.broadcast_to(le[:, None, :], (B, N, le.shape[-1]))
    x = jnp.concatenate([te, rest, le], axis=-1)
    add_mask = jnp.where(src_key_padding_mask, NEG_INF, 0.0)[:, None, None, :]
    D = E // n_heads
    scale = 1.0 / float(D) ** 0.5
    for lp in params["layers"]:
        q = (x @ lp["wq"] + lp["bq"]).reshape(B, N, n_heads, D).transpose(0, 2, 1, 3)
        k = (x @ lp["wk"] + lp["bk"]).reshape(B, N, n_heads, D).transpose(0, 2, 1, 3)
        v = (x @ lp["wv"] + lp["bv"]).reshape(B, N, n_heads, D).transpose(0, 2, 1, 3)
        s = jnp.einsum("bhqd,bhkd->bhqk", q * scale, k) + add_mask
        p = jax.nn.softmax(s, axis=-1)
        attn = jnp.einsum("bhqk,bhkd->bhqd", p, v).transpose(0, 2, 1, 3).reshape(B, N, E)
        attn = attn @ lp["wo"] + lp["bo"]
        y = _layernorm(x + attn, lp["g1"], lp["be1"])
        h1 = jax.nn.relu(y @ lp["w1"] + lp["b1"])
        x = _layernorm(y + (h1 @ lp["w2"] + lp["b2"]), lp["g2"], lp["be2"])
    m = params["mlp"]
    h = jax.nn.relu(x @ m["w1"] + m["b1"])
    h = jax.nn.relu(h @ m["w2"] + m["b2"])
    return h @ m["w3"] + m["b3"], x


if __name__ == "__main__":
    latent_dim, embed_dim, n_heads, n_layers = 16, 32, 4, 2
    B, N, F = 2, 8, 19     # node feature dim F = 1 (type) + 18 (rest)

    key = jax.random.PRNGKey(0)
    kp, kn, kl = jax.random.split(key, 3)
    params = init_params(kp, latent_dim, embed_dim, n_heads, n_layers)

    node_features = jax.random.normal(kn, (B, N, F), F32)
    latent_vector = jax.random.normal(kl, (B, latent_dim), F32)
    src_key_padding_mask = jnp.array(
        [[False] * N, [False] * (N - 2) + [True] * 2], dtype=bool)

    packed = pack_params(params, n_heads)
    graph_init, transformer_out = transformer_graph_init(
        packed, node_features, latent_vector, src_key_padding_mask)
    jax.block_until_ready((graph_init, transformer_out))

    ref_gi, ref_to = ref_forward(params, node_features, latent_vector,
                                 src_key_padding_mask, n_heads)
    # bf16 matmul weights/operands (f32 accumulation) deviate ~1e-2..5e-2 abs
    # from the exact-f32 reference; the f32 path is tight modulo the approx
    # reciprocal in the softmax.
    tol = 8e-2 if USE_BF16 else 1e-2
    assert graph_init.shape == (B, N, 5)
    assert transformer_out.shape == (B, N, embed_dim)
    assert jnp.allclose(graph_init, ref_gi, atol=tol, rtol=tol), \
        float(jnp.max(jnp.abs(graph_init - ref_gi)))
    assert jnp.allclose(transformer_out, ref_to, atol=tol, rtol=tol), \
        float(jnp.max(jnp.abs(transformer_out - ref_to)))
    print("KERNEL_OK")
</pallas_src>

<mosaic_0001>
module attributes {stable_mosaic.version = 11 : i64} {
  func.func @_fused_kernel(%arg0: memref<16x40xbf16, #tpu.memory_space<vmem>>, %arg1: memref<64x16xf32, #tpu.memory_space<vmem>>, %arg2: memref<40x32xbf16, #tpu.memory_space<vmem>>, %arg3: memref<1x32xf32, #tpu.memory_space<vmem>>, %arg4: memref<2x32x96xbf16, #tpu.memory_space<vmem>>, %arg5: memref<2x1x96xf32, #tpu.memory_space<vmem>>, %arg6: memref<2x32x32xbf16, #tpu.memory_space<vmem>>, %arg7: memref<2x1x32xf32, #tpu.memory_space<vmem>>, %arg8: memref<2x1x32xf32, #tpu.memory_space<vmem>>, %arg9: memref<2x1x32xf32, #tpu.memory_space<vmem>>, %arg10: memref<2x1x2048xf32, #tpu.memory_space<vmem>>, %arg11: memref<2x1x32xf32, #tpu.memory_space<vmem>>, %arg12: memref<2x1x32xf32, #tpu.memory_space<vmem>>, %arg13: memref<2x1x32xf32, #tpu.memory_space<vmem>>, %arg14: memref<32x256xbf16, #tpu.memory_space<vmem>>, %arg15: memref<1x256xf32, #tpu.memory_space<vmem>>, %arg16: memref<256x256xbf16, #tpu.memory_space<vmem>>, %arg17: memref<1x256xf32, #tpu.memory_space<vmem>>, %arg18: memref<256x96xbf16, #tpu.memory_space<vmem>>, %arg19: memref<1x96xf32, #tpu.memory_space<vmem>>, %arg20: memref<2x32x2048xbf16, #tpu.memory_space<vmem>>, %arg21: memref<2x2048x32xbf16, #tpu.memory_space<vmem>>, %arg22: memref<16x128xf32, #tpu.memory_space<vmem>>) attributes {dimension_semantics = [], scalar_prefetch = 0 : i64, scratch_operands = 0 : i64, tpu.core_type = #tpu.core_type<tc>} {
    %c0 = arith.constant 0 : index
    %c0_0 = arith.constant 0 : index
    %0 = vector.load %arg0[%c0, %c0_0] : memref<16x40xbf16, #tpu.memory_space<vmem>>, vector<16x40xbf16>
    %c0_1 = arith.constant 0 : index
    %c0_2 = arith.constant 0 : index
    %1 = vector.load %arg2[%c0_1, %c0_2] : memref<40x32xbf16, #tpu.memory_space<vmem>>, vector<40x32xbf16>
    %cst = arith.constant dense<0.000000e+00> : vector<16x32xf32>
    %2 = tpu.matmul %0, %1, %cst {dimension_numbers = #tpu.dot_dimension_numbers<[1], [0], [0], [1], [0, 0, 1, 1], [], []>} : vector<16x40xbf16>, vector<40x32xbf16>, vector<16x32xf32> -> vector<16x32xf32>
    %c0_3 = arith.constant 0 : index
    %c0_4 = arith.constant 0 : index
    %3 = vector.load %arg3[%c0_3, %c0_4] : memref<1x32xf32, #tpu.memory_space<vmem>>, vector<1x32xf32>
    %4 = vector.broadcast %3 : vector<1x32xf32> to vector<16x32xf32>
    %5 = arith.addf %2, %4 : vector<16x32xf32>
    %c0_5 = arith.constant 0 : index
    %c0_6 = arith.constant 0 : index
    %6 = vector.load %arg1[%c0_5, %c0_6] : memref<64x16xf32, #tpu.memory_space<vmem>>, vector<64x16xf32>
    %7 = arith.truncf %5 : vector<16x32xf32> to vector<16x32xbf16>
    %c0_7 = arith.constant 0 : index
    %c0_8 = arith.constant 0 : index
    %c0_9 = arith.constant 0 : index
    %8 = vector.load %arg4[%c0_7, %c0_8, %c0_9] : memref<2x32x96xbf16, #tpu.memory_space<vmem>>, vector<1x32x96xbf16>
    %9 = vector.shape_cast %8 : vector<1x32x96xbf16> to vector<32x96xbf16>
    %cst_10 = arith.constant dense<0.000000e+00> : vector<16x96xf32>
    %10 = tpu.matmul %7, %9, %cst_10 {dimension_numbers = #tpu.dot_dimension_numbers<[1], [0], [0], [1], [0, 0, 1, 1], [], []>} : vector<16x32xbf16>, vector<32x96xbf16>, vector<16x96xf32> -> vector<16x96xf32>
    %c0_11 = arith.constant 0 : index
    %c0_12 = arith.constant 0 : index
    %c0_13 = arith.constant 0 : index
    %11 = vector.load %arg5[%c0_11, %c0_12, %c0_13] : memref<2x1x96xf32, #tpu.memory_space<vmem>>, vector<1x1x96xf32>
    %12 = vector.shape_cast %11 : vector<1x1x96xf32> to vector<1x96xf32>
    %13 = vector.broadcast %12 : vector<1x96xf32> to vector<16x96xf32>
    %14 = arith.addf %10, %13 : vector<16x96xf32>
    %15 = vector.extract_strided_slice %14 {offsets = [0, 0], sizes = [16, 32], strides = [1, 1]} : vector<16x96xf32> to vector<16x32xf32>
    %16 = arith.truncf %15 : vector<16x32xf32> to vector<16x32xbf16>
    %17 = vector.extract_strided_slice %14 {offsets = [0, 32], sizes = [16, 32], strides = [1, 1]} : vector<16x96xf32> to vector<16x32xf32>
    %18 = arith.truncf %17 : vector<16x32xf32> to vector<16x32xbf16>
    %19 = vector.extract_strided_slice %14 {offsets = [0, 64], sizes = [16, 32], strides = [1, 1]} : vector<16x96xf32> to vector<16x32xf32>
    %20 = arith.truncf %19 : vector<16x32xf32> to vector<16x32xbf16>
    %21 = vector.extract_strided_slice %16 {offsets = [0, 0], sizes = [16, 8], strides = [1, 1]} : vector<16x32xbf16> to vector<16x8xbf16>
    %22 = vector.extract_strided_slice %18 {offsets = [0, 0], sizes = [16, 8], strides = [1, 1]} : vector<16x32xbf16> to vector<16x8xbf16>
    %cst_14 = arith.constant dense<0.000000e+00> : vector<16x16xf32>
    %23 = tpu.matmul %21, %22, %cst_14 {dimension_numbers = #tpu.dot_dimension_numbers<[1], [1], [0], [0], [0, 0, 1, 0], [], []>} : vector<16x8xbf16>, vector<16x8xbf16>, vector<16x16xf32> -> vector<16x16xf32>
    %24 = vector.extract_strided_slice %16 {offsets = [0, 8], sizes = [16, 8], strides = [1, 1]} : vector<16x32xbf16> to vector<16x8xbf16>
    %25 = vector.extract_strided_slice %18 {offsets = [0, 8], sizes = [16, 8], strides = [1, 1]} : vector<16x32xbf16> to vector<16x8xbf16>
    %cst_15 = arith.constant dense<0.000000e+00> : vector<16x16xf32>
    %26 = tpu.matmul %24, %25, %cst_15 {dimension_numbers = #tpu.dot_dimension_numbers<[1], [1], [0], [0], [0, 0, 1, 0], [], []>} : vector<16x8xbf16>, vector<16x8xbf16>, vector<16x16xf32> -> vector<16x16xf32>
    %27 = vector.extract_strided_slice %16 {offsets = [0, 16], sizes = [16, 8], strides = [1, 1]} : vector<16x32xbf16> to vector<16x8xbf16>
    %28 = vector.extract_strided_slice %18 {offsets = [0, 16], sizes = [16, 8], strides = [1, 1]} : vector<16x32xbf16> to vector<16x8xbf16>
    %cst_16 = arith.constant dense<0.000000e+00> : vector<16x16xf32>
    %29 = tpu.matmul %27, %28, %cst_16 {dimension_numbers = #tpu.dot_dimension_numbers<[1], [1], [0], [0], [0, 0, 1, 0], [], []>} : vector<16x8xbf16>, vector<16x8xbf16>, vector<16x16xf32> -> vector<16x16xf32>
    %30 = vector.extract_strided_slice %16 {offsets = [0, 24], sizes = [16, 8], strides = [1, 1]} : vector<16x32xbf16> to vector<16x8xbf16>
    %31 = vector.extract_strided_slice %18 {offsets = [0, 24], sizes = [16, 8], strides = [1, 1]} : vector<16x32xbf16> to vector<16x8xbf16>
    %cst_17 = arith.constant dense<0.000000e+00> : vector<16x16xf32>
    %32 = tpu.matmul %30, %31, %cst_17 {dimension_numbers = #tpu.dot_dimension_numbers<[1], [1], [0], [0], [0, 0, 1, 0], [], []>} : vector<16x8xbf16>, vector<16x8xbf16>, vector<16x16xf32> -> vector<16x16xf32>
    %33 = tpu.concatenate %23, %26, %29, %32 in 0 : vector<16x16xf32>, vector<16x16xf32>, vector<16x16xf32>, vector<16x16xf32> -> vector<64x16xf32>
    %34 = arith.addf %33, %6 : vector<64x16xf32>
    %cst_18 = arith.constant dense<0xFF800000> : vector<64xf32>
    %35 = vector.multi_reduction <maximumf>, %34, %cst_18 [1] : vector<64x16xf32> to vector<64xf32>
    %36 = vector.shape_cast %35 : vector<64xf32> to vector<64x1xf32>
    %37 = vector.broadcast %36 : vector<64x1xf32> to vector<64x16xf32>
    %38 = arith.subf %34, %37 : vector<64x16xf32>
    %39 = math.exp %38 : vector<64x16xf32>
    %cst_19 = arith.constant dense<0.000000e+00> : vector<64xf32>
    %40 = vector.multi_reduction <add>, %39, %cst_19 [1] : vector<64x16xf32> to vector<64xf32>
    %41 = vector.shape_cast %40 : vector<64xf32> to vector<64x1xf32>
    %42 = tpu.reciprocal %41 {approx = true} : vector<64x1xf32> -> vector<64x1xf32>
    %43 = vector.broadcast %42 : vector<64x1xf32> to vector<64x16xf32>
    %44 = arith.mulf %39, %43 : vector<64x16xf32>
    %45 = arith.truncf %44 : vector<64x16xf32> to vector<64x16xbf16>
    %46 = vector.extract_strided_slice %45 {offsets = [0, 0], sizes = [16, 16], strides = [1, 1]} : vector<64x16xbf16> to vector<16x16xbf16>
    %47 = vector.extract_strided_slice %20 {offsets = [0, 0], sizes = [16, 8], strides = [1, 1]} : vector<16x32xbf16> to vector<16x8xbf16>
    %cst_20 = arith.constant dense<0.000000e+00> : vector<16x8xf32>
    %48 = tpu.matmul %46, %47, %cst_20 {dimension_numbers = #tpu.dot_dimension_numbers<[1], [0], [0], [1], [0, 0, 1, 1], [], []>} : vector<16x16xbf16>, vector<16x8xbf16>, vector<16x8xf32> -> vector<16x8xf32>
    %49 = vector.extract_strided_slice %45 {offsets = [16, 0], sizes = [16, 16], strides = [1, 1]} : vector<64x16xbf16> to vector<16x16xbf16>
    %50 = vector.extract_strided_slice %20 {offsets = [0, 8], sizes = [16, 8], strides = [1, 1]} : vector<16x32xbf16> to vector<16x8xbf16>
    %cst_21 = arith.constant dense<0.000000e+00> : vector<16x8xf32>
    %51 = tpu.matmul %49, %50, %cst_21 {dimension_numbers = #tpu.dot_dimension_numbers<[1], [0], [0], [1], [0, 0, 1, 1], [], []>} : vector<16x16xbf16>, vector<16x8xbf16>, vector<16x8xf32> -> vector<16x8xf32>
    %52 = vector.extract_strided_slice %45 {offsets = [32, 0], sizes = [16, 16], strides = [1, 1]} : vector<64x16xbf16> to vector<16x16xbf16>
    %53 = vector.extract_strided_slice %20 {offsets = [0, 16], sizes = [16, 8], strides = [1, 1]} : vector<16x32xbf16> to vector<16x8xbf16>
    %cst_22 = arith.constant dense<0.000000e+00> : vector<16x8xf32>
    %54 = tpu.matmul %52, %53, %cst_22 {dimension_numbers = #tpu.dot_dimension_numbers<[1], [0], [0], [1], [0, 0, 1, 1], [], []>} : vector<16x16xbf16>, vector<16x8xbf16>, vector<16x8xf32> -> vector<16x8xf32>
    %55 = vector.extract_strided_slice %45 {offsets = [48, 0], sizes = [16, 16], strides = [1, 1]} : vector<64x16xbf16> to vector<16x16xbf16>
    %56 = vector.extract_strided_slice %20 {offsets = [0, 24], sizes = [16, 8], strides = [1, 1]} : vector<16x32xbf16> to vector<16x8xbf16>
    %cst_23 = arith.constant dense<0.000000e+00> : vector<16x8xf32>
    %57 = tpu.matmul %55, %56, %cst_23 {dimension_numbers = #tpu.dot_dimension_numbers<[1], [0], [0], [1], [0, 0, 1, 1], [], []>} : vector<16x16xbf16>, vector<16x8xbf16>, vector<16x8xf32> -> vector<16x8xf32>
    %58 = tpu.concatenate %48, %51, %54, %57 in 1 : vector<16x8xf32>, vector<16x8xf32>, vector<16x8xf32>, vector<16x8xf32> -> vector<16x32xf32>
    %59 = arith.truncf %58 : vector<16x32xf32> to vector<16x32xbf16>
    %c0_24 = arith.constant 0 : index
    %c0_25 = arith.constant 0 : index
    %c0_26 = arith.constant 0 : index
    %60 = vector.load %arg6[%c0_24, %c0_25, %c0_26] : memref<2x32x32xbf16, #tpu.memory_space<vmem>>, vector<1x32x32xbf16>
    %61 = vector.shape_cast %60 : vector<1x32x32xbf16> to vector<32x32xbf16>
    %cst_27 = arith.constant dense<0.000000e+00> : vector<16x32xf32>
    %62 = tpu.matmul %59, %61, %cst_27 {dimension_numbers = #tpu.dot_dimension_numbers<[1], [0], [0], [1], [0, 0, 1, 1], [], []>} : vector<16x32xbf16>, vector<32x32xbf16>, vector<16x32xf32> -> vector<16x32xf32>
    %c0_28 = arith.constant 0 : index
    %c0_29 = arith.constant 0 : index
    %c0_30 = arith.constant 0 : index
    %63 = vector.load %arg7[%c0_28, %c0_29, %c0_30] : memref<2x1x32xf32, #tpu.memory_space<vmem>>, vector<1x1x32xf32>
    %64 = vector.shape_cast %63 : vector<1x1x32xf32> to vector<1x32xf32>
    %65 = vector.broadcast %64 : vector<1x32xf32> to vector<16x32xf32>
    %66 = arith.addf %62, %65 : vector<16x32xf32>
    %67 = arith.addf %5, %66 : vector<16x32xf32>
    %c0_31 = arith.constant 0 : index
    %c0_32 = arith.constant 0 : index
    %c0_33 = arith.constant 0 : index
    %68 = vector.load %arg8[%c0_31, %c0_32, %c0_33] : memref<2x1x32xf32, #tpu.memory_space<vmem>>, vector<1x1x32xf32>
    %69 = vector.shape_cast %68 : vector<1x1x32xf32> to vector<1x32xf32>
    %c0_34 = arith.constant 0 : index
    %c0_35 = arith.constant 0 : index
    %c0_36 = arith.constant 0 : index
    %70 = vector.load %arg9[%c0_34, %c0_35, %c0_36] : memref<2x1x32xf32, #tpu.memory_space<vmem>>, vector<1x1x32xf32>
    %71 = vector.shape_cast %70 : vector<1x1x32xf32> to vector<1x32xf32>
    %cst_37 = arith.constant dense<0.000000e+00> : vector<16xf32>
    %72 = vector.multi_reduction <add>, %67, %cst_37 [1] : vector<16x32xf32> to vector<16xf32>
    %73 = vector.shape_cast %72 : vector<16xf32> to vector<16x1xf32>
    %cst_38 = arith.constant 3.200000e+01 : f32
    %74 = vector.broadcast %cst_38 : f32 to vector<16x1xf32>
    %75 = arith.divf %73, %74 : vector<16x1xf32>
    %76 = vector.broadcast %75 : vector<16x1xf32> to vector<16x32xf32>
    %77 = arith.subf %67, %76 : vector<16x32xf32>
    %78 = arith.mulf %77, %77 : vector<16x32xf32>
    %cst_39 = arith.constant dense<0.000000e+00> : vector<16xf32>
    %79 = vector.multi_reduction <add>, %78, %cst_39 [1] : vector<16x32xf32> to vector<16xf32>
    %80 = vector.shape_cast %79 : vector<16xf32> to vector<16x1xf32>
    %cst_40 = arith.constant 3.200000e+01 : f32
    %81 = vector.broadcast %cst_40 : f32 to vector<16x1xf32>
    %82 = arith.divf %80, %81 : vector<16x1xf32>
    %83 = vector.broadcast %75 : vector<16x1xf32> to vector<16x32xf32>
    %84 = arith.subf %67, %83 : vector<16x32xf32>
    %cst_41 = arith.constant 9.99999974E-6 : f32
    %85 = vector.broadcast %cst_41 : f32 to vector<16x1xf32>
    %86 = arith.addf %82, %85 : vector<16x1xf32>
    %87 = math.rsqrt %86 : vector<16x1xf32>
    %88 = vector.broadcast %87 : vector<16x1xf32> to vector<16x32xf32>
    %89 = arith.mulf %84, %88 : vector<16x32xf32>
    %90 = vector.broadcast %69 : vector<1x32xf32> to vector<16x32xf32>
    %91 = arith.mulf %89, %90 : vector<16x32xf32>
    %92 = vector.broadcast %71 : vector<1x32xf32> to vector<16x32xf32>
    %93 = arith.addf %91, %92 : vector<16x32xf32>
    %94 = arith.truncf %93 : vector<16x32xf32> to vector<16x32xbf16>
    %c0_42 = arith.constant 0 : index
    %c0_43 = arith.constant 0 : index
    %c0_44 = arith.constant 0 : index
    %95 = vector.load %arg20[%c0_42, %c0_43, %c0_44] : memref<2x32x2048xbf16, #tpu.memory_space<vmem>>, vector<1x32x2048xbf16>
    %96 = vector.shape_cast %95 : vector<1x32x2048xbf16> to vector<32x2048xbf16>
    %cst_45 = arith.constant dense<0.000000e+00> : vector<16x2048xf32>
    %97 = tpu.matmul %94, %96, %cst_45 {dimension_numbers = #tpu.dot_dimension_numbers<[1], [0], [0], [1], [0, 0, 1, 1], [], []>} : vector<16x32xbf16>, vector<32x2048xbf16>, vector<16x2048xf32> -> vector<16x2048xf32>
    %c0_46 = arith.constant 0 : index
    %c0_47 = arith.constant 0 : index
    %c0_48 = arith.constant 0 : index
    %98 = vector.load %arg10[%c0_46, %c0_47, %c0_48] : memref<2x1x2048xf32, #tpu.memory_space<vmem>>, vector<1x1x2048xf32>
    %99 = vector.shape_cast %98 : vector<1x1x2048xf32> to vector<1x2048xf32>
    %100 = vector.broadcast %99 : vector<1x2048xf32> to vector<16x2048xf32>
    %101 = arith.addf %97, %100 : vector<16x2048xf32>
    %cst_49 = arith.constant 0.000000e+00 : f32
    %102 = vector.broadcast %cst_49 : f32 to vector<16x2048xf32>
    %103 = arith.maximumf %101, %102 : vector<16x2048xf32>
    %104 = arith.truncf %103 : vector<16x2048xf32> to vector<16x2048xbf16>
    %c0_50 = arith.constant 0 : index
    %c0_51 = arith.constant 0 : index
    %c0_52 = arith.constant 0 : index
    %105 = vector.load %arg21[%c0_50, %c0_51, %c0_52] : memref<2x2048x32xbf16, #tpu.memory_space<vmem>>, vector<1x2048x32xbf16>
    %106 = vector.shape_cast %105 : vector<1x2048x32xbf16> to vector<2048x32xbf16>
    %cst_53 = arith.constant dense<0.000000e+00> : vector<16x32xf32>
    %107 = tpu.matmul %104, %106, %cst_53 {dimension_numbers = #tpu.dot_dimension_numbers<[1], [0], [0], [1], [0, 0, 1, 1], [], []>} : vector<16x2048xbf16>, vector<2048x32xbf16>, vector<16x32xf32> -> vector<16x32xf32>
    %c0_54 = arith.constant 0 : index
    %c0_55 = arith.constant 0 : index
    %c0_56 = arith.constant 0 : index
    %108 = vector.load %arg11[%c0_54, %c0_55, %c0_56] : memref<2x1x32xf32, #tpu.memory_space<vmem>>, vector<1x1x32xf32>
    %109 = vector.shape_cast %108 : vector<1x1x32xf32> to vector<1x32xf32>
    %110 = vector.broadcast %109 : vector<1x32xf32> to vector<16x32xf32>
    %111 = arith.addf %107, %110 : vector<16x32xf32>
    %112 = arith.addf %93, %111 : vector<16x32xf32>
    %c0_57 = arith.constant 0 : index
    %c0_58 = arith.constant 0 : index
    %c0_59 = arith.constant 0 : index
    %113 = vector.load %arg12[%c0_57, %c0_58, %c0_59] : memref<2x1x32xf32, #tpu.memory_space<vmem>>, vector<1x1x32xf32>
    %114 = vector.shape_cast %113 : vector<1x1x32xf32> to vector<1x32xf32>
    %c0_60 = arith.constant 0 : index
    %c0_61 = arith.constant 0 : index
    %c0_62 = arith.constant 0 : index
    %115 = vector.load %arg13[%c0_60, %c0_61, %c0_62] : memref<2x1x32xf32, #tpu.memory_space<vmem>>, vector<1x1x32xf32>
    %116 = vector.shape_cast %115 : vector<1x1x32xf32> to vector<1x32xf32>
    %cst_63 = arith.constant dense<0.000000e+00> : vector<16xf32>
    %117 = vector.multi_reduction <add>, %112, %cst_63 [1] : vector<16x32xf32> to vector<16xf32>
    %118 = vector.shape_cast %117 : vector<16xf32> to vector<16x1xf32>
    %cst_64 = arith.constant 3.200000e+01 : f32
    %119 = vector.broadcast %cst_64 : f32 to vector<16x1xf32>
    %120 = arith.divf %118, %119 : vector<16x1xf32>
    %121 = vector.broadcast %120 : vector<16x1xf32> to vector<16x32xf32>
    %122 = arith.subf %112, %121 : vector<16x32xf32>
    %123 = arith.mulf %122, %122 : vector<16x32xf32>
    %cst_65 = arith.constant dense<0.000000e+00> : vector<16xf32>
    %124 = vector.multi_reduction <add>, %123, %cst_65 [1] : vector<16x32xf32> to vector<16xf32>
    %125 = vector.shape_cast %124 : vector<16xf32> to vector<16x1xf32>
    %cst_66 = arith.constant 3.200000e+01 : f32
    %126 = vector.broadcast %cst_66 : f32 to vector<16x1xf32>
    %127 = arith.divf %125, %126 : vector<16x1xf32>
    %128 = vector.broadcast %120 : vector<16x1xf32> to vector<16x32xf32>
    %129 = arith.subf %112, %128 : vector<16x32xf32>
    %cst_67 = arith.constant 9.99999974E-6 : f32
    %130 = vector.broadcast %cst_67 : f32 to vector<16x1xf32>
    %131 = arith.addf %127, %130 : vector<16x1xf32>
    %132 = math.rsqrt %131 : vector<16x1xf32>
    %133 = vector.broadcast %132 : vector<16x1xf32> to vector<16x32xf32>
    %134 = arith.mulf %129, %133 : vector<16x32xf32>
    %135 = vector.broadcast %114 : vector<1x32xf32> to vector<16x32xf32>
    %136 = arith.mulf %134, %135 : vector<16x32xf32>
    %137 = vector.broadcast %116 : vector<1x32xf32> to vector<16x32xf32>
    %138 = arith.addf %136, %137 : vector<16x32xf32>
    %139 = arith.truncf %138 : vector<16x32xf32> to vector<16x32xbf16>
    %c1 = arith.constant 1 : index
    %c0_68 = arith.constant 0 : index
    %c0_69 = arith.constant 0 : index
    %140 = vector.load %arg4[%c1, %c0_68, %c0_69] : memref<2x32x96xbf16, #tpu.memory_space<vmem>>, vector<1x32x96xbf16>
    %141 = vector.shape_cast %140 : vector<1x32x96xbf16> to vector<32x96xbf16>
    %cst_70 = arith.constant dense<0.000000e+00> : vector<16x96xf32>
    %142 = tpu.matmul %139, %141, %cst_70 {dimension_numbers = #tpu.dot_dimension_numbers<[1], [0], [0], [1], [0, 0, 1, 1], [], []>} : vector<16x32xbf16>, vector<32x96xbf16>, vector<16x96xf32> -> vector<16x96xf32>
    %c1_71 = arith.constant 1 : index
    %c0_72 = arith.constant 0 : index
    %c0_73 = arith.constant 0 : index
    %143 = vector.load %arg5[%c1_71, %c0_72, %c0_73] : memref<2x1x96xf32, #tpu.memory_space<vmem>>, vector<1x1x96xf32>
    %144 = vector.shape_cast %143 : vector<1x1x96xf32> to vector<1x96xf32>
    %145 = vector.broadcast %144 : vector<1x96xf32> to vector<16x96xf32>
    %146 = arith.addf %142, %145 : vector<16x96xf32>
    %147 = vector.extract_strided_slice %146 {offsets = [0, 0], sizes = [16, 32], strides = [1, 1]} : vector<16x96xf32> to vector<16x32xf32>
    %148 = arith.truncf %147 : vector<16x32xf32> to vector<16x32xbf16>
    %149 = vector.extract_strided_slice %146 {offsets = [0, 32], sizes = [16, 32], strides = [1, 1]} : vector<16x96xf32> to vector<16x32xf32>
    %150 = arith.truncf %149 : vector<16x32xf32> to vector<16x32xbf16>
    %151 = vector.extract_strided_slice %146 {offsets = [0, 64], sizes = [16, 32], strides = [1, 1]} : vector<16x96xf32> to vector<16x32xf32>
    %152 = arith.truncf %151 : vector<16x32xf32> to vector<16x32xbf16>
    %153 = vector.extract_strided_slice %148 {offsets = [0, 0], sizes = [16, 8], strides = [1, 1]} : vector<16x32xbf16> to vector<16x8xbf16>
    %154 = vector.extract_strided_slice %150 {offsets = [0, 0], sizes = [16, 8], strides = [1, 1]} : vector<16x32xbf16> to vector<16x8xbf16>
    %cst_74 = arith.constant dense<0.000000e+00> : vector<16x16xf32>
    %155 = tpu.matmul %153, %154, %cst_74 {dimension_numbers = #tpu.dot_dimension_numbers<[1], [1], [0], [0], [0, 0, 1, 0], [], []>} : vector<16x8xbf16>, vector<16x8xbf16>, vector<16x16xf32> -> vector<16x16xf32>
    %156 = vector.extract_strided_slice %148 {offsets = [0, 8], sizes = [16, 8], strides = [1, 1]} : vector<16x32xbf16> to vector<16x8xbf16>
    %157 = vector.extract_strided_slice %150 {offsets = [0, 8], sizes = [16, 8], strides = [1, 1]} : vector<16x32xbf16> to vector<16x8xbf16>
    %cst_75 = arith.constant dense<0.000000e+00> : vector<16x16xf32>
    %158 = tpu.matmul %156, %157, %cst_75 {dimension_numbers = #tpu.dot_dimension_numbers<[1], [1], [0], [0], [0, 0, 1, 0], [], []>} : vector<16x8xbf16>, vector<16x8xbf16>, vector<16x16xf32> -> vector<16x16xf32>
    %159 = vector.extract_strided_slice %148 {offsets = [0, 16], sizes = [16, 8], strides = [1, 1]} : vector<16x32xbf16> to vector<16x8xbf16>
    %160 = vector.extract_strided_slice %150 {offsets = [0, 16], sizes = [16, 8], strides = [1, 1]} : vector<16x32xbf16> to vector<16x8xbf16>
    %cst_76 = arith.constant dense<0.000000e+00> : vector<16x16xf32>
    %161 = tpu.matmul %159, %160, %cst_76 {dimension_numbers = #tpu.dot_dimension_numbers<[1], [1], [0], [0], [0, 0, 1, 0], [], []>} : vector<16x8xbf16>, vector<16x8xbf16>, vector<16x16xf32> -> vector<16x16xf32>
    %162 = vector.extract_strided_slice %148 {offsets = [0, 24], sizes = [16, 8], strides = [1, 1]} : vector<16x32xbf16> to vector<16x8xbf16>
    %163 = vector.extract_strided_slice %150 {offsets = [0, 24], sizes = [16, 8], strides = [1, 1]} : vector<16x32xbf16> to vector<16x8xbf16>
    %cst_77 = arith.constant dense<0.000000e+00> : vector<16x16xf32>
    %164 = tpu.matmul %162, %163, %cst_77 {dimension_numbers = #tpu.dot_dimension_numbers<[1], [1], [0], [0], [0, 0, 1, 0], [], []>} : vector<16x8xbf16>, vector<16x8xbf16>, vector<16x16xf32> -> vector<16x16xf32>
    %165 = tpu.concatenate %155, %158, %161, %164 in 0 : vector<16x16xf32>, vector<16x16xf32>, vector<16x16xf32>, vector<16x16xf32> -> vector<64x16xf32>
    %166 = arith.addf %165, %6 : vector<64x16xf32>
    %cst_78 = arith.constant dense<0xFF800000> : vector<64xf32>
    %167 = vector.multi_reduction <maximumf>, %166, %cst_78 [1] : vector<64x16xf32> to vector<64xf32>
    %168 = vector.shape_cast %167 : vector<64xf32> to vector<64x1xf32>
    %169 = vector.broadcast %168 : vector<64x1xf32> to vector<64x16xf32>
    %170 = arith.subf %166, %169 : vector<64x16xf32>
    %171 = math.exp %170 : vector<64x16xf32>
    %cst_79 = arith.constant dense<0.000000e+00> : vector<64xf32>
    %172 = vector.multi_reduction <add>, %171, %cst_79 [1] : vector<64x16xf32> to vector<64xf32>
    %173 = vector.shape_cast %172 : vector<64xf32> to vector<64x1xf32>
    %174 = tpu.reciprocal %173 {approx = true} : vector<64x1xf32> -> vector<64x1xf32>
    %175 = vector.broadcast %174 : vector<64x1xf32> to vector<64x16xf32>
    %176 = arith.mulf %171, %175 : vector<64x16xf32>
    %177 = arith.truncf %176 : vector<64x16xf32> to vector<64x16xbf16>
    %178 = vector.extract_strided_slice %177 {offsets = [0, 0], sizes = [16, 16], strides = [1, 1]} : vector<64x16xbf16> to vector<16x16xbf16>
    %179 = vector.extract_strided_slice %152 {offsets = [0, 0], sizes = [16, 8], strides = [1, 1]} : vector<16x32xbf16> to vector<16x8xbf16>
    %cst_80 = arith.constant dense<0.000000e+00> : vector<16x8xf32>
    %180 = tpu.matmul %178, %179, %cst_80 {dimension_numbers = #tpu.dot_dimension_numbers<[1], [0], [0], [1], [0, 0, 1, 1], [], []>} : vector<16x16xbf16>, vector<16x8xbf16>, vector<16x8xf32> -> vector<16x8xf32>
    %181 = vector.extract_strided_slice %177 {offsets = [16, 0], sizes = [16, 16], strides = [1, 1]} : vector<64x16xbf16> to vector<16x16xbf16>
    %182 = vector.extract_strided_slice %152 {offsets = [0, 8], sizes = [16, 8], strides = [1, 1]} : vector<16x32xbf16> to vector<16x8xbf16>
    %cst_81 = arith.constant dense<0.000000e+00> : vector<16x8xf32>
    %183 = tpu.matmul %181, %182, %cst_81 {dimension_numbers = #tpu.dot_dimension_numbers<[1], [0], [0], [1], [0, 0, 1, 1], [], []>} : vector<16x16xbf16>, vector<16x8xbf16>, vector<16x8xf32> -> vector<16x8xf32>
    %184 = vector.extract_strided_slice %177 {offsets = [32, 0], sizes = [16, 16], strides = [1, 1]} : vector<64x16xbf16> to vector<16x16xbf16>
    %185 = vector.extract_strided_slice %152 {offsets = [0, 16], sizes = [16, 8], strides = [1, 1]} : vector<16x32xbf16> to vector<16x8xbf16>
    %cst_82 = arith.constant dense<0.000000e+00> : vector<16x8xf32>
    %186 = tpu.matmul %184, %185, %cst_82 {dimension_numbers = #tpu.dot_dimension_numbers<[1], [0], [0], [1], [0, 0, 1, 1], [], []>} : vector<16x16xbf16>, vector<16x8xbf16>, vector<16x8xf32> -> vector<16x8xf32>
    %187 = vector.extract_strided_slice %177 {offsets = [48, 0], sizes = [16, 16], strides = [1, 1]} : vector<64x16xbf16> to vector<16x16xbf16>
    %188 = vector.extract_strided_slice %152 {offsets = [0, 24], sizes = [16, 8], strides = [1, 1]} : vector<16x32xbf16> to vector<16x8xbf16>
    %cst_83 = arith.constant dense<0.000000e+00> : vector<16x8xf32>
    %189 = tpu.matmul %187, %188, %cst_83 {dimension_numbers = #tpu.dot_dimension_numbers<[1], [0], [0], [1], [0, 0, 1, 1], [], []>} : vector<16x16xbf16>, vector<16x8xbf16>, vector<16x8xf32> -> vector<16x8xf32>
    %190 = tpu.concatenate %180, %183, %186, %189 in 1 : vector<16x8xf32>, vector<16x8xf32>, vector<16x8xf32>, vector<16x8xf32> -> vector<16x32xf32>
    %191 = arith.truncf %190 : vector<16x32xf32> to vector<16x32xbf16>
    %c1_84 = arith.constant 1 : index
    %c0_85 = arith.constant 0 : index
    %c0_86 = arith.constant 0 : index
    %192 = vector.load %arg6[%c1_84, %c0_85, %c0_86] : memref<2x32x32xbf16, #tpu.memory_space<vmem>>, vector<1x32x32xbf16>
    %193 = vector.shape_cast %192 : vector<1x32x32xbf16> to vector<32x32xbf16>
    %cst_87 = arith.constant dense<0.000000e+00> : vector<16x32xf32>
    %194 = tpu.matmul %191, %193, %cst_87 {dimension_numbers = #tpu.dot_dimension_numbers<[1], [0], [0], [1], [0, 0, 1, 1], [], []>} : vector<16x32xbf16>, vector<32x32xbf16>, vector<16x32xf32> -> vector<16x32xf32>
    %c1_88 = arith.constant 1 : index
    %c0_89 = arith.constant 0 : index
    %c0_90 = arith.constant 0 : index
    %195 = vector.load %arg7[%c1_88, %c0_89, %c0_90] : memref<2x1x32xf32, #tpu.memory_space<vmem>>, vector<1x1x32xf32>
    %196 = vector.shape_cast %195 : vector<1x1x32xf32> to vector<1x32xf32>
    %197 = vector.broadcast %196 : vector<1x32xf32> to vector<16x32xf32>
    %198 = arith.addf %194, %197 : vector<16x32xf32>
    %199 = arith.addf %138, %198 : vector<16x32xf32>
    %c1_91 = arith.constant 1 : index
    %c0_92 = arith.constant 0 : index
    %c0_93 = arith.constant 0 : index
    %200 = vector.load %arg8[%c1_91, %c0_92, %c0_93] : memref<2x1x32xf32, #tpu.memory_space<vmem>>, vector<1x1x32xf32>
    %201 = vector.shape_cast %200 : vector<1x1x32xf32> to vector<1x32xf32>
    %c1_94 = arith.constant 1 : index
    %c0_95 = arith.constant 0 : index
    %c0_96 = arith.constant 0 : index
    %202 = vector.load %arg9[%c1_94, %c0_95, %c0_96] : memref<2x1x32xf32, #tpu.memory_space<vmem>>, vector<1x1x32xf32>
    %203 = vector.shape_cast %202 : vector<1x1x32xf32> to vector<1x32xf32>
    %cst_97 = arith.constant dense<0.000000e+00> : vector<16xf32>
    %204 = vector.multi_reduction <add>, %199, %cst_97 [1] : vector<16x32xf32> to vector<16xf32>
    %205 = vector.shape_cast %204 : vector<16xf32> to vector<16x1xf32>
    %cst_98 = arith.constant 3.200000e+01 : f32
    %206 = vector.broadcast %cst_98 : f32 to vector<16x1xf32>
    %207 = arith.divf %205, %206 : vector<16x1xf32>
    %208 = vector.broadcast %207 : vector<16x1xf32> to vector<16x32xf32>
    %209 = arith.subf %199, %208 : vector<16x32xf32>
    %210 = arith.mulf %209, %209 : vector<16x32xf32>
    %cst_99 = arith.constant dense<0.000000e+00> : vector<16xf32>
    %211 = vector.multi_reduction <add>, %210, %cst_99 [1] : vector<16x32xf32> to vector<16xf32>
    %212 = vector.shape_cast %211 : vector<16xf32> to vector<16x1xf32>
    %cst_100 = arith.constant 3.200000e+01 : f32
    %213 = vector.broadcast %cst_100 : f32 to vector<16x1xf32>
    %214 = arith.divf %212, %213 : vector<16x1xf32>
    %215 = vector.broadcast %207 : vector<16x1xf32> to vector<16x32xf32>
    %216 = arith.subf %199, %215 : vector<16x32xf32>
    %cst_101 = arith.constant 9.99999974E-6 : f32
    %217 = vector.broadcast %cst_101 : f32 to vector<16x1xf32>
    %218 = arith.addf %214, %217 : vector<16x1xf32>
    %219 = math.rsqrt %218 : vector<16x1xf32>
    %220 = vector.broadcast %219 : vector<16x1xf32> to vector<16x32xf32>
    %221 = arith.mulf %216, %220 : vector<16x32xf32>
    %222 = vector.broadcast %201 : vector<1x32xf32> to vector<16x32xf32>
    %223 = arith.mulf %221, %222 : vector<16x32xf32>
    %224 = vector.broadcast %203 : vector<1x32xf32> to vector<16x32xf32>
    %225 = arith.addf %223, %224 : vector<16x32xf32>
    %226 = arith.truncf %225 : vector<16x32xf32> to vector<16x32xbf16>
    %c1_102 = arith.constant 1 : index
    %c0_103 = arith.constant 0 : index
    %c0_104 = arith.constant 0 : index
    %227 = vector.load %arg20[%c1_102, %c0_103, %c0_104] : memref<2x32x2048xbf16, #tpu.memory_space<vmem>>, vector<1x32x2048xbf16>
    %228 = vector.shape_cast %227 : vector<1x32x2048xbf16> to vector<32x2048xbf16>
    %cst_105 = arith.constant dense<0.000000e+00> : vector<16x2048xf32>
    %229 = tpu.matmul %226, %228, %cst_105 {dimension_numbers = #tpu.dot_dimension_numbers<[1], [0], [0], [1], [0, 0, 1, 1], [], []>} : vector<16x32xbf16>, vector<32x2048xbf16>, vector<16x2048xf32> -> vector<16x2048xf32>
    %c1_106 = arith.constant 1 : index
    %c0_107 = arith.constant 0 : index
    %c0_108 = arith.constant 0 : index
    %230 = vector.load %arg10[%c1_106, %c0_107, %c0_108] : memref<2x1x2048xf32, #tpu.memory_space<vmem>>, vector<1x1x2048xf32>
    %231 = vector.shape_cast %230 : vector<1x1x2048xf32> to vector<1x2048xf32>
    %232 = vector.broadcast %231 : vector<1x2048xf32> to vector<16x2048xf32>
    %233 = arith.addf %229, %232 : vector<16x2048xf32>
    %cst_109 = arith.constant 0.000000e+00 : f32
    %234 = vector.broadcast %cst_109 : f32 to vector<16x2048xf32>
    %235 = arith.maximumf %233, %234 : vector<16x2048xf32>
    %236 = arith.truncf %235 : vector<16x2048xf32> to vector<16x2048xbf16>
    %c1_110 = arith.constant 1 : index
    %c0_111 = arith.constant 0 : index
    %c0_112 = arith.constant 0 : index
    %237 = vector.load %arg21[%c1_110, %c0_111, %c0_112] : memref<2x2048x32xbf16, #tpu.memory_space<vmem>>, vector<1x2048x32xbf16>
    %238 = vector.shape_cast %237 : vector<1x2048x32xbf16> to vector<2048x32xbf16>
    %cst_113 = arith.constant dense<0.000000e+00> : vector<16x32xf32>
    %239 = tpu.matmul %236, %238, %cst_113 {dimension_numbers = #tpu.dot_dimension_numbers<[1], [0], [0], [1], [0, 0, 1, 1], [], []>} : vector<16x2048xbf16>, vector<2048x32xbf16>, vector<16x32xf32> -> vector<16x32xf32>
    %c1_114 = arith.constant 1 : index
    %c0_115 = arith.constant 0 : index
    %c0_116 = arith.constant 0 : index
    %240 = vector.load %arg11[%c1_114, %c0_115, %c0_116] : memref<2x1x32xf32, #tpu.memory_space<vmem>>, vector<1x1x32xf32>
    %241 = vector.shape_cast %240 : vector<1x1x32xf32> to vector<1x32xf32>
    %242 = vector.broadcast %241 : vector<1x32xf32> to vector<16x32xf32>
    %243 = arith.addf %239, %242 : vector<16x32xf32>
    %244 = arith.addf %225, %243 : vector<16x32xf32>
    %c1_117 = arith.constant 1 : index
    %c0_118 = arith.constant 0 : index
    %c0_119 = arith.constant 0 : index
    %245 = vector.load %arg12[%c1_117, %c0_118, %c0_119] : memref<2x1x32xf32, #tpu.memory_space<vmem>>, vector<1x1x32xf32>
    %246 = vector.shape_cast %245 : vector<1x1x32xf32> to vector<1x32xf32>
    %c1_120 = arith.constant 1 : index
    %c0_121 = arith.constant 0 : index
    %c0_122 = arith.constant 0 : index
    %247 = vector.load %arg13[%c1_120, %c0_121, %c0_122] : memref<2x1x32xf32, #tpu.memory_space<vmem>>, vector<1x1x32xf32>
    %248 = vector.shape_cast %247 : vector<1x1x32xf32> to vector<1x32xf32>
    %cst_123 = arith.constant dense<0.000000e+00> : vector<16xf32>
    %249 = vector.multi_reduction <add>, %244, %cst_123 [1] : vector<16x32xf32> to vector<16xf32>
    %250 = vector.shape_cast %249 : vector<16xf32> to vector<16x1xf32>
    %cst_124 = arith.constant 3.200000e+01 : f32
    %251 = vector.broadcast %cst_124 : f32 to vector<16x1xf32>
    %252 = arith.divf %250, %251 : vector<16x1xf32>
    %253 = vector.broadcast %252 : vector<16x1xf32> to vector<16x32xf32>
    %254 = arith.subf %244, %253 : vector<16x32xf32>
    %255 = arith.mulf %254, %254 : vector<16x32xf32>
    %cst_125 = arith.constant dense<0.000000e+00> : vector<16xf32>
    %256 = vector.multi_reduction <add>, %255, %cst_125 [1] : vector<16x32xf32> to vector<16xf32>
    %257 = vector.shape_cast %256 : vector<16xf32> to vector<16x1xf32>
    %cst_126 = arith.constant 3.200000e+01 : f32
    %258 = vector.broadcast %cst_126 : f32 to vector<16x1xf32>
    %259 = arith.divf %257, %258 : vector<16x1xf32>
    %260 = vector.broadcast %252 : vector<16x1xf32> to vector<16x32xf32>
    %261 = arith.subf %244, %260 : vector<16x32xf32>
    %cst_127 = arith.constant 9.99999974E-6 : f32
    %262 = vector.broadcast %cst_127 : f32 to vector<16x1xf32>
    %263 = arith.addf %259, %262 : vector<16x1xf32>
    %264 = math.rsqrt %263 : vector<16x1xf32>
    %265 = vector.broadcast %264 : vector<16x1xf32> to vector<16x32xf32>
    %266 = arith.mulf %261, %265 : vector<16x32xf32>
    %267 = vector.broadcast %246 : vector<1x32xf32> to vector<16x32xf32>
    %268 = arith.mulf %266, %267 : vector<16x32xf32>
    %269 = vector.broadcast %248 : vector<1x32xf32> to vector<16x32xf32>
    %270 = arith.addf %268, %269 : vector<16x32xf32>
    %271 = arith.truncf %270 : vector<16x32xf32> to vector<16x32xbf16>
    %c0_128 = arith.constant 0 : index
    %c0_129 = arith.constant 0 : index
    %272 = vector.load %arg14[%c0_128, %c0_129] : memref<32x256xbf16, #tpu.memory_space<vmem>>, vector<32x256xbf16>
    %cst_130 = arith.constant dense<0.000000e+00> : vector<16x256xf32>
    %273 = tpu.matmul %271, %272, %cst_130 {dimension_numbers = #tpu.dot_dimension_numbers<[1], [0], [0], [1], [0, 0, 1, 1], [], []>} : vector<16x32xbf16>, vector<32x256xbf16>, vector<16x256xf32> -> vector<16x256xf32>
    %c0_131 = arith.constant 0 : index
    %c0_132 = arith.constant 0 : index
    %274 = vector.load %arg15[%c0_131, %c0_132] : memref<1x256xf32, #tpu.memory_space<vmem>>, vector<1x256xf32>
    %275 = vector.broadcast %274 : vector<1x256xf32> to vector<16x256xf32>
    %276 = arith.addf %273, %275 : vector<16x256xf32>
    %cst_133 = arith.constant 0.000000e+00 : f32
    %277 = vector.broadcast %cst_133 : f32 to vector<16x256xf32>
    %278 = arith.maximumf %276, %277 : vector<16x256xf32>
    %279 = arith.truncf %278 : vector<16x256xf32> to vector<16x256xbf16>
    %c0_134 = arith.constant 0 : index
    %c0_135 = arith.constant 0 : index
    %280 = vector.load %arg16[%c0_134, %c0_135] : memref<256x256xbf16, #tpu.memory_space<vmem>>, vector<256x256xbf16>
    %cst_136 = arith.constant dense<0.000000e+00> : vector<16x256xf32>
    %281 = tpu.matmul %279, %280, %cst_136 {dimension_numbers = #tpu.dot_dimension_numbers<[1], [0], [0], [1], [0, 0, 1, 1], [], []>} : vector<16x256xbf16>, vector<256x256xbf16>, vector<16x256xf32> -> vector<16x256xf32>
    %c0_137 = arith.constant 0 : index
    %c0_138 = arith.constant 0 : index
    %282 = vector.load %arg17[%c0_137, %c0_138] : memref<1x256xf32, #tpu.memory_space<vmem>>, vector<1x256xf32>
    %283 = vector.broadcast %282 : vector<1x256xf32> to vector<16x256xf32>
    %284 = arith.addf %281, %283 : vector<16x256xf32>
    %cst_139 = arith.constant 0.000000e+00 : f32
    %285 = vector.broadcast %cst_139 : f32 to vector<16x256xf32>
    %286 = arith.maximumf %284, %285 : vector<16x256xf32>
    %287 = arith.truncf %286 : vector<16x256xf32> to vector<16x256xbf16>
    %c0_140 = arith.constant 0 : index
    %c0_141 = arith.constant 0 : index
    %288 = vector.load %arg18[%c0_140, %c0_141] : memref<256x96xbf16, #tpu.memory_space<vmem>>, vector<256x96xbf16>
    %cst_142 = arith.constant dense<0.000000e+00> : vector<16x96xf32>
    %289 = tpu.matmul %287, %288, %cst_142 {dimension_numbers = #tpu.dot_dimension_numbers<[1], [0], [0], [1], [0, 0, 1, 1], [], []>} : vector<16x256xbf16>, vector<256x96xbf16>, vector<16x96xf32> -> vector<16x96xf32>
    %c0_143 = arith.constant 0 : index
    %c0_144 = arith.constant 0 : index
    %290 = vector.load %arg19[%c0_143, %c0_144] : memref<1x96xf32, #tpu.memory_space<vmem>>, vector<1x96xf32>
    %291 = vector.broadcast %290 : vector<1x96xf32> to vector<16x96xf32>
    %292 = arith.addf %289, %291 : vector<16x96xf32>
    %293 = tpu.concatenate %270, %292 in 1 : vector<16x32xf32>, vector<16x96xf32> -> vector<16x128xf32>
    %c0_145 = arith.constant 0 : index
    %c0_146 = arith.constant 0 : index
    %294 = vector.load %arg22[%c0_145, %c0_146] : memref<16x128xf32, #tpu.memory_space<vmem>>, vector<16x128xf32>
    tpu.vector_store %arg22[%c0_145, %c0_146], %293 {strides = array<i32>} : memref<16x128xf32, #tpu.memory_space<vmem>>, vector<16x128xf32>,
    return
  }
}

</mosaic_0001>

<llo_original>
// kernel: _forward.1
$region0: #{_forward.1}
  #allocation0 [shape = 'u32[]', space=smem, size = 0x4, offset = 0x4, fixed_abs, tag = 'smem constant byte address 0x4 - core index']
  #allocation1 [shape = 'u32[144,128]{1,0:T(1,128)}', space=vmem, size = 0x12000, scoped, tag = 'internal scratch']
  %s0 = inlined_call_operand.vmem [shape: bf16[16,40], index: 0, kind: input, shape index: {}]
  %s1 = inlined_call_operand.vmem [shape: f32[64,16], index: 1, kind: input, shape index: {}]
  %s2 = inlined_call_operand.vmem [shape: bf16[40,32], index: 2, kind: input, shape index: {}]
  %s3 = inlined_call_operand.vmem [shape: f32[1,32], index: 3, kind: input, shape index: {}]
  %s4 = inlined_call_operand.vmem [shape: bf16[2,32,96], index: 4, kind: input, shape index: {}]
  %s5 = inlined_call_operand.vmem [shape: f32[2,1,96], index: 5, kind: input, shape index: {}]
  %s6 = inlined_call_operand.vmem [shape: bf16[2,32,32], index: 6, kind: input, shape index: {}]
  %s7 = inlined_call_operand.vmem [shape: f32[2,1,32], index: 7, kind: input, shape index: {}]
  %s8 = inlined_call_operand.vmem [shape: f32[2,1,32], index: 8, kind: input, shape index: {}]
  %s9 = inlined_call_operand.vmem [shape: f32[2,1,32], index: 9, kind: input, shape index: {}]
  %s10 = inlined_call_operand.vmem [shape: f32[2,1,2048], index: 10, kind: input, shape index: {}]
  %s11 = inlined_call_operand.vmem [shape: f32[2,1,32], index: 11, kind: input, shape index: {}]
  %s12 = inlined_call_operand.vmem [shape: f32[2,1,32], index: 12, kind: input, shape index: {}]
  %s13 = inlined_call_operand.vmem [shape: f32[2,1,32], index: 13, kind: input, shape index: {}]
  %s14 = inlined_call_operand.vmem [shape: bf16[32,256], index: 14, kind: input, shape index: {}]
  %s15 = inlined_call_operand.vmem [shape: f32[1,256], index: 15, kind: input, shape index: {}]
  %s16 = inlined_call_operand.vmem [shape: bf16[256,256], index: 16, kind: input, shape index: {}]
  %s17 = inlined_call_operand.vmem [shape: f32[1,256], index: 17, kind: input, shape index: {}]
  %s18 = inlined_call_operand.vmem [shape: bf16[256,96], index: 18, kind: input, shape index: {}]
  %s19 = inlined_call_operand.vmem [shape: f32[1,96], index: 19, kind: input, shape index: {}]
  %s20 = inlined_call_operand.vmem [shape: bf16[2,32,2048], index: 20, kind: input, shape index: {}]
  %s21 = inlined_call_operand.vmem [shape: bf16[2,2048,32], index: 21, kind: input, shape index: {}]
  %s22 = inlined_call_operand.vmem [shape: f32[16,128], index: 22, kind: output, shape index: {}]
  %s23 = sld [smem:[#allocation0]]
  $region98: #{_forward.1} parent=0
    _
  %s25 = ssub.s32 1, %s23
  %s26 = scalar_select 0, %s25, %s23
  // Predicated region
  $region2: #{_forward.1} parent=0 // pred_check
    _
  $region3: #{_forward.1} parent=0 // pred_check_branch
    %28 = sbr.rel (0) target = $region5
  $region4: #{_forward.1} parent=0 // pred_region
    _
  $region5: #{_forward.1} parent=0 // pred_fallthru
    _
  // Predicated region
  $region6: #{_forward.1} parent=0 // pred_check
    _
  $region7: #{_forward.1} parent=0 // pred_check_branch
    %30 = sbr.rel (0) target = $region9
  $region8: #{_forward.1} parent=0 // pred_region
    _
  $region9: #{_forward.1} parent=0 // pred_fallthru
    _
  // Predicated region
  $region10: #{_forward.1} parent=0 // pred_check
    _
  $region11: #{_forward.1} parent=0 // pred_check_branch
    %32 = sbr.rel (0) target = $region13
  $region12: #{_forward.1} parent=0 // pred_region
    _
  $region13: #{_forward.1} parent=0 // pred_fallthru
    _
  // Predicated region
  $region14: #{_forward.1} parent=0 // pred_check
    _
  $region15: #{_forward.1} parent=0 // pred_check_branch
    %34 = sbr.rel (0) target = $region17
  $region16: #{_forward.1} parent=0 // pred_region
    _
  $region17: #{_forward.1} parent=0 // pred_fallthru
    _
  // Predicated region
  $region18: #{_forward.1} parent=0 // pred_check
    _
  $region19: #{_forward.1} parent=0 // pred_check_branch
    %36 = sbr.rel (0) target = $region21
  $region20: #{_forward.1} parent=0 // pred_region
    _
  $region21: #{_forward.1} parent=0 // pred_fallthru
    _
  // Predicated region
  $region22: #{_forward.1} parent=0 // pred_check
    _
  $region23: #{_forward.1} parent=0 // pred_check_branch
    %38 = sbr.rel (0) target = $region25
  $region24: #{_forward.1} parent=0 // pred_region
    _
  $region25: #{_forward.1} parent=0 // pred_fallthru
    _
  // Predicated region
  $region26: #{_forward.1} parent=0 // pred_check
    _
  $region27: #{_forward.1} parent=0 // pred_check_branch
    %40 = sbr.rel (0) target = $region29
  $region28: #{_forward.1} parent=0 // pred_region
    _
  $region29: #{_forward.1} parent=0 // pred_fallthru
    _
  // Predicated region
  $region30: #{_forward.1} parent=0 // pred_check
    _
  $region31: #{_forward.1} parent=0 // pred_check_branch
    %42 = sbr.rel (0) target = $region33
  $region32: #{_forward.1} parent=0 // pred_region
    _
  $region33: #{_forward.1} parent=0 // pred_fallthru
    _
  // Predicated region
  $region34: #{_forward.1} parent=0 // pred_check
    _
  $region35: #{_forward.1} parent=0 // pred_check_branch
    %44 = sbr.rel (0) target = $region37
  $region36: #{_forward.1} parent=0 // pred_region
    _
  $region37: #{_forward.1} parent=0 // pred_fallthru
    _
  // Predicated region
  $region38: #{_forward.1} parent=0 // pred_check
    _
  $region39: #{_forward.1} parent=0 // pred_check_branch
    %46 = sbr.rel (0) target = $region41
  $region40: #{_forward.1} parent=0 // pred_region
    _
  $region41: #{_forward.1} parent=0 // pred_fallthru
    _
  // Predicated region
  $region42: #{_forward.1} parent=0 // pred_check
    _
  $region43: #{_forward.1} parent=0 // pred_check_branch
    %48 = sbr.rel (0) target = $region45
  $region44: #{_forward.1} parent=0 // pred_region
    _
  $region45: #{_forward.1} parent=0 // pred_fallthru
    _
  // Predicated region
  $region46: #{_forward.1} parent=0 // pred_check
    _
  $region47: #{_forward.1} parent=0 // pred_check_branch
    %50 = sbr.rel (0) target = $region49
  $region48: #{_forward.1} parent=0 // pred_region
    _
  $region49: #{_forward.1} parent=0 // pred_fallthru
    _
  // Predicated region
  $region50: #{_forward.1} parent=0 // pred_check
    _
  $region51: #{_forward.1} parent=0 // pred_check_branch
    %52 = sbr.rel (0) target = $region53
  $region52: #{_forward.1} parent=0 // pred_region
    _
  $region53: #{_forward.1} parent=0 // pred_fallthru
    _
  // Predicated region
  $region54: #{_forward.1} parent=0 // pred_check
    _
  $region55: #{_forward.1} parent=0 // pred_check_branch
    %54 = sbr.rel (0) target = $region57
  $region56: #{_forward.1} parent=0 // pred_region
    _
  $region57: #{_forward.1} parent=0 // pred_fallthru
    _
  // Predicated region
  $region58: #{_forward.1} parent=0 // pred_check
    _
  $region59: #{_forward.1} parent=0 // pred_check_branch
    %56 = sbr.rel (0) target = $region61
  $region60: #{_forward.1} parent=0 // pred_region
    _
  $region61: #{_forward.1} parent=0 // pred_fallthru
    _
  // Predicated region
  $region62: #{_forward.1} parent=0 // pred_check
    _
  $region63: #{_forward.1} parent=0 // pred_check_branch
    %58 = sbr.rel (0) target = $region65
  $region64: #{_forward.1} parent=0 // pred_region
    _
  $region65: #{_forward.1} parent=0 // pred_fallthru
    _
  // Predicated region
  $region66: #{_forward.1} parent=0 // pred_check
    _
  $region67: #{_forward.1} parent=0 // pred_check_branch
    %60 = sbr.rel (0) target = $region69
  $region68: #{_forward.1} parent=0 // pred_region
    _
  $region69: #{_forward.1} parent=0 // pred_fallthru
    _
  // Predicated region
  $region70: #{_forward.1} parent=0 // pred_check
    _
  $region71: #{_forward.1} parent=0 // pred_check_branch
    %62 = sbr.rel (0) target = $region73
  $region72: #{_forward.1} parent=0 // pred_region
    _
  $region73: #{_forward.1} parent=0 // pred_fallthru
    _
  // Predicated region
  $region74: #{_forward.1} parent=0 // pred_check
    _
  $region75: #{_forward.1} parent=0 // pred_check_branch
    %64 = sbr.rel (0) target = $region77
  $region76: #{_forward.1} parent=0 // pred_region
    _
  $region77: #{_forward.1} parent=0 // pred_fallthru
    _
  // Predicated region
  $region78: #{_forward.1} parent=0 // pred_check
    _
  $region79: #{_forward.1} parent=0 // pred_check_branch
    %66 = sbr.rel (0) target = $region81
  $region80: #{_forward.1} parent=0 // pred_region
    _
  $region81: #{_forward.1} parent=0 // pred_fallthru
    _
  // Predicated region
  $region82: #{_forward.1} parent=0 // pred_check
    _
  $region83: #{_forward.1} parent=0 // pred_check_branch
    %68 = sbr.rel (0) target = $region85
  $region84: #{_forward.1} parent=0 // pred_region
    _
  $region85: #{_forward.1} parent=0 // pred_fallthru
    _
  // Predicated region
  $region86: #{_forward.1} parent=0 // pred_check
    _
  $region87: #{_forward.1} parent=0 // pred_check_branch
    %70 = sbr.rel (0) target = $region89
  $region88: #{_forward.1} parent=0 // pred_region
    _
  $region89: #{_forward.1} parent=0 // pred_fallthru
    _
  %v72 = vld [vmem:[%s0] sm:$0xf]
  %v73 = vld [vmem:[%s0 + $0x4] sm:$0xf]
  %v74 = vld [vmem:[%s2] sm:$0xf]
  %v75 = vld [vmem:[%s2 + $0x4] sm:$0xf]
  %v76 = vld [vmem:[%s2 + $0x8] sm:$0xf]
  %v77 = vld [vmem:[%s2 + $0xc] sm:$0xf]
  %v78 = vld [vmem:[%s2 + $0x10] sm:$0xf]
  %v79 = vld [vmem:[%s3] sm:$0x1]
  %v81 = vlaneseq
  %v82 = vshrl.u32 %v81, 7
  %v83 = vsub.s32 0, %v82
  %v84 = vrot.slane %v79, %v83
  %v88 = vunpack.c.l.b16 %v72
  %v89 = vunpack.c.l.b16 %v73
  %v90 = vpack.c.b16 %v89, %v88
  %v96 = vunpack.c.l.b16 %v74
  %v97 = vunpack.c.l.b16 %v75
  %v98 = vunpack.c.l.b16 %v76
  %v99 = vunpack.c.l.b16 %v77
  %v100 = vunpack.c.l.b16 %v78
  %v101 = vpack.c.b16 %v97, %v96
  %v102 = vpack.c.b16 %v99, %v98
  %v103 = vpack.c.b16 %v100, %v100
  %vm106 = vcmask 326656
  %v108 = vsel %vm106, %v90, 0
  %vm110 = vcmask 1043456
  %v112 = vsel %vm110, %v103, 0
  %114 = vmatprep.subr.bf16.mxu0 0
  %115 = vmatpush1.bf16.msra.mxu0 %v101
  %116 = vmatprep.subr.bf16.mxu0 0
  %117 = vmatpush1.bf16.msra.mxu0 %v102
  %118 = vmatprep.subr.bf16.mxu0 0
  %119 = vmatpush1.bf16.msra.mxu0 %v112
  %120 = vmatprep.subr.bf16.mxu0 0
  %121 = vmatpush1.bf16.msra.mxu0 0
  %122 = vmatprep.subr.bf16.mxu0 0
  %123 = vmatpush1.bf16.msra.mxu0 0
  %124 = vmatprep.subr.bf16.mxu0 0
  %125 = vmatpush1.bf16.msra.mxu0 0
  %126 = vmatprep.subr.bf16.mxu0 0
  %127 = vmatpush1.bf16.msra.mxu0 0
  %128 = vmatprep.subr.bf16.mxu0 0
  %129 = vmatpush1.bf16.msra.mxu0 0
  %130 = vmatprep.subr.bf16.mxu0 0
  %131 = vmatpush1.bf16.msra.mxu0 0
  %132 = vmatprep.subr.bf16.mxu0 0
  %133 = vmatpush1.bf16.msra.mxu0 0
  %134 = vmatprep.subr.bf16.mxu0 0
  %135 = vmatpush1.bf16.msra.mxu0 0
  %136 = vmatprep.subr.bf16.mxu0 0
  %137 = vmatpush1.bf16.msra.mxu0 0
  %138 = vmatprep.subr.bf16.mxu0 0
  %139 = vmatpush1.bf16.msra.mxu0 0
  %140 = vmatprep.subr.bf16.mxu0 0
  %141 = vmatpush1.bf16.msra.mxu0 0
  %142 = vmatprep.subr.bf16.mxu0 0
  %143 = vmatpush1.bf16.msra.mxu0 0
  %144 = vmatprep.subr.bf16.mxu0 0
  %145 = vmatpush1.bf16.msra.mxu0 0
  %146 = vmatprep.mubr.bf16.mxu0 0
  %147 = vmatmul.mubr.bf16.gmra.mrb[0].mxu0 %v108
  %v148 = vpop.f32.mrb[0].mxu0
  %v149 = vadd.f32 %v84, %v148
  %v150 = vpop.f32.mrb[0].mxu0
  %v151 = vpop.f32.mrb[0].mxu0
  %v152 = vadd.f32 %v84, %v151
  %v153 = vpop.f32.mrb[0].mxu0
  %154 = vdwg.mxu0
  %v155 = vld [vmem:[%s1] sm:$0xff]
  %v156 = vld [vmem:[%s1 + $0x8] sm:$0xff]
  %v157 = vld [vmem:[%s1 + $0x10] sm:$0xff]
  %v158 = vld [vmem:[%s1 + $0x18] sm:$0xff]
  %v159 = vld [vmem:[%s1 + $0x20] sm:$0xff]
  %v160 = vld [vmem:[%s1 + $0x28] sm:$0xff]
  %v161 = vld [vmem:[%s1 + $0x30] sm:$0xff]
  %v162 = vld [vmem:[%s1 + $0x38] sm:$0xff]
  %v163 = vpack.c.bf16 %v152, %v149
  %v164 = vld [vmem:[%s4] sm:$0xf]
  %v165 = vld [vmem:[%s4 + $0x4] sm:$0xf]
  %v166 = vld [vmem:[%s4 + $0x8] sm:$0xf]
  %v167 = vld [vmem:[%s4 + $0xc] sm:$0xf]
  %v168 = vld [vmem:[%s5] sm:$0x1]
  %v170 = vlaneseq
  %v171 = vshrl.u32 %v170, 7
  %v172 = vsub.s32 0, %v171
  %v173 = vrot.slane %v168, %v172
  %v179 = vunpack.c.l.b16 %v164
  %v180 = vunpack.c.l.b16 %v165
  %v181 = vunpack.c.l.b16 %v166
  %v182 = vunpack.c.l.b16 %v167
  %v183 = vpack.c.b16 %v180, %v179
  %v184 = vpack.c.b16 %v182, %v181
  %vm187 = vcmask 261120
  %v189 = vsel %vm187, %v163, 0
  %191 = vmatprep.subr.bf16.mxu0 0
  %192 = vmatpush1.bf16.msra.mxu0 %v183
  %193 = vmatprep.subr.bf16.mxu0 0
  %194 = vmatpush1.bf16.msra.mxu0 %v184
  %195 = vmatprep.subr.bf16.mxu0 0
  %196 = vmatpush1.bf16.msra.mxu0 0
  %197 = vmatprep.subr.bf16.mxu0 0
  %198 = vmatpush1.bf16.msra.mxu0 0
  %199 = vmatprep.subr.bf16.mxu0 0
  %200 = vmatpush1.bf16.msra.mxu0 0
  %201 = vmatprep.subr.bf16.mxu0 0
  %202 = vmatpush1.bf16.msra.mxu0 0
  %203 = vmatprep.subr.bf16.mxu0 0
  %204 = vmatpush1.bf16.msra.mxu0 0
  %205 = vmatprep.subr.bf16.mxu0 0
  %206 = vmatpush1.bf16.msra.mxu0 0
  %207 = vmatprep.subr.bf16.mxu0 0
  %208 = vmatpush1.bf16.msra.mxu0 0
  %209 = vmatprep.subr.bf16.mxu0 0
  %210 = vmatpush1.bf16.msra.mxu0 0
  %211 = vmatprep.subr.bf16.mxu0 0
  %212 = vmatpush1.bf16.msra.mxu0 0
  %213 = vmatprep.subr.bf16.mxu0 0
  %214 = vmatpush1.bf16.msra.mxu0 0
  %215 = vmatprep.subr.bf16.mxu0 0
  %216 = vmatpush1.bf16.msra.mxu0 0
  %217 = vmatprep.subr.bf16.mxu0 0
  %218 = vmatpush1.bf16.msra.mxu0 0
  %219 = vmatprep.subr.bf16.mxu0 0
  %220 = vmatpush1.bf16.msra.mxu0 0
  %221 = vmatprep.subr.bf16.mxu0 0
  %222 = vmatpush1.bf16.msra.mxu0 0
  %223 = vmatprep.mubr.bf16.mxu0 0
  %224 = vmatmul.mubr.bf16.gmra.mrb[0].mxu0 %v189
  %v225 = vpop.f32.mrb[0].mxu0
  %v226 = vadd.f32 %v173, %v225
  %v227 = vpop.f32.mrb[0].mxu0
  %v228 = vpop.f32.mrb[0].mxu0
  %v229 = vadd.f32 %v173, %v228
  %v230 = vpop.f32.mrb[0].mxu0
  %231 = vdwg.mxu0
  %v232 = vpack.c.bf16 %v229, %v226
  %234 = vrot.lane.b32.xlu0 %v232, 96
  %v235 = vpop.permute.xlu0 %234
  %vm236 = vcmask 64512
  %v238 = vsel %vm236, %v232, 0
  %v241 = vsel %vm236, %v235, 0
  %243 = vmatprep.subr.bf16.mxu0 0
  %244 = vmatpush1.bf16.xpose.msra.mxu0 %v241
  %245 = vmatprep.subr.bf16.mxu0 0
  %246 = vmatpush1.bf16.xpose.msra.mxu0 0
  %247 = vmatprep.subr.bf16.mxu0 0
  %248 = vmatpush1.bf16.xpose.msra.mxu0 0
  %249 = vmatprep.subr.bf16.mxu0 0
  %250 = vmatpush1.bf16.xpose.msra.mxu0 0
  %251 = vmatprep.subr.bf16.mxu0 0
  %252 = vmatpush1.bf16.xpose.msra.mxu0 0
  %253 = vmatprep.subr.bf16.mxu0 0
  %254 = vmatpush1.bf16.xpose.msra.mxu0 0
  %255 = vmatprep.subr.bf16.mxu0 0
  %256 = vmatpush1.bf16.xpose.msra.mxu0 0
  %257 = vmatprep.subr.bf16.mxu0 0
  %258 = vmatpush1.bf16.xpose.msra.mxu0 0
  %259 = vmatprep.subr.bf16.mxu0 0
  %260 = vmatpush1.bf16.xpose.msra.mxu0 0
  %261 = vmatprep.subr.bf16.mxu0 0
  %262 = vmatpush1.bf16.xpose.msra.mxu0 0
  %263 = vmatprep.subr.bf16.mxu0 0
  %264 = vmatpush1.bf16.xpose.msra.mxu0 0
  %265 = vmatprep.subr.bf16.mxu0 0
  %266 = vmatpush1.bf16.xpose.msra.mxu0 0
  %267 = vmatprep.subr.bf16.mxu0 0
  %268 = vmatpush1.bf16.xpose.msra.mxu0 0
  %269 = vmatprep.subr.bf16.mxu0 0
  %270 = vmatpush1.bf16.xpose.msra.mxu0 0
  %271 = vmatprep.subr.bf16.mxu0 0
  %272 = vmatpush1.bf16.xpose.msra.mxu0 0
  %273 = vmatprep.subr.bf16.mxu0 0
  %274 = vmatpush1.bf16.xpose.msra.mxu0 0
  %275 = vmatprep.mubr.bf16.mxu0 0
  %276 = vmatmul.mubr.bf16.gmra.mrb[0].mxu0 %v238
  %v277 = vpop.f32.mrb[0].mxu0
  %v278 = vadd.f32 0.0, %v277
  %v279 = vpop.f32.mrb[0].mxu0
  %v280 = vpop.f32.mrb[0].mxu0
  %v281 = vadd.f32 0.0, %v280
  %v282 = vpop.f32.mrb[0].mxu0
  %283 = vdwg.mxu0
  %284 = vrot.lane.b32.xlu0 %v232, 120
  %v285 = vpop.permute.xlu0 %284
  %286 = vrot.lane.b32.xlu0 %v232, 88
  %v287 = vpop.permute.xlu0 %286
  %v289 = vsel %vm236, %v285, 0
  %v292 = vsel %vm236, %v287, 0
  %294 = vmatprep.subr.bf16.mxu0 0
  %295 = vmatpush1.bf16.xpose.msra.mxu0 %v292
  %296 = vmatprep.subr.bf16.mxu0 0
  %297 = vmatpush1.bf16.xpose.msra.mxu0 0
  %298 = vmatprep.subr.bf16.mxu0 0
  %299 = vmatpush1.bf16.xpose.msra.mxu0 0
  %300 = vmatprep.subr.bf16.mxu0 0
  %301 = vmatpush1.bf16.xpose.msra.mxu0 0
  %302 = vmatprep.subr.bf16.mxu0 0
  %303 = vmatpush1.bf16.xpose.msra.mxu0 0
  %304 = vmatprep.subr.bf16.mxu0 0
  %305 = vmatpush1.bf16.xpose.msra.mxu0 0
  %306 = vmatprep.subr.bf16.mxu0 0
  %307 = vmatpush1.bf16.xpose.msra.mxu0 0
  %308 = vmatprep.subr.bf16.mxu0 0
  %309 = vmatpush1.bf16.xpose.msra.mxu0 0
  %310 = vmatprep.subr.bf16.mxu0 0
  %311 = vmatpush1.bf16.xpose.msra.mxu0 0
  %312 = vmatprep.subr.bf16.mxu0 0
  %313 = vmatpush1.bf16.xpose.msra.mxu0 0
  %314 = vmatprep.subr.bf16.mxu0 0
  %315 = vmatpush1.bf16.xpose.msra.mxu0 0
  %316 = vmatprep.subr.bf16.mxu0 0
  %317 = vmatpush1.bf16.xpose.msra.mxu0 0
  %318 = vmatprep.subr.bf16.mxu0 0
  %319 = vmatpush1.bf16.xpose.msra.mxu0 0
  %320 = vmatprep.subr.bf16.mxu0 0
  %321 = vmatpush1.bf16.xpose.msra.mxu0 0
  %322 = vmatprep.subr.bf16.mxu0 0
  %323 = vmatpush1.bf16.xpose.msra.mxu0 0
  %324 = vmatprep.subr.bf16.mxu0 0
  %325 = vmatpush1.bf16.xpose.msra.mxu0 0
  %326 = vmatprep.mubr.bf16.mxu0 0
  %327 = vmatmul.mubr.bf16.gmra.mrb[0].mxu0 %v289
  %v328 = vpop.f32.mrb[0].mxu0
  %v329 = vadd.f32 0.0, %v328
  %v330 = vpop.f32.mrb[0].mxu0
  %v331 = vpop.f32.mrb[0].mxu0
  %v332 = vadd.f32 0.0, %v331
  %v333 = vpop.f32.mrb[0].mxu0
  %334 = vdwg.mxu0
  %335 = vrot.lane.b32.xlu0 %v232, 112
  %v336 = vpop.permute.xlu0 %335
  %337 = vrot.lane.b32.xlu0 %v232, 80
  %v338 = vpop.permute.xlu0 %337
  %v340 = vsel %vm236, %v336, 0
  %v343 = vsel %vm236, %v338, 0
  %345 = vmatprep.subr.bf16.mxu0 0
  %346 = vmatpush1.bf16.xpose.msra.mxu0 %v343
  %347 = vmatprep.subr.bf16.mxu0 0
  %348 = vmatpush1.bf16.xpose.msra.mxu0 0
  %349 = vmatprep.subr.bf16.mxu0 0
  %350 = vmatpush1.bf16.xpose.msra.mxu0 0
  %351 = vmatprep.subr.bf16.mxu0 0
  %352 = vmatpush1.bf16.xpose.msra.mxu0 0
  %353 = vmatprep.subr.bf16.mxu0 0
  %354 = vmatpush1.bf16.xpose.msra.mxu0 0
  %355 = vmatprep.subr.bf16.mxu0 0
  %356 = vmatpush1.bf16.xpose.msra.mxu0 0
  %357 = vmatprep.subr.bf16.mxu0 0
  %358 = vmatpush1.bf16.xpose.msra.mxu0 0
  %359 = vmatprep.subr.bf16.mxu0 0
  %360 = vmatpush1.bf16.xpose.msra.mxu0 0
  %361 = vmatprep.subr.bf16.mxu0 0
  %362 = vmatpush1.bf16.xpose.msra.mxu0 0
  %363 = vmatprep.subr.bf16.mxu0 0
  %364 = vmatpush1.bf16.xpose.msra.mxu0 0
  %365 = vmatprep.subr.bf16.mxu0 0
  %366 = vmatpush1.bf16.xpose.msra.mxu0 0
  %367 = vmatprep.subr.bf16.mxu0 0
  %368 = vmatpush1.bf16.xpose.msra.mxu0 0
  %369 = vmatprep.subr.bf16.mxu0 0
  %370 = vmatpush1.bf16.xpose.msra.mxu0 0
  %371 = vmatprep.subr.bf16.mxu0 0
  %372 = vmatpush1.bf16.xpose.msra.mxu0 0
  %373 = vmatprep.subr.bf16.mxu0 0
  %374 = vmatpush1.bf16.xpose.msra.mxu0 0
  %375 = vmatprep.subr.bf16.mxu0 0
  %376 = vmatpush1.bf16.xpose.msra.mxu0 0
  %377 = vmatprep.mubr.bf16.mxu0 0
  %378 = vmatmul.mubr.bf16.gmra.mrb[0].mxu0 %v340
  %v379 = vpop.f32.mrb[0].mxu0
  %v380 = vadd.f32 0.0, %v379
  %v381 = vpop.f32.mrb[0].mxu0
  %v382 = vpop.f32.mrb[0].mxu0
  %v383 = vadd.f32 0.0, %v382
  %v384 = vpop.f32.mrb[0].mxu0
  %385 = vdwg.mxu0
  %386 = vrot.lane.b32.xlu0 %v232, 104
  %v387 = vpop.permute.xlu0 %386
  %388 = vrot.lane.b32.xlu0 %v232, 72
  %v389 = vpop.permute.xlu0 %388
  %v391 = vsel %vm236, %v387, 0
  %v394 = vsel %vm236, %v389, 0
  %396 = vmatprep.subr.bf16.mxu0 0
  %397 = vmatpush1.bf16.xpose.msra.mxu0 %v394
  %398 = vmatprep.subr.bf16.mxu0 0
  %399 = vmatpush1.bf16.xpose.msra.mxu0 0
  %400 = vmatprep.subr.bf16.mxu0 0
  %401 = vmatpush1.bf16.xpose.msra.mxu0 0
  %402 = vmatprep.subr.bf16.mxu0 0
  %403 = vmatpush1.bf16.xpose.msra.mxu0 0
  %404 = vmatprep.subr.bf16.mxu0 0
  %405 = vmatpush1.bf16.xpose.msra.mxu0 0
  %406 = vmatprep.subr.bf16.mxu0 0
  %407 = vmatpush1.bf16.xpose.msra.mxu0 0
  %408 = vmatprep.subr.bf16.mxu0 0
  %409 = vmatpush1.bf16.xpose.msra.mxu0 0
  %410 = vmatprep.subr.bf16.mxu0 0
  %411 = vmatpush1.bf16.xpose.msra.mxu0 0
  %412 = vmatprep.subr.bf16.mxu0 0
  %413 = vmatpush1.bf16.xpose.msra.mxu0 0
  %414 = vmatprep.subr.bf16.mxu0 0
  %415 = vmatpush1.bf16.xpose.msra.mxu0 0
  %416 = vmatprep.subr.bf16.mxu0 0
  %417 = vmatpush1.bf16.xpose.msra.mxu0 0
  %418 = vmatprep.subr.bf16.mxu0 0
  %419 = vmatpush1.bf16.xpose.msra.mxu0 0
  %420 = vmatprep.subr.bf16.mxu0 0
  %421 = vmatpush1.bf16.xpose.msra.mxu0 0
  %422 = vmatprep.subr.bf16.mxu0 0
  %423 = vmatpush1.bf16.xpose.msra.mxu0 0
  %424 = vmatprep.subr.bf16.mxu0 0
  %425 = vmatpush1.bf16.xpose.msra.mxu0 0
  %426 = vmatprep.subr.bf16.mxu0 0
  %427 = vmatpush1.bf16.xpose.msra.mxu0 0
  %428 = vmatprep.mubr.bf16.mxu0 0
  %429 = vmatmul.mubr.bf16.gmra.mrb[0].mxu0 %v391
  %v430 = vpop.f32.mrb[0].mxu0
  %v431 = vadd.f32 0.0, %v430
  %v432 = vpop.f32.mrb[0].mxu0
  %v433 = vpop.f32.mrb[0].mxu0
  %v434 = vadd.f32 0.0, %v433
  %v435 = vpop.f32.mrb[0].mxu0
  %436 = vdwg.mxu0
  %v437 = vadd.f32 %v278, %v155
  %v438 = vadd.f32 %v281, %v156
  %v439 = vadd.f32 %v329, %v157
  %v440 = vadd.f32 %v332, %v158
  %v441 = vadd.f32 %v380, %v159
  %v442 = vadd.f32 %v383, %v160
  %v443 = vadd.f32 %v431, %v161
  %v444 = vadd.f32 %v434, %v162
  %vm445 = vcmask 130048
  %v446 = vsel %vm445, %v437, -inf
  %447 = vmax.xlane.f32.xlu0 %v446
  %v448 = vpop.xlane.xlu0 %447
  %v449 = vsel %vm445, %v438, -inf
  %450 = vmax.xlane.f32.xlu0 %v449
  %v451 = vpop.xlane.xlu0 %450
  %v452 = vsel %vm445, %v439, -inf
  %453 = vmax.xlane.f32.xlu0 %v452
  %v454 = vpop.xlane.xlu0 %453
  %v455 = vsel %vm445, %v440, -inf
  %456 = vmax.xlane.f32.xlu0 %v455
  %v457 = vpop.xlane.xlu0 %456
  %v458 = vsel %vm445, %v441, -inf
  %459 = vmax.xlane.f32.xlu0 %v458
  %v460 = vpop.xlane.xlu0 %459
  %v461 = vsel %vm445, %v442, -inf
  %462 = vmax.xlane.f32.xlu0 %v461
  %v463 = vpop.xlane.xlu0 %462
  %v464 = vsel %vm445, %v443, -inf
  %465 = vmax.xlane.f32.xlu0 %v464
  %v466 = vpop.xlane.xlu0 %465
  %v467 = vsel %vm445, %v444, -inf
  %468 = vmax.xlane.f32.xlu0 %v467
  %v469 = vpop.xlane.xlu0 %468
  %v470 = vsub.f32 %v437, %v448
  %v471 = vsub.f32 %v438, %v451
  %v472 = vsub.f32 %v439, %v454
  %v473 = vsub.f32 %v440, %v457
  %v474 = vsub.f32 %v441, %v460
  %v475 = vsub.f32 %v442, %v463
  %v476 = vsub.f32 %v443, %v466
  %v477 = vsub.f32 %v444, %v469
  %v478 = vmul.f32 %v470, 1.442695
  %v479 = vpow.pop %v478
  %v480 = vmul.f32 %v471, 1.442695
  %v481 = vpow.pop %v480
  %v482 = vmul.f32 %v472, 1.442695
  %v483 = vpow.pop %v482
  %v484 = vmul.f32 %v473, 1.442695
  %v485 = vpow.pop %v484
  %v486 = vmul.f32 %v474, 1.442695
  %v487 = vpow.pop %v486
  %v488 = vmul.f32 %v475, 1.442695
  %v489 = vpow.pop %v488
  %v490 = vmul.f32 %v476, 1.442695
  %v491 = vpow.pop %v490
  %v492 = vmul.f32 %v477, 1.442695
  %v493 = vpow.pop %v492
  %v494 = vsel %vm445, %v479, 0.0
  %495 = vadd.xlane.f32.xlu0 %v494
  %v496 = vpop.xlane.xlu0 %495
  %v497 = vsel %vm445, %v481, 0.0
  %498 = vadd.xlane.f32.xlu0 %v497
  %v499 = vpop.xlane.xlu0 %498
  %v500 = vsel %vm445, %v483, 0.0
  %501 = vadd.xlane.f32.xlu0 %v500
  %v502 = vpop.xlane.xlu0 %501
  %v503 = vsel %vm445, %v485, 0.0
  %504 = vadd.xlane.f32.xlu0 %v503
  %v505 = vpop.xlane.xlu0 %504
  %v506 = vsel %vm445, %v487, 0.0
  %507 = vadd.xlane.f32.xlu0 %v506
  %v508 = vpop.xlane.xlu0 %507
  %v509 = vsel %vm445, %v489, 0.0
  %510 = vadd.xlane.f32.xlu0 %v509
  %v511 = vpop.xlane.xlu0 %510
  %v512 = vsel %vm445, %v491, 0.0
  %513 = vadd.xlane.f32.xlu0 %v512
  %v514 = vpop.xlane.xlu0 %513
  %v515 = vsel %vm445, %v493, 0.0
  %516 = vadd.xlane.f32.xlu0 %v515
  %v517 = vpop.xlane.xlu0 %516
  %v518 = vrcp.pop %v496
  %v519 = vrcp.pop %v499
  %v520 = vrcp.pop %v502
  %v521 = vrcp.pop %v505
  %v522 = vrcp.pop %v508
  %v523 = vrcp.pop %v511
  %v524 = vrcp.pop %v514
  %v525 = vrcp.pop %v517
  %v526 = vmul.f32 %v479, %v518
  %v527 = vmul.f32 %v481, %v519
  %v528 = vmul.f32 %v483, %v520
  %v529 = vmul.f32 %v485, %v521
  %v530 = vmul.f32 %v487, %v522
  %v531 = vmul.f32 %v489, %v523
  %v532 = vmul.f32 %v491, %v524
  %v533 = vmul.f32 %v493, %v525
  %v534 = vpack.c.bf16 %v527, %v526
  %v535 = vpack.c.bf16 %v529, %v528
  %v536 = vpack.c.bf16 %v531, %v530
  %v537 = vpack.c.bf16 %v533, %v532
  %538 = vrot.lane.b32.xlu0 %v232, 64
  %v539 = vpop.permute.xlu0 %538
  %v542 = vsel %vm445, %v534, 0
  %544 = vmatprep.subr.bf16.mxu0 0
  %545 = vmatpush1.bf16.msra.mxu0 %v539
  %546 = vmatprep.subr.bf16.mxu0 0
  %547 = vmatpush1.bf16.msra.mxu0 0
  %548 = vmatprep.subr.bf16.mxu0 0
  %549 = vmatpush1.bf16.msra.mxu0 0
  %550 = vmatprep.subr.bf16.mxu0 0
  %551 = vmatpush1.bf16.msra.mxu0 0
  %552 = vmatprep.subr.bf16.mxu0 0
  %553 = vmatpush1.bf16.msra.mxu0 0
  %554 = vmatprep.subr.bf16.mxu0 0
  %555 = vmatpush1.bf16.msra.mxu0 0
  %556 = vmatprep.subr.bf16.mxu0 0
  %557 = vmatpush1.bf16.msra.mxu0 0
  %558 = vmatprep.subr.bf16.mxu0 0
  %559 = vmatpush1.bf16.msra.mxu0 0
  %560 = vmatprep.subr.bf16.mxu0 0
  %561 = vmatpush1.bf16.msra.mxu0 0
  %562 = vmatprep.subr.bf16.mxu0 0
  %563 = vmatpush1.bf16.msra.mxu0 0
  %564 = vmatprep.subr.bf16.mxu0 0
  %565 = vmatpush1.bf16.msra.mxu0 0
  %566 = vmatprep.subr.bf16.mxu0 0
  %567 = vmatpush1.bf16.msra.mxu0 0
  %568 = vmatprep.subr.bf16.mxu0 0
  %569 = vmatpush1.bf16.msra.mxu0 0
  %570 = vmatprep.subr.bf16.mxu0 0
  %571 = vmatpush1.bf16.msra.mxu0 0
  %572 = vmatprep.subr.bf16.mxu0 0
  %573 = vmatpush1.bf16.msra.mxu0 0
  %574 = vmatprep.subr.bf16.mxu0 0
  %575 = vmatpush1.bf16.msra.mxu0 0
  %576 = vmatprep.mubr.bf16.mxu0 0
  %577 = vmatmul.mubr.bf16.gmra.mrb[0].mxu0 %v542
  %v578 = vpop.f32.mrb[0].mxu0
  %v579 = vadd.f32 0.0, %v578
  %v580 = vpop.f32.mrb[0].mxu0
  %v581 = vpop.f32.mrb[0].mxu0
  %v582 = vadd.f32 0.0, %v581
  %v583 = vpop.f32.mrb[0].mxu0
  %584 = vdwg.mxu0
  %585 = vrot.lane.b32.xlu0 %v232, 56
  %v586 = vpop.permute.xlu0 %585
  %v589 = vsel %vm445, %v535, 0
  %591 = vmatprep.subr.bf16.mxu0 0
  %592 = vmatpush1.bf16.msra.mxu0 %v586
  %593 = vmatprep.subr.bf16.mxu0 0
  %594 = vmatpush1.bf16.msra.mxu0 0
  %595 = vmatprep.subr.bf16.mxu0 0
  %596 = vmatpush1.bf16.msra.mxu0 0
  %597 = vmatprep.subr.bf16.mxu0 0
  %598 = vmatpush1.bf16.msra.mxu0 0
  %599 = vmatprep.subr.bf16.mxu0 0
  %600 = vmatpush1.bf16.msra.mxu0 0
  %601 = vmatprep.subr.bf16.mxu0 0
  %602 = vmatpush1.bf16.msra.mxu0 0
  %603 = vmatprep.subr.bf16.mxu0 0
  %604 = vmatpush1.bf16.msra.mxu0 0
  %605 = vmatprep.subr.bf16.mxu0 0
  %606 = vmatpush1.bf16.msra.mxu0 0
  %607 = vmatprep.subr.bf16.mxu0 0
  %608 = vmatpush1.bf16.msra.mxu0 0
  %609 = vmatprep.subr.bf16.mxu0 0
  %610 = vmatpush1.bf16.msra.mxu0 0
  %611 = vmatprep.subr.bf16.mxu0 0
  %612 = vmatpush1.bf16.msra.mxu0 0
  %613 = vmatprep.subr.bf16.mxu0 0
  %614 = vmatpush1.bf16.msra.mxu0 0
  %615 = vmatprep.subr.bf16.mxu0 0
  %616 = vmatpush1.bf16.msra.mxu0 0
  %617 = vmatprep.subr.bf16.mxu0 0
  %618 = vmatpush1.bf16.msra.mxu0 0
  %619 = vmatprep.subr.bf16.mxu0 0
  %620 = vmatpush1.bf16.msra.mxu0 0
  %621 = vmatprep.subr.bf16.mxu0 0
  %622 = vmatpush1.bf16.msra.mxu0 0
  %623 = vmatprep.mubr.bf16.mxu0 0
  %624 = vmatmul.mubr.bf16.gmra.mrb[0].mxu0 %v589
  %v625 = vpop.f32.mrb[0].mxu0
  %v626 = vadd.f32 0.0, %v625
  %v627 = vpop.f32.mrb[0].mxu0
  %v628 = vpop.f32.mrb[0].mxu0
  %v629 = vadd.f32 0.0, %v628
  %v630 = vpop.f32.mrb[0].mxu0
  %631 = vdwg.mxu0
  %632 = vrot.lane.b32.xlu0 %v232, 48
  %v633 = vpop.permute.xlu0 %632
  %v636 = vsel %vm445, %v536, 0
  %638 = vmatprep.subr.bf16.mxu0 0
  %639 = vmatpush1.bf16.msra.mxu0 %v633
  %640 = vmatprep.subr.bf16.mxu0 0
  %641 = vmatpush1.bf16.msra.mxu0 0
  %642 = vmatprep.subr.bf16.mxu0 0
  %643 = vmatpush1.bf16.msra.mxu0 0
  %644 = vmatprep.subr.bf16.mxu0 0
  %645 = vmatpush1.bf16.msra.mxu0 0
  %646 = vmatprep.subr.bf16.mxu0 0
  %647 = vmatpush1.bf16.msra.mxu0 0
  %648 = vmatprep.subr.bf16.mxu0 0
  %649 = vmatpush1.bf16.msra.mxu0 0
  %650 = vmatprep.subr.bf16.mxu0 0
  %651 = vmatpush1.bf16.msra.mxu0 0
  %652 = vmatprep.subr.bf16.mxu0 0
  %653 = vmatpush1.bf16.msra.mxu0 0
  %654 = vmatprep.subr.bf16.mxu0 0
  %655 = vmatpush1.bf16.msra.mxu0 0
  %656 = vmatprep.subr.bf16.mxu0 0
  %657 = vmatpush1.bf16.msra.mxu0 0
  %658 = vmatprep.subr.bf16.mxu0 0
  %659 = vmatpush1.bf16.msra.mxu0 0
  %660 = vmatprep.subr.bf16.mxu0 0
  %661 = vmatpush1.bf16.msra.mxu0 0
  %662 = vmatprep.subr.bf16.mxu0 0
  %663 = vmatpush1.bf16.msra.mxu0 0
  %664 = vmatprep.subr.bf16.mxu0 0
  %665 = vmatpush1.bf16.msra.mxu0 0
  %666 = vmatprep.subr.bf16.mxu0 0
  %667 = vmatpush1.bf16.msra.mxu0 0
  %668 = vmatprep.subr.bf16.mxu0 0
  %669 = vmatpush1.bf16.msra.mxu0 0
  %670 = vmatprep.mubr.bf16.mxu0 0
  %671 = vmatmul.mubr.bf16.gmra.mrb[0].mxu0 %v636
  %v672 = vpop.f32.mrb[0].mxu0
  %v673 = vadd.f32 0.0, %v672
  %v674 = vpop.f32.mrb[0].mxu0
  %v675 = vpop.f32.mrb[0].mxu0
  %v676 = vadd.f32 0.0, %v675
  %v677 = vpop.f32.mrb[0].mxu0
  %678 = vdwg.mxu0
  %679 = vrot.lane.b32.xlu0 %v232, 40
  %v680 = vpop.permute.xlu0 %679
  %v683 = vsel %vm445, %v537, 0
  %685 = vmatprep.subr.bf16.mxu0 0
  %686 = vmatpush1.bf16.msra.mxu0 %v680
  %687 = vmatprep.subr.bf16.mxu0 0
  %688 = vmatpush1.bf16.msra.mxu0 0
  %689 = vmatprep.subr.bf16.mxu0 0
  %690 = vmatpush1.bf16.msra.mxu0 0
  %691 = vmatprep.subr.bf16.mxu0 0
  %692 = vmatpush1.bf16.msra.mxu0 0
  %693 = vmatprep.subr.bf16.mxu0 0
  %694 = vmatpush1.bf16.msra.mxu0 0
  %695 = vmatprep.subr.bf16.mxu0 0
  %696 = vmatpush1.bf16.msra.mxu0 0
  %697 = vmatprep.subr.bf16.mxu0 0
  %698 = vmatpush1.bf16.msra.mxu0 0
  %699 = vmatprep.subr.bf16.mxu0 0
  %700 = vmatpush1.bf16.msra.mxu0 0
  %701 = vmatprep.subr.bf16.mxu0 0
  %702 = vmatpush1.bf16.msra.mxu0 0
  %703 = vmatprep.subr.bf16.mxu0 0
  %704 = vmatpush1.bf16.msra.mxu0 0
  %705 = vmatprep.subr.bf16.mxu0 0
  %706 = vmatpush1.bf16.msra.mxu0 0
  %707 = vmatprep.subr.bf16.mxu0 0
  %708 = vmatpush1.bf16.msra.mxu0 0
  %709 = vmatprep.subr.bf16.mxu0 0
  %710 = vmatpush1.bf16.msra.mxu0 0
  %711 = vmatprep.subr.bf16.mxu0 0
  %712 = vmatpush1.bf16.msra.mxu0 0
  %713 = vmatprep.subr.bf16.mxu0 0
  %714 = vmatpush1.bf16.msra.mxu0 0
  %715 = vmatprep.subr.bf16.mxu0 0
  %716 = vmatpush1.bf16.msra.mxu0 0
  %717 = vmatprep.mubr.bf16.mxu0 0
  %718 = vmatmul.mubr.bf16.gmra.mrb[0].mxu0 %v683
  %v719 = vpop.f32.mrb[0].mxu0
  %v720 = vadd.f32 0.0, %v719
  %v721 = vpop.f32.mrb[0].mxu0
  %v722 = vpop.f32.mrb[0].mxu0
  %v723 = vadd.f32 0.0, %v722
  %v724 = vpop.f32.mrb[0].mxu0
  %725 = vdwg.mxu0
  %728 = vrot.lane.b32.xlu0 %v626, 8
  %v729 = vpop.permute.xlu0 %728
  %730 = vrot.lane.b32.xlu0 %v629, 8
  %v731 = vpop.permute.xlu0 %730
  %736 = vrot.lane.b32.xlu0 %v673, 16
  %v737 = vpop.permute.xlu0 %736
  %738 = vrot.lane.b32.xlu0 %v676, 16
  %v739 = vpop.permute.xlu0 %738
  %744 = vrot.lane.b32.xlu0 %v720, 24
  %v745 = vpop.permute.xlu0 %744
  %746 = vrot.lane.b32.xlu0 %v723, 24
  %v747 = vpop.permute.xlu0 %746
  %v750 = vsel %vm236, %v579, %v729
  %v751 = vsel %vm236, %v582, %v731
  %v752 = vsel %vm445, %v750, %v737
  %v753 = vsel %vm445, %v751, %v739
  %vm754 = vcmask 195584
  %v755 = vsel %vm754, %v752, %v745
  %v756 = vsel %vm754, %v753, %v747
  %v757 = vpack.c.bf16 %v756, %v755
  %v758 = vld [vmem:[%s6] sm:$0xf]
  %v759 = vld [vmem:[%s6 + $0x4] sm:$0xf]
  %v760 = vld [vmem:[%s6 + $0x8] sm:$0xf]
  %v761 = vld [vmem:[%s6 + $0xc] sm:$0xf]
  %v762 = vld [vmem:[%s7] sm:$0x1]
  %v764 = vlaneseq
  %v765 = vshrl.u32 %v764, 7
  %v766 = vsub.s32 0, %v765
  %v767 = vrot.slane %v762, %v766
  %v773 = vunpack.c.l.b16 %v758
  %v774 = vunpack.c.l.b16 %v759
  %v775 = vunpack.c.l.b16 %v760
  %v776 = vunpack.c.l.b16 %v761
  %v777 = vpack.c.b16 %v774, %v773
  %v778 = vpack.c.b16 %v776, %v775
  %v782 = vsel %vm187, %v757, 0
  %784 = vmatprep.subr.bf16.mxu0 0
  %785 = vmatpush1.bf16.msra.mxu0 %v777
  %786 = vmatprep.subr.bf16.mxu0 0
  %787 = vmatpush1.bf16.msra.mxu0 %v778
  %788 = vmatprep.subr.bf16.mxu0 0
  %789 = vmatpush1.bf16.msra.mxu0 0
  %790 = vmatprep.subr.bf16.mxu0 0
  %791 = vmatpush1.bf16.msra.mxu0 0
  %792 = vmatprep.subr.bf16.mxu0 0
  %793 = vmatpush1.bf16.msra.mxu0 0
  %794 = vmatprep.subr.bf16.mxu0 0
  %795 = vmatpush1.bf16.msra.mxu0 0
  %796 = vmatprep.subr.bf16.mxu0 0
  %797 = vmatpush1.bf16.msra.mxu0 0
  %798 = vmatprep.subr.bf16.mxu0 0
  %799 = vmatpush1.bf16.msra.mxu0 0
  %800 = vmatprep.subr.bf16.mxu0 0
  %801 = vmatpush1.bf16.msra.mxu0 0
  %802 = vmatprep.subr.bf16.mxu0 0
  %803 = vmatpush1.bf16.msra.mxu0 0
  %804 = vmatprep.subr.bf16.mxu0 0
  %805 = vmatpush1.bf16.msra.mxu0 0
  %806 = vmatprep.subr.bf16.mxu0 0
  %807 = vmatpush1.bf16.msra.mxu0 0
  %808 = vmatprep.subr.bf16.mxu0 0
  %809 = vmatpush1.bf16.msra.mxu0 0
  %810 = vmatprep.subr.bf16.mxu0 0
  %811 = vmatpush1.bf16.msra.mxu0 0
  %812 = vmatprep.subr.bf16.mxu0 0
  %813 = vmatpush1.bf16.msra.mxu0 0
  %814 = vmatprep.subr.bf16.mxu0 0
  %815 = vmatpush1.bf16.msra.mxu0 0
  %816 = vmatprep.mubr.bf16.mxu0 0
  %817 = vmatmul.mubr.bf16.gmra.mrb[0].mxu0 %v782
  %v818 = vpop.f32.mrb[0].mxu0
  %v819 = vadd.f32 %v767, %v818
  %v820 = vpop.f32.mrb[0].mxu0
  %v821 = vpop.f32.mrb[0].mxu0
  %v822 = vadd.f32 %v767, %v821
  %v823 = vpop.f32.mrb[0].mxu0
  %824 = vdwg.mxu0
  %v825 = vadd.f32 %v149, %v819
  %v826 = vadd.f32 %v152, %v822
  %v827 = vld [vmem:[%s8] sm:$0x1]
  %v828 = vld [vmem:[%s9] sm:$0x1]
  %v829 = vsel %vm187, %v825, 0.0
  %830 = vadd.xlane.f32.xlu0 %v829
  %v831 = vpop.xlane.xlu0 %830
  %v832 = vsel %vm187, %v826, 0.0
  %833 = vadd.xlane.f32.xlu0 %v832
  %v834 = vpop.xlane.xlu0 %833
  %v835 = vrcp.pop 32.0
  %v836 = vmul.f32 %v831, %v835
  %v837 = vmul.f32 %v834, %v835
  %v838 = vsub.f32 %v825, %v836
  %v839 = vsub.f32 %v826, %v837
  %v840 = vmul.f32 %v838, %v838
  %v841 = vmul.f32 %v839, %v839
  %v842 = vsel %vm187, %v840, 0.0
  %843 = vadd.xlane.f32.xlu0 %v842
  %v844 = vpop.xlane.xlu0 %843
  %v845 = vsel %vm187, %v841, 0.0
  %846 = vadd.xlane.f32.xlu0 %v845
  %v847 = vpop.xlane.xlu0 %846
  %v848 = vmul.f32 %v844, %v835
  %v849 = vmul.f32 %v847, %v835
  %v850 = vadd.f32 %v848, 1e-05
  %v851 = vadd.f32 %v849, 1e-05
  %v852 = vrsqrt.pop %v850
  %v853 = vrsqrt.pop %v851
  %v854 = vmul.f32 %v838, %v852
  %v855 = vmul.f32 %v839, %v853
  %v857 = vlaneseq
  %v858 = vshrl.u32 %v857, 7
  %v859 = vsub.s32 0, %v858
  %v860 = vrot.slane %v827, %v859
  %v862 = vmul.f32 %v854, %v860
  %v863 = vmul.f32 %v855, %v860
  %v865 = vlaneseq
  %v866 = vshrl.u32 %v865, 7
  %v867 = vsub.s32 0, %v866
  %v868 = vrot.slane %v828, %v867
  %v870 = vadd.f32 %v862, %v868
  %v871 = vadd.f32 %v863, %v868
  %v872 = vpack.c.bf16 %v871, %v870
  %v873 = vld [vmem:[%s20] sm:$0xff]
  %v874 = vld [vmem:[%s20 + $0x8] sm:$0xff]
  %v875 = vld [vmem:[%s20 + $0x10] sm:$0xff]
  %v876 = vld [vmem:[%s20 + $0x18] sm:$0xff]
  %v877 = vld [vmem:[%s20 + $0x20] sm:$0xff]
  %v878 = vld [vmem:[%s20 + $0x28] sm:$0xff]
  %v879 = vld [vmem:[%s20 + $0x30] sm:$0xff]
  %v880 = vld [vmem:[%s20 + $0x38] sm:$0xff]
  %v881 = vld [vmem:[%s20 + $0x40] sm:$0xff]
  %v882 = vld [vmem:[%s20 + $0x48] sm:$0xff]
  %v883 = vld [vmem:[%s20 + $0x50] sm:$0xff]
  %v884 = vld [vmem:[%s20 + $0x58] sm:$0xff]
  %v885 = vld [vmem:[%s20 + $0x60] sm:$0xff]
  %v886 = vld [vmem:[%s20 + $0x68] sm:$0xff]
  %v887 = vld [vmem:[%s20 + $0x70] sm:$0xff]
  %v888 = vld [vmem:[%s20 + $0x78] sm:$0xff]
  %v889 = vld [vmem:[%s20 + $0x80] sm:$0xff]
  %v890 = vld [vmem:[%s20 + $0x88] sm:$0xff]
  %v891 = vld [vmem:[%s20 + $0x90] sm:$0xff]
  %v892 = vld [vmem:[%s20 + $0x98] sm:$0xff]
  %v893 = vld [vmem:[%s20 + $0xa0] sm:$0xff]
  %v894 = vld [vmem:[%s20 + $0xa8] sm:$0xff]
  %v895 = vld [vmem:[%s20 + $0xb0] sm:$0xff]
  %v896 = vld [vmem:[%s20 + $0xb8] sm:$0xff]
  %v897 = vld [vmem:[%s20 + $0xc0] sm:$0xff]
  %v898 = vld [vmem:[%s20 + $0xc8] sm:$0xff]
  %v899 = vld [vmem:[%s20 + $0xd0] sm:$0xff]
  %v900 = vld [vmem:[%s20 + $0xd8] sm:$0xff]
  %v901 = vld [vmem:[%s20 + $0xe0] sm:$0xff]
  %v902 = vld [vmem:[%s20 + $0xe8] sm:$0xff]
  %v903 = vld [vmem:[%s20 + $0xf0] sm:$0xff]
  %v904 = vld [vmem:[%s20 + $0xf8] sm:$0xff]
  %v905 = vld [vmem:[%s10] sm:$0xff]
  %v906 = vld [vmem:[%s10 + $0x8] sm:$0xff]
  %v909 = vlaneseq
  %v910 = vshrl.u32 %v909, 7
  %v911 = vsub.s32 0, %v910
  %v912 = vrot.slane %v905, %v911
  %v913 = vlaneseq
  %v914 = vshrl.u32 %v913, 7
  %v915 = vsub.s32 1, %v914
  %v916 = vrot.slane %v905, %v915
  %v917 = vlaneseq
  %v918 = vshrl.u32 %v917, 7
  %v919 = vsub.s32 2, %v918
  %v920 = vrot.slane %v905, %v919
  %v921 = vlaneseq
  %v922 = vshrl.u32 %v921, 7
  %v923 = vsub.s32 3, %v922
  %v924 = vrot.slane %v905, %v923
  %v925 = vlaneseq
  %v926 = vshrl.u32 %v925, 7
  %v927 = vsub.s32 4, %v926
  %v928 = vrot.slane %v905, %v927
  %v929 = vlaneseq
  %v930 = vshrl.u32 %v929, 7
  %v931 = vsub.s32 5, %v930
  %v932 = vrot.slane %v905, %v931
  %v933 = vlaneseq
  %v934 = vshrl.u32 %v933, 7
  %v935 = vsub.s32 6, %v934
  %v936 = vrot.slane %v905, %v935
  %v937 = vlaneseq
  %v938 = vshrl.u32 %v937, 7
  %v939 = vsub.s32 7, %v938
  %v940 = vrot.slane %v905, %v939
  %v941 = vlaneseq
  %v942 = vshrl.u32 %v941, 7
  %v943 = vsub.s32 0, %v942
  %v944 = vrot.slane %v906, %v943
  %v945 = vlaneseq
  %v946 = vshrl.u32 %v945, 7
  %v947 = vsub.s32 1, %v946
  %v948 = vrot.slane %v906, %v947
  %v949 = vlaneseq
  %v950 = vshrl.u32 %v949, 7
  %v951 = vsub.s32 2, %v950
  %v952 = vrot.slane %v906, %v951
  %v953 = vlaneseq
  %v954 = vshrl.u32 %v953, 7
  %v955 = vsub.s32 3, %v954
  %v956 = vrot.slane %v906, %v955
  %v957 = vlaneseq
  %v958 = vshrl.u32 %v957, 7
  %v959 = vsub.s32 4, %v958
  %v960 = vrot.slane %v906, %v959
  %v961 = vlaneseq
  %v962 = vshrl.u32 %v961, 7
  %v963 = vsub.s32 5, %v962
  %v964 = vrot.slane %v906, %v963
  %v965 = vlaneseq
  %v966 = vshrl.u32 %v965, 7
  %v967 = vsub.s32 6, %v966
  %v968 = vrot.slane %v906, %v967
  %v969 = vlaneseq
  %v970 = vshrl.u32 %v969, 7
  %v971 = vsub.s32 7, %v970
  %v972 = vrot.slane %v906, %v971
  %v1021 = vunpack.c.l.b16 %v873
  %v1022 = vunpack.c.h.b16 %v873
  %v1023 = vunpack.c.l.b16 %v874
  %v1024 = vunpack.c.h.b16 %v874
  %v1025 = vunpack.c.l.b16 %v875
  %v1026 = vunpack.c.h.b16 %v875
  %v1027 = vunpack.c.l.b16 %v876
  %v1028 = vunpack.c.h.b16 %v876
  %v1029 = vunpack.c.l.b16 %v877
  %v1030 = vunpack.c.h.b16 %v877
  %v1031 = vunpack.c.l.b16 %v878
  %v1032 = vunpack.c.h.b16 %v878
  %v1033 = vunpack.c.l.b16 %v879
  %v1034 = vunpack.c.h.b16 %v879
  %v1035 = vunpack.c.l.b16 %v880
  %v1036 = vunpack.c.h.b16 %v880
  %v1037 = vunpack.c.l.b16 %v881
  %v1038 = vunpack.c.h.b16 %v881
  %v1039 = vunpack.c.l.b16 %v882
  %v1040 = vunpack.c.h.b16 %v882
  %v1041 = vunpack.c.l.b16 %v883
  %v1042 = vunpack.c.h.b16 %v883
  %v1043 = vunpack.c.l.b16 %v884
  %v1044 = vunpack.c.h.b16 %v884
  %v1045 = vunpack.c.l.b16 %v885
  %v1046 = vunpack.c.h.b16 %v885
  %v1047 = vunpack.c.l.b16 %v886
  %v1048 = vunpack.c.h.b16 %v886
  %v1049 = vunpack.c.l.b16 %v887
  %v1050 = vunpack.c.h.b16 %v887
  %v1051 = vunpack.c.l.b16 %v888
  %v1052 = vunpack.c.h.b16 %v888
  %v1053 = vunpack.c.l.b16 %v889
  %v1054 = vunpack.c.h.b16 %v889
  %v1055 = vunpack.c.l.b16 %v890
  %v1056 = vunpack.c.h.b16 %v890
  %v1057 = vunpack.c.l.b16 %v891
  %v1058 = vunpack.c.h.b16 %v891
  %v1059 = vunpack.c.l.b16 %v892
  %v1060 = vunpack.c.h.b16 %v892
  %v1061 = vunpack.c.l.b16 %v893
  %v1062 = vunpack.c.h.b16 %v893
  %v1063 = vunpack.c.l.b16 %v894
  %v1064 = vunpack.c.h.b16 %v894
  %v1065 = vunpack.c.l.b16 %v895
  %v1066 = vunpack.c.h.b16 %v895
  %v1067 = vunpack.c.l.b16 %v896
  %v1068 = vunpack.c.h.b16 %v896
  %v1069 = vunpack.c.l.b16 %v897
  %v1070 = vunpack.c.h.b16 %v897
  %v1071 = vunpack.c.l.b16 %v898
  %v1072 = vunpack.c.h.b16 %v898
  %v1073 = vunpack.c.l.b16 %v899
  %v1074 = vunpack.c.h.b16 %v899
  %v1075 = vunpack.c.l.b16 %v900
  %v1076 = vunpack.c.h.b16 %v900
  %v1077 = vunpack.c.l.b16 %v901
  %v1078 = vunpack.c.h.b16 %v901
  %v1079 = vunpack.c.l.b16 %v902
  %v1080 = vunpack.c.h.b16 %v902
  %v1081 = vunpack.c.l.b16 %v903
  %v1082 = vunpack.c.h.b16 %v903
  %v1083 = vunpack.c.l.b16 %v904
  %v1084 = vunpack.c.h.b16 %v904
  %v1085 = vpack.c.b16 %v1037, %v1021
  %v1086 = vpack.c.b16 %v1038, %v1022
  %v1087 = vpack.c.b16 %v1039, %v1023
  %v1088 = vpack.c.b16 %v1040, %v1024
  %v1089 = vpack.c.b16 %v1041, %v1025
  %v1090 = vpack.c.b16 %v1042, %v1026
  %v1091 = vpack.c.b16 %v1043, %v1027
  %v1092 = vpack.c.b16 %v1044, %v1028
  %v1093 = vpack.c.b16 %v1045, %v1029
  %v1094 = vpack.c.b16 %v1046, %v1030
  %v1095 = vpack.c.b16 %v1047, %v1031
  %v1096 = vpack.c.b16 %v1048, %v1032
  %v1097 = vpack.c.b16 %v1049, %v1033
  %v1098 = vpack.c.b16 %v1050, %v1034
  %v1099 = vpack.c.b16 %v1051, %v1035
  %v1100 = vpack.c.b16 %v1052, %v1036
  %v1101 = vpack.c.b16 %v1069, %v1053
  %v1102 = vpack.c.b16 %v1070, %v1054
  %v1103 = vpack.c.b16 %v1071, %v1055
  %v1104 = vpack.c.b16 %v1072, %v1056
  %v1105 = vpack.c.b16 %v1073, %v1057
  %v1106 = vpack.c.b16 %v1074, %v1058
  %v1107 = vpack.c.b16 %v1075, %v1059
  %v1108 = vpack.c.b16 %v1076, %v1060
  %v1109 = vpack.c.b16 %v1077, %v1061
  %v1110 = vpack.c.b16 %v1078, %v1062
  %v1111 = vpack.c.b16 %v1079, %v1063
  %v1112 = vpack.c.b16 %v1080, %v1064
  %v1113 = vpack.c.b16 %v1081, %v1065
  %v1114 = vpack.c.b16 %v1082, %v1066
  %v1115 = vpack.c.b16 %v1083, %v1067
  %v1116 = vpack.c.b16 %v1084, %v1068
  %v1150 = vsel %vm187, %v872, 0
  %1152 = vmatprep.subr.bf16.mxu0 %v1086
  %1153 = vmatpush1.bf16.msra.mxu0 %v1085
  %1154 = vmatprep.subr.bf16.mxu0 %v1102
  %1155 = vmatpush1.bf16.msra.mxu0 %v1101
  %1156 = vmatprep.subr.bf16.mxu0 0
  %1157 = vmatpush1.bf16.msra.mxu0 0
  %1158 = vmatprep.subr.bf16.mxu0 0
  %1159 = vmatpush1.bf16.msra.mxu0 0
  %1160 = vmatprep.subr.bf16.mxu0 0
  %1161 = vmatpush1.bf16.msra.mxu0 0
  %1162 = vmatprep.subr.bf16.mxu0 0
  %1163 = vmatpush1.bf16.msra.mxu0 0
  %1164 = vmatprep.subr.bf16.mxu0 0
  %1165 = vmatpush1.bf16.msra.mxu0 0
  %1166 = vmatprep.subr.bf16.mxu0 0
  %1167 = vmatpush1.bf16.msra.mxu0 0
  %1168 = vmatprep.subr.bf16.mxu0 0
  %1169 = vmatpush1.bf16.msra.mxu0 0
  %1170 = vmatprep.subr.bf16.mxu0 0
  %1171 = vmatpush1.bf16.msra.mxu0 0
  %1172 = vmatprep.subr.bf16.mxu0 0
  %1173 = vmatpush1.bf16.msra.mxu0 0
  %1174 = vmatprep.subr.bf16.mxu0 0
  %1175 = vmatpush1.bf16.msra.mxu0 0
  %1176 = vmatprep.subr.bf16.mxu0 0
  %1177 = vmatpush1.bf16.msra.mxu0 0
  %1178 = vmatprep.subr.bf16.mxu0 0
  %1179 = vmatpush1.bf16.msra.mxu0 0
  %1180 = vmatprep.subr.bf16.mxu0 0
  %1181 = vmatpush1.bf16.msra.mxu0 0
  %1182 = vmatprep.subr.bf16.mxu0 0
  %1183 = vmatpush1.bf16.msra.mxu0 0
  %1184 = vmatprep.mubr.bf16.mxu0 0
  %1185 = vmatmul.mubr.bf16.gmra.mrb[0].mxu0 %v1150
  %v1186 = vpop.f32.mrb[0].mxu0
  %v1187 = vadd.f32 %v912, %v1186
  %v1188 = vpop.f32.mrb[0].mxu0
  %v1189 = vadd.f32 %v916, %v1188
  %v1190 = vpop.f32.mrb[0].mxu0
  %v1191 = vadd.f32 %v912, %v1190
  %v1192 = vpop.f32.mrb[0].mxu0
  %v1193 = vadd.f32 %v916, %v1192
  %1194 = vdwg.mxu0
  %1195 = vmatprep.subr.bf16.mxu0 %v1088
  %1196 = vmatpush1.bf16.msra.mxu0 %v1087
  %1197 = vmatprep.subr.bf16.mxu0 %v1104
  %1198 = vmatpush1.bf16.msra.mxu0 %v1103
  %1199 = vmatprep.subr.bf16.mxu0 0
  %1200 = vmatpush1.bf16.msra.mxu0 0
  %1201 = vmatprep.subr.bf16.mxu0 0
  %1202 = vmatpush1.bf16.msra.mxu0 0
  %1203 = vmatprep.subr.bf16.mxu0 0
  %1204 = vmatpush1.bf16.msra.mxu0 0
  %1205 = vmatprep.subr.bf16.mxu0 0
  %1206 = vmatpush1.bf16.msra.mxu0 0
  %1207 = vmatprep.subr.bf16.mxu0 0
  %1208 = vmatpush1.bf16.msra.mxu0 0
  %1209 = vmatprep.subr.bf16.mxu0 0
  %1210 = vmatpush1.bf16.msra.mxu0 0
  %1211 = vmatprep.subr.bf16.mxu0 0
  %1212 = vmatpush1.bf16.msra.mxu0 0
  %1213 = vmatprep.subr.bf16.mxu0 0
  %1214 = vmatpush1.bf16.msra.mxu0 0
  %1215 = vmatprep.subr.bf16.mxu0 0
  %1216 = vmatpush1.bf16.msra.mxu0 0
  %1217 = vmatprep.subr.bf16.mxu0 0
  %1218 = vmatpush1.bf16.msra.mxu0 0
  %1219 = vmatprep.subr.bf16.mxu0 0
  %1220 = vmatpush1.bf16.msra.mxu0 0
  %1221 = vmatprep.subr.bf16.mxu0 0
  %1222 = vmatpush1.bf16.msra.mxu0 0
  %1223 = vmatprep.subr.bf16.mxu0 0
  %1224 = vmatpush1.bf16.msra.mxu0 0
  %1225 = vmatprep.subr.bf16.mxu0 0
  %1226 = vmatpush1.bf16.msra.mxu0 0
  %1227 = vmatprep.mubr.bf16.mxu0 0
  %1228 = vmatmul.mubr.bf16.gmra.mrb[0].mxu0 %v1150
  %v1229 = vpop.f32.mrb[0].mxu0
  %v1230 = vadd.f32 %v920, %v1229
  %v1231 = vpop.f32.mrb[0].mxu0
  %v1232 = vadd.f32 %v924, %v1231
  %v1233 = vpop.f32.mrb[0].mxu0
  %v1234 = vadd.f32 %v920, %v1233
  %v1235 = vpop.f32.mrb[0].mxu0
  %v1236 = vadd.f32 %v924, %v1235
  %1237 = vdwg.mxu0
  %1238 = vmatprep.subr.bf16.mxu0 %v1090
  %1239 = vmatpush1.bf16.msra.mxu0 %v1089
  %1240 = vmatprep.subr.bf16.mxu0 %v1106
  %1241 = vmatpush1.bf16.msra.mxu0 %v1105
  %1242 = vmatprep.subr.bf16.mxu0 0
  %1243 = vmatpush1.bf16.msra.mxu0 0
  %1244 = vmatprep.subr.bf16.mxu0 0
  %1245 = vmatpush1.bf16.msra.mxu0 0
  %1246 = vmatprep.subr.bf16.mxu0 0
  %1247 = vmatpush1.bf16.msra.mxu0 0
  %1248 = vmatprep.subr.bf16.mxu0 0
  %1249 = vmatpush1.bf16.msra.mxu0 0
  %1250 = vmatprep.subr.bf16.mxu0 0
  %1251 = vmatpush1.bf16.msra.mxu0 0
  %1252 = vmatprep.subr.bf16.mxu0 0
  %1253 = vmatpush1.bf16.msra.mxu0 0
  %1254 = vmatprep.subr.bf16.mxu0 0
  %1255 = vmatpush1.bf16.msra.mxu0 0
  %1256 = vmatprep.subr.bf16.mxu0 0
  %1257 = vmatpush1.bf16.msra.mxu0 0
  %1258 = vmatprep.subr.bf16.mxu0 0
  %1259 = vmatpush1.bf16.msra.mxu0 0
  %1260 = vmatprep.subr.bf16.mxu0 0
  %1261 = vmatpush1.bf16.msra.mxu0 0
  %1262 = vmatprep.subr.bf16.mxu0 0
  %1263 = vmatpush1.bf16.msra.mxu0 0
  %1264 = vmatprep.subr.bf16.mxu0 0
  %1265 = vmatpush1.bf16.msra.mxu0 0
  %1266 = vmatprep.subr.bf16.mxu0 0
  %1267 = vmatpush1.bf16.msra.mxu0 0
  %1268 = vmatprep.subr.bf16.mxu0 0
  %1269 = vmatpush1.bf16.msra.mxu0 0
  %1270 = vmatprep.mubr.bf16.mxu0 0
  %1271 = vmatmul.mubr.bf16.gmra.mrb[0].mxu0 %v1150
  %v1272 = vpop.f32.mrb[0].mxu0
  %v1273 = vadd.f32 %v928, %v1272
  %v1274 = vpop.f32.mrb[0].mxu0
  %v1275 = vadd.f32 %v932, %v1274
  %v1276 = vpop.f32.mrb[0].mxu0
  %v1277 = vadd.f32 %v928, %v1276
  %v1278 = vpop.f32.mrb[0].mxu0
  %v1279 = vadd.f32 %v932, %v1278
  %1280 = vdwg.mxu0
  %1281 = vmatprep.subr.bf16.mxu0 %v1092
  %1282 = vmatpush1.bf16.msra.mxu0 %v1091
  %1283 = vmatprep.subr.bf16.mxu0 %v1108
  %1284 = vmatpush1.bf16.msra.mxu0 %v1107
  %1285 = vmatprep.subr.bf16.mxu0 0
  %1286 = vmatpush1.bf16.msra.mxu0 0
  %1287 = vmatprep.subr.bf16.mxu0 0
  %1288 = vmatpush1.bf16.msra.mxu0 0
  %1289 = vmatprep.subr.bf16.mxu0 0
  %1290 = vmatpush1.bf16.msra.mxu0 0
  %1291 = vmatprep.subr.bf16.mxu0 0
  %1292 = vmatpush1.bf16.msra.mxu0 0
  %1293 = vmatprep.subr.bf16.mxu0 0
  %1294 = vmatpush1.bf16.msra.mxu0 0
  %1295 = vmatprep.subr.bf16.mxu0 0
  %1296 = vmatpush1.bf16.msra.mxu0 0
  %1297 = vmatprep.subr.bf16.mxu0 0
  %1298 = vmatpush1.bf16.msra.mxu0 0
  %1299 = vmatprep.subr.bf16.mxu0 0
  %1300 = vmatpush1.bf16.msra.mxu0 0
  %1301 = vmatprep.subr.bf16.mxu0 0
  %1302 = vmatpush1.bf16.msra.mxu0 0
  %1303 = vmatprep.subr.bf16.mxu0 0
  %1304 = vmatpush1.bf16.msra.mxu0 0
  %1305 = vmatprep.subr.bf16.mxu0 0
  %1306 = vmatpush1.bf16.msra.mxu0 0
  %1307 = vmatprep.subr.bf16.mxu0 0
  %1308 = vmatpush1.bf16.msra.mxu0 0
  %1309 = vmatprep.subr.bf16.mxu0 0
  %1310 = vmatpush1.bf16.msra.mxu0 0
  %1311 = vmatprep.subr.bf16.mxu0 0
  %1312 = vmatpush1.bf16.msra.mxu0 0
  %1313 = vmatprep.mubr.bf16.mxu0 0
  %1314 = vmatmul.mubr.bf16.gmra.mrb[0].mxu0 %v1150
  %v1315 = vpop.f32.mrb[0].mxu0
  %v1316 = vadd.f32 %v936, %v1315
  %v1317 = vpop.f32.mrb[0].mxu0
  %v1318 = vadd.f32 %v940, %v1317
  %v1319 = vpop.f32.mrb[0].mxu0
  %v1320 = vadd.f32 %v936, %v1319
  %v1321 = vpop.f32.mrb[0].mxu0
  %v1322 = vadd.f32 %v940, %v1321
  %1323 = vdwg.mxu0
  %1324 = vmatprep.subr.bf16.mxu0 %v1094
  %1325 = vmatpush1.bf16.msra.mxu0 %v1093
  %1326 = vmatprep.subr.bf16.mxu0 %v1110
  %1327 = vmatpush1.bf16.msra.mxu0 %v1109
  %1328 = vmatprep.subr.bf16.mxu0 0
  %1329 = vmatpush1.bf16.msra.mxu0 0
  %1330 = vmatprep.subr.bf16.mxu0 0
  %1331 = vmatpush1.bf16.msra.mxu0 0
  %1332 = vmatprep.subr.bf16.mxu0 0
  %1333 = vmatpush1.bf16.msra.mxu0 0
  %1334 = vmatprep.subr.bf16.mxu0 0
  %1335 = vmatpush1.bf16.msra.mxu0 0
  %1336 = vmatprep.subr.bf16.mxu0 0
  %1337 = vmatpush1.bf16.msra.mxu0 0
  %1338 = vmatprep.subr.bf16.mxu0 0
  %1339 = vmatpush1.bf16.msra.mxu0 0
  %1340 = vmatprep.subr.bf16.mxu0 0
  %1341 = vmatpush1.bf16.msra.mxu0 0
  %1342 = vmatprep.subr.bf16.mxu0 0
  %1343 = vmatpush1.bf16.msra.mxu0 0
  %1344 = vmatprep.subr.bf16.mxu0 0
  %1345 = vmatpush1.bf16.msra.mxu0 0
  %1346 = vmatprep.subr.bf16.mxu0 0
  %1347 = vmatpush1.bf16.msra.mxu0 0
  %1348 = vmatprep.subr.bf16.mxu0 0
  %1349 = vmatpush1.bf16.msra.mxu0 0
  %1350 = vmatprep.subr.bf16.mxu0 0
  %1351 = vmatpush1.bf16.msra.mxu0 0
  %1352 = vmatprep.subr.bf16.mxu0 0
  %1353 = vmatpush1.bf16.msra.mxu0 0
  %1354 = vmatprep.subr.bf16.mxu0 0
  %1355 = vmatpush1.bf16.msra.mxu0 0
  %1356 = vmatprep.mubr.bf16.mxu0 0
  %1357 = vmatmul.mubr.bf16.gmra.mrb[0].mxu0 %v1150
  %v1358 = vpop.f32.mrb[0].mxu0
  %v1359 = vadd.f32 %v944, %v1358
  %v1360 = vpop.f32.mrb[0].mxu0
  %v1361 = vadd.f32 %v948, %v1360
  %v1362 = vpop.f32.mrb[0].mxu0
  %v1363 = vadd.f32 %v944, %v1362
  %v1364 = vpop.f32.mrb[0].mxu0
  %v1365 = vadd.f32 %v948, %v1364
  %1366 = vdwg.mxu0
  %1367 = vmatprep.subr.bf16.mxu0 %v1096
  %1368 = vmatpush1.bf16.msra.mxu0 %v1095
  %1369 = vmatprep.subr.bf16.mxu0 %v1112
  %1370 = vmatpush1.bf16.msra.mxu0 %v1111
  %1371 = vmatprep.subr.bf16.mxu0 0
  %1372 = vmatpush1.bf16.msra.mxu0 0
  %1373 = vmatprep.subr.bf16.mxu0 0
  %1374 = vmatpush1.bf16.msra.mxu0 0
  %1375 = vmatprep.subr.bf16.mxu0 0
  %1376 = vmatpush1.bf16.msra.mxu0 0
  %1377 = vmatprep.subr.bf16.mxu0 0
  %1378 = vmatpush1.bf16.msra.mxu0 0
  %1379 = vmatprep.subr.bf16.mxu0 0
  %1380 = vmatpush1.bf16.msra.mxu0 0
  %1381 = vmatprep.subr.bf16.mxu0 0
  %1382 = vmatpush1.bf16.msra.mxu0 0
  %1383 = vmatprep.subr.bf16.mxu0 0
  %1384 = vmatpush1.bf16.msra.mxu0 0
  %1385 = vmatprep.subr.bf16.mxu0 0
  %1386 = vmatpush1.bf16.msra.mxu0 0
  %1387 = vmatprep.subr.bf16.mxu0 0
  %1388 = vmatpush1.bf16.msra.mxu0 0
  %1389 = vmatprep.subr.bf16.mxu0 0
  %1390 = vmatpush1.bf16.msra.mxu0 0
  %1391 = vmatprep.subr.bf16.mxu0 0
  %1392 = vmatpush1.bf16.msra.mxu0 0
  %1393 = vmatprep.subr.bf16.mxu0 0
  %1394 = vmatpush1.bf16.msra.mxu0 0
  %1395 = vmatprep.subr.bf16.mxu0 0
  %1396 = vmatpush1.bf16.msra.mxu0 0
  %1397 = vmatprep.subr.bf16.mxu0 0
  %1398 = vmatpush1.bf16.msra.mxu0 0
  %1399 = vmatprep.mubr.bf16.mxu0 0
  %1400 = vmatmul.mubr.bf16.gmra.mrb[0].mxu0 %v1150
  %v1401 = vpop.f32.mrb[0].mxu0
  %v1402 = vadd.f32 %v952, %v1401
  %v1403 = vpop.f32.mrb[0].mxu0
  %v1404 = vadd.f32 %v956, %v1403
  %v1405 = vpop.f32.mrb[0].mxu0
  %v1406 = vadd.f32 %v952, %v1405
  %v1407 = vpop.f32.mrb[0].mxu0
  %v1408 = vadd.f32 %v956, %v1407
  %1409 = vdwg.mxu0
  %1410 = vmatprep.subr.bf16.mxu0 %v1098
  %1411 = vmatpush1.bf16.msra.mxu0 %v1097
  %1412 = vmatprep.subr.bf16.mxu0 %v1114
  %1413 = vmatpush1.bf16.msra.mxu0 %v1113
  %1414 = vmatprep.subr.bf16.mxu0 0
  %1415 = vmatpush1.bf16.msra.mxu0 0
  %1416 = vmatprep.subr.bf16.mxu0 0
  %1417 = vmatpush1.bf16.msra.mxu0 0
  %1418 = vmatprep.subr.bf16.mxu0 0
  %1419 = vmatpush1.bf16.msra.mxu0 0
  %1420 = vmatprep.subr.bf16.mxu0 0
  %1421 = vmatpush1.bf16.msra.mxu0 0
  %1422 = vmatprep.subr.bf16.mxu0 0
  %1423 = vmatpush1.bf16.msra.mxu0 0
  %1424 = vmatprep.subr.bf16.mxu0 0
  %1425 = vmatpush1.bf16.msra.mxu0 0
  %1426 = vmatprep.subr.bf16.mxu0 0
  %1427 = vmatpush1.bf16.msra.mxu0 0
  %1428 = vmatprep.subr.bf16.mxu0 0
  %1429 = vmatpush1.bf16.msra.mxu0 0
  %1430 = vmatprep.subr.bf16.mxu0 0
  %1431 = vmatpush1.bf16.msra.mxu0 0
  %1432 = vmatprep.subr.bf16.mxu0 0
  %1433 = vmatpush1.bf16.msra.mxu0 0
  %1434 = vmatprep.subr.bf16.mxu0 0
  %1435 = vmatpush1.bf16.msra.mxu0 0
  %1436 = vmatprep.subr.bf16.mxu0 0
  %1437 = vmatpush1.bf16.msra.mxu0 0
  %1438 = vmatprep.subr.bf16.mxu0 0
  %1439 = vmatpush1.bf16.msra.mxu0 0
  %1440 = vmatprep.subr.bf16.mxu0 0
  %1441 = vmatpush1.bf16.msra.mxu0 0
  %1442 = vmatprep.mubr.bf16.mxu0 0
  %1443 = vmatmul.mubr.bf16.gmra.mrb[0].mxu0 %v1150
  %v1444 = vpop.f32.mrb[0].mxu0
  %v1445 = vadd.f32 %v960, %v1444
  %v1446 = vpop.f32.mrb[0].mxu0
  %v1447 = vadd.f32 %v964, %v1446
  %v1448 = vpop.f32.mrb[0].mxu0
  %v1449 = vadd.f32 %v960, %v1448
  %v1450 = vpop.f32.mrb[0].mxu0
  %v1451 = vadd.f32 %v964, %v1450
  %1452 = vdwg.mxu0
  %1453 = vmatprep.subr.bf16.mxu0 %v1100
  %1454 = vmatpush1.bf16.msra.mxu0 %v1099
  %1455 = vmatprep.subr.bf16.mxu0 %v1116
  %1456 = vmatpush1.bf16.msra.mxu0 %v1115
  %1457 = vmatprep.subr.bf16.mxu0 0
  %1458 = vmatpush1.bf16.msra.mxu0 0
  %1459 = vmatprep.subr.bf16.mxu0 0
  %1460 = vmatpush1.bf16.msra.mxu0 0
  %1461 = vmatprep.subr.bf16.mxu0 0
  %1462 = vmatpush1.bf16.msra.mxu0 0
  %1463 = vmatprep.subr.bf16.mxu0 0
  %1464 = vmatpush1.bf16.msra.mxu0 0
  %1465 = vmatprep.subr.bf16.mxu0 0
  %1466 = vmatpush1.bf16.msra.mxu0 0
  %1467 = vmatprep.subr.bf16.mxu0 0
  %1468 = vmatpush1.bf16.msra.mxu0 0
  %1469 = vmatprep.subr.bf16.mxu0 0
  %1470 = vmatpush1.bf16.msra.mxu0 0
  %1471 = vmatprep.subr.bf16.mxu0 0
  %1472 = vmatpush1.bf16.msra.mxu0 0
  %1473 = vmatprep.subr.bf16.mxu0 0
  %1474 = vmatpush1.bf16.msra.mxu0 0
  %1475 = vmatprep.subr.bf16.mxu0 0
  %1476 = vmatpush1.bf16.msra.mxu0 0
  %1477 = vmatprep.subr.bf16.mxu0 0
  %1478 = vmatpush1.bf16.msra.mxu0 0
  %1479 = vmatprep.subr.bf16.mxu0 0
  %1480 = vmatpush1.bf16.msra.mxu0 0
  %1481 = vmatprep.subr.bf16.mxu0 0
  %1482 = vmatpush1.bf16.msra.mxu0 0
  %1483 = vmatprep.subr.bf16.mxu0 0
  %1484 = vmatpush1.bf16.msra.mxu0 0
  %1485 = vmatprep.mubr.bf16.mxu0 0
  %1486 = vmatmul.mubr.bf16.gmra.mrb[0].mxu0 %v1150
  %v1487 = vpop.f32.mrb[0].mxu0
  %v1488 = vadd.f32 %v968, %v1487
  %v1489 = vpop.f32.mrb[0].mxu0
  %v1490 = vadd.f32 %v972, %v1489
  %v1491 = vpop.f32.mrb[0].mxu0
  %v1492 = vadd.f32 %v968, %v1491
  %v1493 = vpop.f32.mrb[0].mxu0
  %v1494 = vadd.f32 %v972, %v1493
  %1495 = vdwg.mxu0
  %v1496 = vmax.f32 %v1187, 0.0
  %v1497 = vmax.f32 %v1189, 0.0
  %v1498 = vmax.f32 %v1230, 0.0
  %v1499 = vmax.f32 %v1232, 0.0
  %v1500 = vmax.f32 %v1273, 0.0
  %v1501 = vmax.f32 %v1275, 0.0
  %v1502 = vmax.f32 %v1316, 0.0
  %v1503 = vmax.f32 %v1318, 0.0
  %v1504 = vmax.f32 %v1359, 0.0
  %v1505 = vmax.f32 %v1361, 0.0
  %v1506 = vmax.f32 %v1402, 0.0
  %v1507 = vmax.f32 %v1404, 0.0
  %v1508 = vmax.f32 %v1445, 0.0
  %v1509 = vmax.f32 %v1447, 0.0
  %v1510 = vmax.f32 %v1488, 0.0
  %v1511 = vmax.f32 %v1490, 0.0
  %v1512 = vmax.f32 %v1191, 0.0
  %v1513 = vmax.f32 %v1193, 0.0
  %v1514 = vmax.f32 %v1234, 0.0
  %v1515 = vmax.f32 %v1236, 0.0
  %v1516 = vmax.f32 %v1277, 0.0
  %v1517 = vmax.f32 %v1279, 0.0
  %v1518 = vmax.f32 %v1320, 0.0
  %v1519 = vmax.f32 %v1322, 0.0
  %v1520 = vmax.f32 %v1363, 0.0
  %v1521 = vmax.f32 %v1365, 0.0
  %v1522 = vmax.f32 %v1406, 0.0
  %v1523 = vmax.f32 %v1408, 0.0
  %v1524 = vmax.f32 %v1449, 0.0
  %v1525 = vmax.f32 %v1451, 0.0
  %v1526 = vmax.f32 %v1492, 0.0
  %v1527 = vmax.f32 %v1494, 0.0
  %v1528 = vpack.c.bf16 %v1512, %v1496
  %v1529 = vpack.c.bf16 %v1513, %v1497
  %v1530 = vpack.c.bf16 %v1514, %v1498
  %v1531 = vpack.c.bf16 %v1515, %v1499
  %v1532 = vpack.c.bf16 %v1516, %v1500
  %v1533 = vpack.c.bf16 %v1517, %v1501
  %v1534 = vpack.c.bf16 %v1518, %v1502
  %v1535 = vpack.c.bf16 %v1519, %v1503
  %v1536 = vpack.c.bf16 %v1520, %v1504
  %v1537 = vpack.c.bf16 %v1521, %v1505
  %v1538 = vpack.c.bf16 %v1522, %v1506
  %v1539 = vpack.c.bf16 %v1523, %v1507
  %v1540 = vpack.c.bf16 %v1524, %v1508
  %v1541 = vpack.c.bf16 %v1525, %v1509
  %v1542 = vpack.c.bf16 %v1526, %v1510
  %v1543 = vpack.c.bf16 %v1527, %v1511
  %v1544 = vld [vmem:[%s21] sm:$0xf]
  %v1545 = vld [vmem:[%s21 + $0x4] sm:$0xf]
  %v1546 = vld [vmem:[%s21 + $0x8] sm:$0xf]
  %v1547 = vld [vmem:[%s21 + $0xc] sm:$0xf]
  %v1548 = vld [vmem:[%s21 + $0x10] sm:$0xf]
  %v1549 = vld [vmem:[%s21 + $0x14] sm:$0xf]
  %v1550 = vld [vmem:[%s21 + $0x18] sm:$0xf]
  %v1551 = vld [vmem:[%s21 + $0x1c] sm:$0xf]
  %v1552 = vld [vmem:[%s21 + $0x20] sm:$0xf]
  %v1553 = vld [vmem:[%s21 + $0x24] sm:$0xf]
  %v1554 = vld [vmem:[%s21 + $0x28] sm:$0xf]
  %v1555 = vld [vmem:[%s21 + $0x2c] sm:$0xf]
  %v1556 = vld [vmem:[%s21 + $0x30] sm:$0xf]
  %v1557 = vld [vmem:[%s21 + $0x34] sm:$0xf]
  %v1558 = vld [vmem:[%s21 + $0x38] sm:$0xf]
  %v1559 = vld [vmem:[%s21 + $0x3c] sm:$0xf]
  %v1560 = vld [vmem:[%s21 + $0x40] sm:$0xf]
  %v1561 = vld [vmem:[%s21 + $0x44] sm:$0xf]
  %v1562 = vld [vmem:[%s21 + $0x48] sm:$0xf]
  %v1563 = vld [vmem:[%s21 + $0x4c] sm:$0xf]
  %v1564 = vld [vmem:[%s21 + $0x50] sm:$0xf]
  %v1565 = vld [vmem:[%s21 + $0x54] sm:$0xf]
  %v1566 = vld [vmem:[%s21 + $0x58] sm:$0xf]
  %v1567 = vld [vmem:[%s21 + $0x5c] sm:$0xf]
  %v1568 = vld [vmem:[%s21 + $0x60] sm:$0xf]
  %v1569 = vld [vmem:[%s21 + $0x64] sm:$0xf]
  %v1570 = vld [vmem:[%s21 + $0x68] sm:$0xf]
  %v1571 = vld [vmem:[%s21 + $0x6c] sm:$0xf]
  %v1572 = vld [vmem:[%s21 + $0x70] sm:$0xf]
  %v1573 = vld [vmem:[%s21 + $0x74] sm:$0xf]
  %v1574 = vld [vmem:[%s21 + $0x78] sm:$0xf]
  %v1575 = vld [vmem:[%s21 + $0x7c] sm:$0xf]
  %v1576 = vld [vmem:[%s21 + $0x80] sm:$0xf]
  %v1577 = vld [vmem:[%s21 + $0x84] sm:$0xf]
  %v1578 = vld [vmem:[%s21 + $0x88] sm:$0xf]
  %v1579 = vld [vmem:[%s21 + $0x8c] sm:$0xf]
  %v1580 = vld [vmem:[%s21 + $0x90] sm:$0xf]
  %v1581 = vld [vmem:[%s21 + $0x94] sm:$0xf]
  %v1582 = vld [vmem:[%s21 + $0x98] sm:$0xf]
  %v1583 = vld [vmem:[%s21 + $0x9c] sm:$0xf]
  %v1584 = vld [vmem:[%s21 + $0xa0] sm:$0xf]
  %v1585 = vld [vmem:[%s21 + $0xa4] sm:$0xf]
  %v1586 = vld [vmem:[%s21 + $0xa8] sm:$0xf]
  %v1587 = vld [vmem:[%s21 + $0xac] sm:$0xf]
  %v1588 = vld [vmem:[%s21 + $0xb0] sm:$0xf]
  %v1589 = vld [vmem:[%s21 + $0xb4] sm:$0xf]
  %v1590 = vld [vmem:[%s21 + $0xb8] sm:$0xf]
  %v1591 = vld [vmem:[%s21 + $0xbc] sm:$0xf]
  %v1592 = vld [vmem:[%s21 + $0xc0] sm:$0xf]
  %v1593 = vld [vmem:[%s21 + $0xc4] sm:$0xf]
  %v1594 = vld [vmem:[%s21 + $0xc8] sm:$0xf]
  %v1595 = vld [vmem:[%s21 + $0xcc] sm:$0xf]
  %v1596 = vld [vmem:[%s21 + $0xd0] sm:$0xf]
  %v1597 = vld [vmem:[%s21 + $0xd4] sm:$0xf]
  %v1598 = vld [vmem:[%s21 + $0xd8] sm:$0xf]
  %v1599 = vld [vmem:[%s21 + $0xdc] sm:$0xf]
  %v1600 = vld [vmem:[%s21 + $0xe0] sm:$0xf]
  %v1601 = vld [vmem:[%s21 + $0xe4] sm:$0xf]
  %v1602 = vld [vmem:[%s21 + $0xe8] sm:$0xf]
  %v1603 = vld [vmem:[%s21 + $0xec] sm:$0xf]
  %v1604 = vld [vmem:[%s21 + $0xf0] sm:$0xf]
  %v1605 = vld [vmem:[%s21 + $0xf4] sm:$0xf]
  %v1606 = vld [vmem:[%s21 + $0xf8] sm:$0xf]
  %v1607 = vld [vmem:[%s21 + $0xfc] sm:$0xf]
  %v1608 = vld [vmem:[%s21 + $0x100] sm:$0xf]
  %v1609 = vld [vmem:[%s21 + $0x104] sm:$0xf]
  %v1610 = vld [vmem:[%s21 + $0x108] sm:$0xf]
  %v1611 = vld [vmem:[%s21 + $0x10c] sm:$0xf]
  %v1612 = vld [vmem:[%s21 + $0x110] sm:$0xf]
  %v1613 = vld [vmem:[%s21 + $0x114] sm:$0xf]
  %v1614 = vld [vmem:[%s21 + $0x118] sm:$0xf]
  %v1615 = vld [vmem:[%s21 + $0x11c] sm:$0xf]
  %v1616 = vld [vmem:[%s21 + $0x120] sm:$0xf]
  %v1617 = vld [vmem:[%s21 + $0x124] sm:$0xf]
  %v1618 = vld [vmem:[%s21 + $0x128] sm:$0xf]
  %v1619 = vld [vmem:[%s21 + $0x12c] sm:$0xf]
  %v1620 = vld [vmem:[%s21 + $0x130] sm:$0xf]
  %v1621 = vld [vmem:[%s21 + $0x134] sm:$0xf]
  %v1622 = vld [vmem:[%s21 + $0x138] sm:$0xf]
  %v1623 = vld [vmem:[%s21 + $0x13c] sm:$0xf]
  %v1624 = vld [vmem:[%s21 + $0x140] sm:$0xf]
  %v1625 = vld [vmem:[%s21 + $0x144] sm:$0xf]
  %v1626 = vld [vmem:[%s21 + $0x148] sm:$0xf]
  %v1627 = vld [vmem:[%s21 + $0x14c] sm:$0xf]
  %v1628 = vld [vmem:[%s21 + $0x150] sm:$0xf]
  %v1629 = vld [vmem:[%s21 + $0x154] sm:$0xf]
  %v1630 = vld [vmem:[%s21 + $0x158] sm:$0xf]
  %v1631 = vld [vmem:[%s21 + $0x15c] sm:$0xf]
  %v1632 = vld [vmem:[%s21 + $0x160] sm:$0xf]
  %v1633 = vld [vmem:[%s21 + $0x164] sm:$0xf]
  %v1634 = vld [vmem:[%s21 + $0x168] sm:$0xf]
  %v1635 = vld [vmem:[%s21 + $0x16c] sm:$0xf]
  %v1636 = vld [vmem:[%s21 + $0x170] sm:$0xf]
  %v1637 = vld [vmem:[%s21 + $0x174] sm:$0xf]
  %v1638 = vld [vmem:[%s21 + $0x178] sm:$0xf]
  %v1639 = vld [vmem:[%s21 + $0x17c] sm:$0xf]
  %v1640 = vld [vmem:[%s21 + $0x180] sm:$0xf]
  %v1641 = vld [vmem:[%s21 + $0x184] sm:$0xf]
  %v1642 = vld [vmem:[%s21 + $0x188] sm:$0xf]
  %v1643 = vld [vmem:[%s21 + $0x18c] sm:$0xf]
  %v1644 = vld [vmem:[%s21 + $0x190] sm:$0xf]
  %v1645 = vld [vmem:[%s21 + $0x194] sm:$0xf]
  %v1646 = vld [vmem:[%s21 + $0x198] sm:$0xf]
  %v1647 = vld [vmem:[%s21 + $0x19c] sm:$0xf]
  %v1648 = vld [vmem:[%s21 + $0x1a0] sm:$0xf]
  %v1649 = vld [vmem:[%s21 + $0x1a4] sm:$0xf]
  %v1650 = vld [vmem:[%s21 + $0x1a8] sm:$0xf]
  %v1651 = vld [vmem:[%s21 + $0x1ac] sm:$0xf]
  %v1652 = vld [vmem:[%s21 + $0x1b0] sm:$0xf]
  %v1653 = vld [vmem:[%s21 + $0x1b4] sm:$0xf]
  %v1654 = vld [vmem:[%s21 + $0x1b8] sm:$0xf]
  %v1655 = vld [vmem:[%s21 + $0x1bc] sm:$0xf]
  %v1656 = vld [vmem:[%s21 + $0x1c0] sm:$0xf]
  %v1657 = vld [vmem:[%s21 + $0x1c4] sm:$0xf]
  %v1658 = vld [vmem:[%s21 + $0x1c8] sm:$0xf]
  %v1659 = vld [vmem:[%s21 + $0x1cc] sm:$0xf]
  %v1660 = vld [vmem:[%s21 + $0x1d0] sm:$0xf]
  %v1661 = vld [vmem:[%s21 + $0x1d4] sm:$0xf]
  %v1662 = vld [vmem:[%s21 + $0x1d8] sm:$0xf]
  %v1663 = vld [vmem:[%s21 + $0x1dc] sm:$0xf]
  %v1664 = vld [vmem:[%s21 + $0x1e0] sm:$0xf]
  %v1665 = vld [vmem:[%s21 + $0x1e4] sm:$0xf]
  %v1666 = vld [vmem:[%s21 + $0x1e8] sm:$0xf]
  %v1667 = vld [vmem:[%s21 + $0x1ec] sm:$0xf]
  %v1668 = vld [vmem:[%s21 + $0x1f0] sm:$0xf]
  %v1669 = vld [vmem:[%s21 + $0x1f4] sm:$0xf]
  %v1670 = vld [vmem:[%s21 + $0x1f8] sm:$0xf]
  %v1671 = vld [vmem:[%s21 + $0x1fc] sm:$0xf]
  %v1672 = vld [vmem:[%s21 + $0x200] sm:$0xf]
  %v1673 = vld [vmem:[%s21 + $0x204] sm:$0xf]
  %v1674 = vld [vmem:[%s21 + $0x208] sm:$0xf]
  %v1675 = vld [vmem:[%s21 + $0x20c] sm:$0xf]
  %v1676 = vld [vmem:[%s21 + $0x210] sm:$0xf]
  %v1677 = vld [vmem:[%s21 + $0x214] sm:$0xf]
  %v1678 = vld [vmem:[%s21 + $0x218] sm:$0xf]
  %v1679 = vld [vmem:[%s21 + $0x21c] sm:$0xf]
  %v1680 = vld [vmem:[%s21 + $0x220] sm:$0xf]
  %v1681 = vld [vmem:[%s21 + $0x224] sm:$0xf]
  %v1682 = vld [vmem:[%s21 + $0x228] sm:$0xf]
  %v1683 = vld [vmem:[%s21 + $0x22c] sm:$0xf]
  %v1684 = vld [vmem:[%s21 + $0x230] sm:$0xf]
  %v1685 = vld [vmem:[%s21 + $0x234] sm:$0xf]
  %v1686 = vld [vmem:[%s21 + $0x238] sm:$0xf]
  %v1687 = vld [vmem:[%s21 + $0x23c] sm:$0xf]
  %v1688 = vld [vmem:[%s21 + $0x240] sm:$0xf]
  %v1689 = vld [vmem:[%s21 + $0x244] sm:$0xf]
  %v1690 = vld [vmem:[%s21 + $0x248] sm:$0xf]
  %v1691 = vld [vmem:[%s21 + $0x24c] sm:$0xf]
  %v1692 = vld [vmem:[%s21 + $0x250] sm:$0xf]
  %v1693 = vld [vmem:[%s21 + $0x254] sm:$0xf]
  %v1694 = vld [vmem:[%s21 + $0x258] sm:$0xf]
  %v1695 = vld [vmem:[%s21 + $0x25c] sm:$0xf]
  %v1696 = vld [vmem:[%s21 + $0x260] sm:$0xf]
  %v1697 = vld [vmem:[%s21 + $0x264] sm:$0xf]
  %v1698 = vld [vmem:[%s21 + $0x268] sm:$0xf]
  %v1699 = vld [vmem:[%s21 + $0x26c] sm:$0xf]
  %v1700 = vld [vmem:[%s21 + $0x270] sm:$0xf]
  %v1701 = vld [vmem:[%s21 + $0x274] sm:$0xf]
  %v1702 = vld [vmem:[%s21 + $0x278] sm:$0xf]
  %v1703 = vld [vmem:[%s21 + $0x27c] sm:$0xf]
  %v1704 = vld [vmem:[%s21 + $0x280] sm:$0xf]
  %v1705 = vld [vmem:[%s21 + $0x284] sm:$0xf]
  %v1706 = vld [vmem:[%s21 + $0x288] sm:$0xf]
  %v1707 = vld [vmem:[%s21 + $0x28c] sm:$0xf]
  %v1708 = vld [vmem:[%s21 + $0x290] sm:$0xf]
  %v1709 = vld [vmem:[%s21 + $0x294] sm:$0xf]
  %v1710 = vld [vmem:[%s21 + $0x298] sm:$0xf]
  %v1711 = vld [vmem:[%s21 + $0x29c] sm:$0xf]
  %v1712 = vld [vmem:[%s21 + $0x2a0] sm:$0xf]
  %v1713 = vld [vmem:[%s21 + $0x2a4] sm:$0xf]
  %v1714 = vld [vmem:[%s21 + $0x2a8] sm:$0xf]
  %v1715 = vld [vmem:[%s21 + $0x2ac] sm:$0xf]
  %v1716 = vld [vmem:[%s21 + $0x2b0] sm:$0xf]
  %v1717 = vld [vmem:[%s21 + $0x2b4] sm:$0xf]
  %v1718 = vld [vmem:[%s21 + $0x2b8] sm:$0xf]
  %v1719 = vld [vmem:[%s21 + $0x2bc] sm:$0xf]
  %v1720 = vld [vmem:[%s21 + $0x2c0] sm:$0xf]
  %v1721 = vld [vmem:[%s21 + $0x2c4] sm:$0xf]
  %v1722 = vld [vmem:[%s21 + $0x2c8] sm:$0xf]
  %v1723 = vld [vmem:[%s21 + $0x2cc] sm:$0xf]
  %v1724 = vld [vmem:[%s21 + $0x2d0] sm:$0xf]
  %v1725 = vld [vmem:[%s21 + $0x2d4] sm:$0xf]
  %v1726 = vld [vmem:[%s21 + $0x2d8] sm:$0xf]
  %v1727 = vld [vmem:[%s21 + $0x2dc] sm:$0xf]
  %v1728 = vld [vmem:[%s21 + $0x2e0] sm:$0xf]
  %v1729 = vld [vmem:[%s21 + $0x2e4] sm:$0xf]
  %v1730 = vld [vmem:[%s21 + $0x2e8] sm:$0xf]
  %v1731 = vld [vmem:[%s21 + $0x2ec] sm:$0xf]
  %v1732 = vld [vmem:[%s21 + $0x2f0] sm:$0xf]
  %v1733 = vld [vmem:[%s21 + $0x2f4] sm:$0xf]
  %v1734 = vld [vmem:[%s21 + $0x2f8] sm:$0xf]
  %v1735 = vld [vmem:[%s21 + $0x2fc] sm:$0xf]
  %v1736 = vld [vmem:[%s21 + $0x300] sm:$0xf]
  %v1737 = vld [vmem:[%s21 + $0x304] sm:$0xf]
  %v1738 = vld [vmem:[%s21 + $0x308] sm:$0xf]
  %v1739 = vld [vmem:[%s21 + $0x30c] sm:$0xf]
  %v1740 = vld [vmem:[%s21 + $0x310] sm:$0xf]
  %v1741 = vld [vmem:[%s21 + $0x314] sm:$0xf]
  %v1742 = vld [vmem:[%s21 + $0x318] sm:$0xf]
  %v1743 = vld [vmem:[%s21 + $0x31c] sm:$0xf]
  %v1744 = vld [vmem:[%s21 + $0x320] sm:$0xf]
  %v1745 = vld [vmem:[%s21 + $0x324] sm:$0xf]
  %v1746 = vld [vmem:[%s21 + $0x328] sm:$0xf]
  %v1747 = vld [vmem:[%s21 + $0x32c] sm:$0xf]
  %v1748 = vld [vmem:[%s21 + $0x330] sm:$0xf]
  %v1749 = vld [vmem:[%s21 + $0x334] sm:$0xf]
  %v1750 = vld [vmem:[%s21 + $0x338] sm:$0xf]
  %v1751 = vld [vmem:[%s21 + $0x33c] sm:$0xf]
  %v1752 = vld [vmem:[%s21 + $0x340] sm:$0xf]
  %v1753 = vld [vmem:[%s21 + $0x344] sm:$0xf]
  %v1754 = vld [vmem:[%s21 + $0x348] sm:$0xf]
  %v1755 = vld [vmem:[%s21 + $0x34c] sm:$0xf]
  %v1756 = vld [vmem:[%s21 + $0x350] sm:$0xf]
  %v1757 = vld [vmem:[%s21 + $0x354] sm:$0xf]
  %v1758 = vld [vmem:[%s21 + $0x358] sm:$0xf]
  %v1759 = vld [vmem:[%s21 + $0x35c] sm:$0xf]
  %v1760 = vld [vmem:[%s21 + $0x360] sm:$0xf]
  %v1761 = vld [vmem:[%s21 + $0x364] sm:$0xf]
  %v1762 = vld [vmem:[%s21 + $0x368] sm:$0xf]
  %v1763 = vld [vmem:[%s21 + $0x36c] sm:$0xf]
  %v1764 = vld [vmem:[%s21 + $0x370] sm:$0xf]
  %v1765 = vld [vmem:[%s21 + $0x374] sm:$0xf]
  %v1766 = vld [vmem:[%s21 + $0x378] sm:$0xf]
  %v1767 = vld [vmem:[%s21 + $0x37c] sm:$0xf]
  %v1768 = vld [vmem:[%s21 + $0x380] sm:$0xf]
  %v1769 = vld [vmem:[%s21 + $0x384] sm:$0xf]
  %v1770 = vld [vmem:[%s21 + $0x388] sm:$0xf]
  %v1771 = vld [vmem:[%s21 + $0x38c] sm:$0xf]
  %v1772 = vld [vmem:[%s21 + $0x390] sm:$0xf]
  %v1773 = vld [vmem:[%s21 + $0x394] sm:$0xf]
  %v1774 = vld [vmem:[%s21 + $0x398] sm:$0xf]
  %v1775 = vld [vmem:[%s21 + $0x39c] sm:$0xf]
  %v1776 = vld [vmem:[%s21 + $0x3a0] sm:$0xf]
  %v1777 = vld [vmem:[%s21 + $0x3a4] sm:$0xf]
  %v1778 = vld [vmem:[%s21 + $0x3a8] sm:$0xf]
  %v1779 = vld [vmem:[%s21 + $0x3ac] sm:$0xf]
  %v1780 = vld [vmem:[%s21 + $0x3b0] sm:$0xf]
  %v1781 = vld [vmem:[%s21 + $0x3b4] sm:$0xf]
  %v1782 = vld [vmem:[%s21 + $0x3b8] sm:$0xf]
  %v1783 = vld [vmem:[%s21 + $0x3bc] sm:$0xf]
  %v1784 = vld [vmem:[%s21 + $0x3c0] sm:$0xf]
  %v1785 = vld [vmem:[%s21 + $0x3c4] sm:$0xf]
  %v1786 = vld [vmem:[%s21 + $0x3c8] sm:$0xf]
  %v1787 = vld [vmem:[%s21 + $0x3cc] sm:$0xf]
  %v1788 = vld [vmem:[%s21 + $0x3d0] sm:$0xf]
  %v1789 = vld [vmem:[%s21 + $0x3d4] sm:$0xf]
  %v1790 = vld [vmem:[%s21 + $0x3d8] sm:$0xf]
  %v1791 = vld [vmem:[%s21 + $0x3dc] sm:$0xf]
  %v1792 = vld [vmem:[%s21 + $0x3e0] sm:$0xf]
  %v1793 = vld [vmem:[%s21 + $0x3e4] sm:$0xf]
  %v1794 = vld [vmem:[%s21 + $0x3e8] sm:$0xf]
  %v1795 = vld [vmem:[%s21 + $0x3ec] sm:$0xf]
  %v1796 = vld [vmem:[%s21 + $0x3f0] sm:$0xf]
  %v1797 = vld [vmem:[%s21 + $0x3f4] sm:$0xf]
  %v1798 = vld [vmem:[%s21 + $0x3f8] sm:$0xf]
  %v1799 = vld [vmem:[%s21 + $0x3fc] sm:$0xf]
  %v1800 = vld [vmem:[%s11] sm:$0x1]
  %v1802 = vlaneseq
  %v1803 = vshrl.u32 %v1802, 7
  %v1804 = vsub.s32 0, %v1803
  %v1805 = vrot.slane %v1800, %v1804
  %v2063 = vunpack.c.l.b16 %v1544
  %v2064 = vunpack.c.l.b16 %v1545
  %v2065 = vunpack.c.l.b16 %v1546
  %v2066 = vunpack.c.l.b16 %v1547
  %v2067 = vunpack.c.l.b16 %v1548
  %v2068 = vunpack.c.l.b16 %v1549
  %v2069 = vunpack.c.l.b16 %v1550
  %v2070 = vunpack.c.l.b16 %v1551
  %v2071 = vunpack.c.l.b16 %v1552
  %v2072 = vunpack.c.l.b16 %v1553
  %v2073 = vunpack.c.l.b16 %v1554
  %v2074 = vunpack.c.l.b16 %v1555
  %v2075 = vunpack.c.l.b16 %v1556
  %v2076 = vunpack.c.l.b16 %v1557
  %v2077 = vunpack.c.l.b16 %v1558
  %v2078 = vunpack.c.l.b16 %v1559
  %v2079 = vunpack.c.l.b16 %v1560
  %v2080 = vunpack.c.l.b16 %v1561
  %v2081 = vunpack.c.l.b16 %v1562
  %v2082 = vunpack.c.l.b16 %v1563
  %v2083 = vunpack.c.l.b16 %v1564
  %v2084 = vunpack.c.l.b16 %v1565
  %v2085 = vunpack.c.l.b16 %v1566
  %v2086 = vunpack.c.l.b16 %v1567
  %v2087 = vunpack.c.l.b16 %v1568
  %v2088 = vunpack.c.l.b16 %v1569
  %v2089 = vunpack.c.l.b16 %v1570
  %v2090 = vunpack.c.l.b16 %v1571
  %v2091 = vunpack.c.l.b16 %v1572
  %v2092 = vunpack.c.l.b16 %v1573
  %v2093 = vunpack.c.l.b16 %v1574
  %v2094 = vunpack.c.l.b16 %v1575
  %v2095 = vunpack.c.l.b16 %v1576
  %v2096 = vunpack.c.l.b16 %v1577
  %v2097 = vunpack.c.l.b16 %v1578
  %v2098 = vunpack.c.l.b16 %v1579
  %v2099 = vunpack.c.l.b16 %v1580
  %v2100 = vunpack.c.l.b16 %v1581
  %v2101 = vunpack.c.l.b16 %v1582
  %v2102 = vunpack.c.l.b16 %v1583
  %v2103 = vunpack.c.l.b16 %v1584
  %v2104 = vunpack.c.l.b16 %v1585
  %v2105 = vunpack.c.l.b16 %v1586
  %v2106 = vunpack.c.l.b16 %v1587
  %v2107 = vunpack.c.l.b16 %v1588
  %v2108 = vunpack.c.l.b16 %v1589
  %v2109 = vunpack.c.l.b16 %v1590
  %v2110 = vunpack.c.l.b16 %v1591
  %v2111 = vunpack.c.l.b16 %v1592
  %v2112 = vunpack.c.l.b16 %v1593
  %v2113 = vunpack.c.l.b16 %v1594
  %v2114 = vunpack.c.l.b16 %v1595
  %v2115 = vunpack.c.l.b16 %v1596
  %v2116 = vunpack.c.l.b16 %v1597
  %v2117 = vunpack.c.l.b16 %v1598
  %v2118 = vunpack.c.l.b16 %v1599
  %v2119 = vunpack.c.l.b16 %v1600
  %v2120 = vunpack.c.l.b16 %v1601
  %v2121 = vunpack.c.l.b16 %v1602
  %v2122 = vunpack.c.l.b16 %v1603
  %v2123 = vunpack.c.l.b16 %v1604
  %v2124 = vunpack.c.l.b16 %v1605
  %v2125 = vunpack.c.l.b16 %v1606
  %v2126 = vunpack.c.l.b16 %v1607
  %v2127 = vunpack.c.l.b16 %v1608
  %v2128 = vunpack.c.l.b16 %v1609
  %v2129 = vunpack.c.l.b16 %v1610
  %v2130 = vunpack.c.l.b16 %v1611
  %v2131 = vunpack.c.l.b16 %v1612
  %v2132 = vunpack.c.l.b16 %v1613
  %v2133 = vunpack.c.l.b16 %v1614
  %v2134 = vunpack.c.l.b16 %v1615
  %v2135 = vunpack.c.l.b16 %v1616
  %v2136 = vunpack.c.l.b16 %v1617
  %v2137 = vunpack.c.l.b16 %v1618
  %v2138 = vunpack.c.l.b16 %v1619
  %v2139 = vunpack.c.l.b16 %v1620
  %v2140 = vunpack.c.l.b16 %v1621
  %v2141 = vunpack.c.l.b16 %v1622
  %v2142 = vunpack.c.l.b16 %v1623
  %v2143 = vunpack.c.l.b16 %v1624
  %v2144 = vunpack.c.l.b16 %v1625
  %v2145 = vunpack.c.l.b16 %v1626
  %v2146 = vunpack.c.l.b16 %v1627
  %v2147 = vunpack.c.l.b16 %v1628
  %v2148 = vunpack.c.l.b16 %v1629
  %v2149 = vunpack.c.l.b16 %v1630
  %v2150 = vunpack.c.l.b16 %v1631
  %v2151 = vunpack.c.l.b16 %v1632
  %v2152 = vunpack.c.l.b16 %v1633
  %v2153 = vunpack.c.l.b16 %v1634
  %v2154 = vunpack.c.l.b16 %v1635
  %v2155 = vunpack.c.l.b16 %v1636
  %v2156 = vunpack.c.l.b16 %v1637
  %v2157 = vunpack.c.l.b16 %v1638
  %v2158 = vunpack.c.l.b16 %v1639
  %v2159 = vunpack.c.l.b16 %v1640
  %v2160 = vunpack.c.l.b16 %v1641
  %v2161 = vunpack.c.l.b16 %v1642
  %v2162 = vunpack.c.l.b16 %v1643
  %v2163 = vunpack.c.l.b16 %v1644
  %v2164 = vunpack.c.l.b16 %v1645
  %v2165 = vunpack.c.l.b16 %v1646
  %v2166 = vunpack.c.l.b16 %v1647
  %v2167 = vunpack.c.l.b16 %v1648
  %v2168 = vunpack.c.l.b16 %v1649
  %v2169 = vunpack.c.l.b16 %v1650
  %v2170 = vunpack.c.l.b16 %v1651
  %v2171 = vunpack.c.l.b16 %v1652
  %v2172 = vunpack.c.l.b16 %v1653
  %v2173 = vunpack.c.l.b16 %v1654
  %v2174 = vunpack.c.l.b16 %v1655
  %v2175 = vunpack.c.l.b16 %v1656
  %v2176 = vunpack.c.l.b16 %v1657
  %v2177 = vunpack.c.l.b16 %v1658
  %v2178 = vunpack.c.l.b16 %v1659
  %v2179 = vunpack.c.l.b16 %v1660
  %v2180 = vunpack.c.l.b16 %v1661
  %v2181 = vunpack.c.l.b16 %v1662
  %v2182 = vunpack.c.l.b16 %v1663
  %v2183 = vunpack.c.l.b16 %v1664
  %v2184 = vunpack.c.l.b16 %v1665
  %v2185 = vunpack.c.l.b16 %v1666
  %v2186 = vunpack.c.l.b16 %v1667
  %v2187 = vunpack.c.l.b16 %v1668
  %v2188 = vunpack.c.l.b16 %v1669
  %v2189 = vunpack.c.l.b16 %v1670
  %v2190 = vunpack.c.l.b16 %v1671
  %v2191 = vunpack.c.l.b16 %v1672
  %v2192 = vunpack.c.l.b16 %v1673
  %v2193 = vunpack.c.l.b16 %v1674
  %v2194 = vunpack.c.l.b16 %v1675
  %v2195 = vunpack.c.l.b16 %v1676
  %v2196 = vunpack.c.l.b16 %v1677
  %v2197 = vunpack.c.l.b16 %v1678
  %v2198 = vunpack.c.l.b16 %v1679
  %v2199 = vunpack.c.l.b16 %v1680
  %v2200 = vunpack.c.l.b16 %v1681
  %v2201 = vunpack.c.l.b16 %v1682
  %v2202 = vunpack.c.l.b16 %v1683
  %v2203 = vunpack.c.l.b16 %v1684
  %v2204 = vunpack.c.l.b16 %v1685
  %v2205 = vunpack.c.l.b16 %v1686
  %v2206 = vunpack.c.l.b16 %v1687
  %v2207 = vunpack.c.l.b16 %v1688
  %v2208 = vunpack.c.l.b16 %v1689
  %v2209 = vunpack.c.l.b16 %v1690
  %v2210 = vunpack.c.l.b16 %v1691
  %v2211 = vunpack.c.l.b16 %v1692
  %v2212 = vunpack.c.l.b16 %v1693
  %v2213 = vunpack.c.l.b16 %v1694
  %v2214 = vunpack.c.l.b16 %v1695
  %v2215 = vunpack.c.l.b16 %v1696
  %v2216 = vunpack.c.l.b16 %v1697
  %v2217 = vunpack.c.l.b16 %v1698
  %v2218 = vunpack.c.l.b16 %v1699
  %v2219 = vunpack.c.l.b16 %v1700
  %v2220 = vunpack.c.l.b16 %v1701
  %v2221 = vunpack.c.l.b16 %v1702
  %v2222 = vunpack.c.l.b16 %v1703
  %v2223 = vunpack.c.l.b16 %v1704
  %v2224 = vunpack.c.l.b16 %v1705
  %v2225 = vunpack.c.l.b16 %v1706
  %v2226 = vunpack.c.l.b16 %v1707
  %v2227 = vunpack.c.l.b16 %v1708
  %v2228 = vunpack.c.l.b16 %v1709
  %v2229 = vunpack.c.l.b16 %v1710
  %v2230 = vunpack.c.l.b16 %v1711
  %v2231 = vunpack.c.l.b16 %v1712
  %v2232 = vunpack.c.l.b16 %v1713
  %v2233 = vunpack.c.l.b16 %v1714
  %v2234 = vunpack.c.l.b16 %v1715
  %v2235 = vunpack.c.l.b16 %v1716
  %v2236 = vunpack.c.l.b16 %v1717
  %v2237 = vunpack.c.l.b16 %v1718
  %v2238 = vunpack.c.l.b16 %v1719
  %v2239 = vunpack.c.l.b16 %v1720
  %v2240 = vunpack.c.l.b16 %v1721
  %v2241 = vunpack.c.l.b16 %v1722
  %v2242 = vunpack.c.l.b16 %v1723
  %v2243 = vunpack.c.l.b16 %v1724
  %v2244 = vunpack.c.l.b16 %v1725
  %v2245 = vunpack.c.l.b16 %v1726
  %v2246 = vunpack.c.l.b16 %v1727
  %v2247 = vunpack.c.l.b16 %v1728
  %v2248 = vunpack.c.l.b16 %v1729
  %v2249 = vunpack.c.l.b16 %v1730
  %v2250 = vunpack.c.l.b16 %v1731
  %v2251 = vunpack.c.l.b16 %v1732
  %v2252 = vunpack.c.l.b16 %v1733
  %v2253 = vunpack.c.l.b16 %v1734
  %v2254 = vunpack.c.l.b16 %v1735
  %v2255 = vunpack.c.l.b16 %v1736
  %v2256 = vunpack.c.l.b16 %v1737
  %v2257 = vunpack.c.l.b16 %v1738
  %v2258 = vunpack.c.l.b16 %v1739
  %v2259 = vunpack.c.l.b16 %v1740
  %v2260 = vunpack.c.l.b16 %v1741
  %v2261 = vunpack.c.l.b16 %v1742
  %v2262 = vunpack.c.l.b16 %v1743
  %v2263 = vunpack.c.l.b16 %v1744
  %v2264 = vunpack.c.l.b16 %v1745
  %v2265 = vunpack.c.l.b16 %v1746
  %v2266 = vunpack.c.l.b16 %v1747
  %v2267 = vunpack.c.l.b16 %v1748
  %v2268 = vunpack.c.l.b16 %v1749
  %v2269 = vunpack.c.l.b16 %v1750
  %v2270 = vunpack.c.l.b16 %v1751
  %v2271 = vunpack.c.l.b16 %v1752
  %v2272 = vunpack.c.l.b16 %v1753
  %v2273 = vunpack.c.l.b16 %v1754
  %v2274 = vunpack.c.l.b16 %v1755
  %v2275 = vunpack.c.l.b16 %v1756
  %v2276 = vunpack.c.l.b16 %v1757
  %v2277 = vunpack.c.l.b16 %v1758
  %v2278 = vunpack.c.l.b16 %v1759
  %v2279 = vunpack.c.l.b16 %v1760
  %v2280 = vunpack.c.l.b16 %v1761
  %v2281 = vunpack.c.l.b16 %v1762
  %v2282 = vunpack.c.l.b16 %v1763
  %v2283 = vunpack.c.l.b16 %v1764
  %v2284 = vunpack.c.l.b16 %v1765
  %v2285 = vunpack.c.l.b16 %v1766
  %v2286 = vunpack.c.l.b16 %v1767
  %v2287 = vunpack.c.l.b16 %v1768
  %v2288 = vunpack.c.l.b16 %v1769
  %v2289 = vunpack.c.l.b16 %v1770
  %v2290 = vunpack.c.l.b16 %v1771
  %v2291 = vunpack.c.l.b16 %v1772
  %v2292 = vunpack.c.l.b16 %v1773
  %v2293 = vunpack.c.l.b16 %v1774
  %v2294 = vunpack.c.l.b16 %v1775
  %v2295 = vunpack.c.l.b16 %v1776
  %v2296 = vunpack.c.l.b16 %v1777
  %v2297 = vunpack.c.l.b16 %v1778
  %v2298 = vunpack.c.l.b16 %v1779
  %v2299 = vunpack.c.l.b16 %v1780
  %v2300 = vunpack.c.l.b16 %v1781
  %v2301 = vunpack.c.l.b16 %v1782
  %v2302 = vunpack.c.l.b16 %v1783
  %v2303 = vunpack.c.l.b16 %v1784
  %v2304 = vunpack.c.l.b16 %v1785
  %v2305 = vunpack.c.l.b16 %v1786
  %v2306 = vunpack.c.l.b16 %v1787
  %v2307 = vunpack.c.l.b16 %v1788
  %v2308 = vunpack.c.l.b16 %v1789
  %v2309 = vunpack.c.l.b16 %v1790
  %v2310 = vunpack.c.l.b16 %v1791
  %v2311 = vunpack.c.l.b16 %v1792
  %v2312 = vunpack.c.l.b16 %v1793
  %v2313 = vunpack.c.l.b16 %v1794
  %v2314 = vunpack.c.l.b16 %v1795
  %v2315 = vunpack.c.l.b16 %v1796
  %v2316 = vunpack.c.l.b16 %v1797
  %v2317 = vunpack.c.l.b16 %v1798
  %v2318 = vunpack.c.l.b16 %v1799
  %v2319 = vpack.c.b16 %v2064, %v2063
  %v2320 = vpack.c.b16 %v2066, %v2065
  %v2321 = vpack.c.b16 %v2068, %v2067
  %v2322 = vpack.c.b16 %v2070, %v2069
  %v2323 = vpack.c.b16 %v2072, %v2071
  %v2324 = vpack.c.b16 %v2074, %v2073
  %v2325 = vpack.c.b16 %v2076, %v2075
  %v2326 = vpack.c.b16 %v2078, %v2077
  %v2327 = vpack.c.b16 %v2080, %v2079
  %v2328 = vpack.c.b16 %v2082, %v2081
  %v2329 = vpack.c.b16 %v2084, %v2083
  %v2330 = vpack.c.b16 %v2086, %v2085
  %v2331 = vpack.c.b16 %v2088, %v2087
  %v2332 = vpack.c.b16 %v2090, %v2089
  %v2333 = vpack.c.b16 %v2092, %v2091
  %v2334 = vpack.c.b16 %v2094, %v2093
  %v2335 = vpack.c.b16 %v2096, %v2095
  %v2336 = vpack.c.b16 %v2098, %v2097
  %v2337 = vpack.c.b16 %v2100, %v2099
  %v2338 = vpack.c.b16 %v2102, %v2101
  %v2339 = vpack.c.b16 %v2104, %v2103
  %v2340 = vpack.c.b16 %v2106, %v2105
  %v2341 = vpack.c.b16 %v2108, %v2107
  %v2342 = vpack.c.b16 %v2110, %v2109
  %v2343 = vpack.c.b16 %v2112, %v2111
  %v2344 = vpack.c.b16 %v2114, %v2113
  %v2345 = vpack.c.b16 %v2116, %v2115
  %v2346 = vpack.c.b16 %v2118, %v2117
  %v2347 = vpack.c.b16 %v2120, %v2119
  %v2348 = vpack.c.b16 %v2122, %v2121
  %v2349 = vpack.c.b16 %v2124, %v2123
  %v2350 = vpack.c.b16 %v2126, %v2125
  %v2351 = vpack.c.b16 %v2128, %v2127
  %v2352 = vpack.c.b16 %v2130, %v2129
  %v2353 = vpack.c.b16 %v2132, %v2131
  %v2354 = vpack.c.b16 %v2134, %v2133
  %v2355 = vpack.c.b16 %v2136, %v2135
  %v2356 = vpack.c.b16 %v2138, %v2137
  %v2357 = vpack.c.b16 %v2140, %v2139
  %v2358 = vpack.c.b16 %v2142, %v2141
  %v2359 = vpack.c.b16 %v2144, %v2143
  %v2360 = vpack.c.b16 %v2146, %v2145
  %v2361 = vpack.c.b16 %v2148, %v2147
  %v2362 = vpack.c.b16 %v2150, %v2149
  %v2363 = vpack.c.b16 %v2152, %v2151
  %v2364 = vpack.c.b16 %v2154, %v2153
  %v2365 = vpack.c.b16 %v2156, %v2155
  %v2366 = vpack.c.b16 %v2158, %v2157
  %v2367 = vpack.c.b16 %v2160, %v2159
  %v2368 = vpack.c.b16 %v2162, %v2161
  %v2369 = vpack.c.b16 %v2164, %v2163
  %v2370 = vpack.c.b16 %v2166, %v2165
  %v2371 = vpack.c.b16 %v2168, %v2167
  %v2372 = vpack.c.b16 %v2170, %v2169
  %v2373 = vpack.c.b16 %v2172, %v2171
  %v2374 = vpack.c.b16 %v2174, %v2173
  %v2375 = vpack.c.b16 %v2176, %v2175
  %v2376 = vpack.c.b16 %v2178, %v2177
  %v2377 = vpack.c.b16 %v2180, %v2179
  %v2378 = vpack.c.b16 %v2182, %v2181
  %v2379 = vpack.c.b16 %v2184, %v2183
  %v2380 = vpack.c.b16 %v2186, %v2185
  %v2381 = vpack.c.b16 %v2188, %v2187
  %v2382 = vpack.c.b16 %v2190, %v2189
  %v2383 = vpack.c.b16 %v2192, %v2191
  %v2384 = vpack.c.b16 %v2194, %v2193
  %v2385 = vpack.c.b16 %v2196, %v2195
  %v2386 = vpack.c.b16 %v2198, %v2197
  %v2387 = vpack.c.b16 %v2200, %v2199
  %v2388 = vpack.c.b16 %v2202, %v2201
  %v2389 = vpack.c.b16 %v2204, %v2203
  %v2390 = vpack.c.b16 %v2206, %v2205
  %v2391 = vpack.c.b16 %v2208, %v2207
  %v2392 = vpack.c.b16 %v2210, %v2209
  %v2393 = vpack.c.b16 %v2212, %v2211
  %v2394 = vpack.c.b16 %v2214, %v2213
  %v2395 = vpack.c.b16 %v2216, %v2215
  %v2396 = vpack.c.b16 %v2218, %v2217
  %v2397 = vpack.c.b16 %v2220, %v2219
  %v2398 = vpack.c.b16 %v2222, %v2221
  %v2399 = vpack.c.b16 %v2224, %v2223
  %v2400 = vpack.c.b16 %v2226, %v2225
  %v2401 = vpack.c.b16 %v2228, %v2227
  %v2402 = vpack.c.b16 %v2230, %v2229
  %v2403 = vpack.c.b16 %v2232, %v2231
  %v2404 = vpack.c.b16 %v2234, %v2233
  %v2405 = vpack.c.b16 %v2236, %v2235
  %v2406 = vpack.c.b16 %v2238, %v2237
  %v2407 = vpack.c.b16 %v2240, %v2239
  %v2408 = vpack.c.b16 %v2242, %v2241
  %v2409 = vpack.c.b16 %v2244, %v2243
  %v2410 = vpack.c.b16 %v2246, %v2245
  %v2411 = vpack.c.b16 %v2248, %v2247
  %v2412 = vpack.c.b16 %v2250, %v2249
  %v2413 = vpack.c.b16 %v2252, %v2251
  %v2414 = vpack.c.b16 %v2254, %v2253
  %v2415 = vpack.c.b16 %v2256, %v2255
  %v2416 = vpack.c.b16 %v2258, %v2257
  %v2417 = vpack.c.b16 %v2260, %v2259
  %v2418 = vpack.c.b16 %v2262, %v2261
  %v2419 = vpack.c.b16 %v2264, %v2263
  %v2420 = vpack.c.b16 %v2266, %v2265
  %v2421 = vpack.c.b16 %v2268, %v2267
  %v2422 = vpack.c.b16 %v2270, %v2269
  %v2423 = vpack.c.b16 %v2272, %v2271
  %v2424 = vpack.c.b16 %v2274, %v2273
  %v2425 = vpack.c.b16 %v2276, %v2275
  %v2426 = vpack.c.b16 %v2278, %v2277
  %v2427 = vpack.c.b16 %v2280, %v2279
  %v2428 = vpack.c.b16 %v2282, %v2281
  %v2429 = vpack.c.b16 %v2284, %v2283
  %v2430 = vpack.c.b16 %v2286, %v2285
  %v2431 = vpack.c.b16 %v2288, %v2287
  %v2432 = vpack.c.b16 %v2290, %v2289
  %v2433 = vpack.c.b16 %v2292, %v2291
  %v2434 = vpack.c.b16 %v2294, %v2293
  %v2435 = vpack.c.b16 %v2296, %v2295
  %v2436 = vpack.c.b16 %v2298, %v2297
  %v2437 = vpack.c.b16 %v2300, %v2299
  %v2438 = vpack.c.b16 %v2302, %v2301
  %v2439 = vpack.c.b16 %v2304, %v2303
  %v2440 = vpack.c.b16 %v2306, %v2305
  %v2441 = vpack.c.b16 %v2308, %v2307
  %v2442 = vpack.c.b16 %v2310, %v2309
  %v2443 = vpack.c.b16 %v2312, %v2311
  %v2444 = vpack.c.b16 %v2314, %v2313
  %v2445 = vpack.c.b16 %v2316, %v2315
  %v2446 = vpack.c.b16 %v2318, %v2317
  %2575 = vmatprep.subr.bf16.mxu0 0
  %2576 = vmatpush1.bf16.msra.mxu0 %v2319
  %2577 = vmatprep.subr.bf16.mxu0 0
  %2578 = vmatpush1.bf16.msra.mxu0 %v2320
  %2579 = vmatprep.subr.bf16.mxu0 0
  %2580 = vmatpush1.bf16.msra.mxu0 %v2321
  %2581 = vmatprep.subr.bf16.mxu0 0
  %2582 = vmatpush1.bf16.msra.mxu0 %v2322
  %2583 = vmatprep.subr.bf16.mxu0 0
  %2584 = vmatpush1.bf16.msra.mxu0 %v2323
  %2585 = vmatprep.subr.bf16.mxu0 0
  %2586 = vmatpush1.bf16.msra.mxu0 %v2324
  %2587 = vmatprep.subr.bf16.mxu0 0
  %2588 = vmatpush1.bf16.msra.mxu0 %v2325
  %2589 = vmatprep.subr.bf16.mxu0 0
  %2590 = vmatpush1.bf16.msra.mxu0 %v2326
  %2591 = vmatprep.subr.bf16.mxu0 0
  %2592 = vmatpush1.bf16.msra.mxu0 %v2327
  %2593 = vmatprep.subr.bf16.mxu0 0
  %2594 = vmatpush1.bf16.msra.mxu0 %v2328
  %2595 = vmatprep.subr.bf16.mxu0 0
  %2596 = vmatpush1.bf16.msra.mxu0 %v2329
  %2597 = vmatprep.subr.bf16.mxu0 0
  %2598 = vmatpush1.bf16.msra.mxu0 %v2330
  %2599 = vmatprep.subr.bf16.mxu0 0
  %2600 = vmatpush1.bf16.msra.mxu0 %v2331
  %2601 = vmatprep.subr.bf16.mxu0 0
  %2602 = vmatpush1.bf16.msra.mxu0 %v2332
  %2603 = vmatprep.subr.bf16.mxu0 0
  %2604 = vmatpush1.bf16.msra.mxu0 %v2333
  %2605 = vmatprep.subr.bf16.mxu0 0
  %2606 = vmatpush1.bf16.msra.mxu0 %v2334
  %2607 = vmatprep.mubr.bf16.mxu0 %v1529
  %2608 = vmatmul.mubr.bf16.gmra.mrb[0].mxu0 %v1528
  %v2609 = vpop.f32.mrb[0].mxu0
  %v2610 = vadd.f32 %v1805, %v2609
  %v2611 = vpop.f32.mrb[0].mxu0
  %v2612 = vpop.f32.mrb[0].mxu0
  %v2613 = vadd.f32 %v1805, %v2612
  %v2614 = vpop.f32.mrb[0].mxu0
  %2615 = vdwg.mxu0
  %2616 = vmatprep.subr.bf16.mxu0 0
  %2617 = vmatpush1.bf16.msra.mxu0 %v2335
  %2618 = vmatprep.subr.bf16.mxu0 0
  %2619 = vmatpush1.bf16.msra.mxu0 %v2336
  %2620 = vmatprep.subr.bf16.mxu0 0
  %2621 = vmatpush1.bf16.msra.mxu0 %v2337
  %2622 = vmatprep.subr.bf16.mxu0 0
  %2623 = vmatpush1.bf16.msra.mxu0 %v2338
  %2624 = vmatprep.subr.bf16.mxu0 0
  %2625 = vmatpush1.bf16.msra.mxu0 %v2339
  %2626 = vmatprep.subr.bf16.mxu0 0
  %2627 = vmatpush1.bf16.msra.mxu0 %v2340
  %2628 = vmatprep.subr.bf16.mxu0 0
  %2629 = vmatpush1.bf16.msra.mxu0 %v2341
  %2630 = vmatprep.subr.bf16.mxu0 0
  %2631 = vmatpush1.bf16.msra.mxu0 %v2342
  %2632 = vmatprep.subr.bf16.mxu0 0
  %2633 = vmatpush1.bf16.msra.mxu0 %v2343
  %2634 = vmatprep.subr.bf16.mxu0 0
  %2635 = vmatpush1.bf16.msra.mxu0 %v2344
  %2636 = vmatprep.subr.bf16.mxu0 0
  %2637 = vmatpush1.bf16.msra.mxu0 %v2345
  %2638 = vmatprep.subr.bf16.mxu0 0
  %2639 = vmatpush1.bf16.msra.mxu0 %v2346
  %2640 = vmatprep.subr.bf16.mxu0 0
  %2641 = vmatpush1.bf16.msra.mxu0 %v2347
  %2642 = vmatprep.subr.bf16.mxu0 0
  %2643 = vmatpush1.bf16.msra.mxu0 %v2348
  %2644 = vmatprep.subr.bf16.mxu0 0
  %2645 = vmatpush1.bf16.msra.mxu0 %v2349
  %2646 = vmatprep.subr.bf16.mxu0 0
  %2647 = vmatpush1.bf16.msra.mxu0 %v2350
  %2648 = vmatprep.mubr.bf16.mxu0 %v1531
  %2649 = vmatmul.mubr.bf16.gmra.mrb[0].mxu0 %v1530
  %v2650 = vpop.f32.mrb[0].mxu0
  %v2651 = vadd.f32 %v2610, %v2650
  %v2652 = vpop.f32.mrb[0].mxu0
  %v2653 = vpop.f32.mrb[0].mxu0
  %v2654 = vadd.f32 %v2613, %v2653
  %v2655 = vpop.f32.mrb[0].mxu0
  %2656 = vdwg.mxu0
  %2657 = vmatprep.subr.bf16.mxu0 0
  %2658 = vmatpush1.bf16.msra.mxu0 %v2351
  %2659 = vmatprep.subr.bf16.mxu0 0
  %2660 = vmatpush1.bf16.msra.mxu0 %v2352
  %2661 = vmatprep.subr.bf16.mxu0 0
  %2662 = vmatpush1.bf16.msra.mxu0 %v2353
  %2663 = vmatprep.subr.bf16.mxu0 0
  %2664 = vmatpush1.bf16.msra.mxu0 %v2354
  %2665 = vmatprep.subr.bf16.mxu0 0
  %2666 = vmatpush1.bf16.msra.mxu0 %v2355
  %2667 = vmatprep.subr.bf16.mxu0 0
  %2668 = vmatpush1.bf16.msra.mxu0 %v2356
  %2669 = vmatprep.subr.bf16.mxu0 0
  %2670 = vmatpush1.bf16.msra.mxu0 %v2357
  %2671 = vmatprep.subr.bf16.mxu0 0
  %2672 = vmatpush1.bf16.msra.mxu0 %v2358
  %2673 = vmatprep.subr.bf16.mxu0 0
  %2674 = vmatpush1.bf16.msra.mxu0 %v2359
  %2675 = vmatprep.subr.bf16.mxu0 0
  %2676 = vmatpush1.bf16.msra.mxu0 %v2360
  %2677 = vmatprep.subr.bf16.mxu0 0
  %2678 = vmatpush1.bf16.msra.mxu0 %v2361
  %2679 = vmatprep.subr.bf16.mxu0 0
  %2680 = vmatpush1.bf16.msra.mxu0 %v2362
  %2681 = vmatprep.subr.bf16.mxu0 0
  %2682 = vmatpush1.bf16.msra.mxu0 %v2363
  %2683 = vmatprep.subr.bf16.mxu0 0
  %2684 = vmatpush1.bf16.msra.mxu0 %v2364
  %2685 = vmatprep.subr.bf16.mxu0 0
  %2686 = vmatpush1.bf16.msra.mxu0 %v2365
  %2687 = vmatprep.subr.bf16.mxu0 0
  %2688 = vmatpush1.bf16.msra.mxu0 %v2366
  %2689 = vmatprep.mubr.bf16.mxu0 %v1533
  %2690 = vmatmul.mubr.bf16.gmra.mrb[0].mxu0 %v1532
  %v2691 = vpop.f32.mrb[0].mxu0
  %v2692 = vadd.f32 %v2651, %v2691
  %v2693 = vpop.f32.mrb[0].mxu0
  %v2694 = vpop.f32.mrb[0].mxu0
  %v2695 = vadd.f32 %v2654, %v2694
  %v2696 = vpop.f32.mrb[0].mxu0
  %2697 = vdwg.mxu0
  %2698 = vmatprep.subr.bf16.mxu0 0
  %2699 = vmatpush1.bf16.msra.mxu0 %v2367
  %2700 = vmatprep.subr.bf16.mxu0 0
  %2701 = vmatpush1.bf16.msra.mxu0 %v2368
  %2702 = vmatprep.subr.bf16.mxu0 0
  %2703 = vmatpush1.bf16.msra.mxu0 %v2369
  %2704 = vmatprep.subr.bf16.mxu0 0
  %2705 = vmatpush1.bf16.msra.mxu0 %v2370
  %2706 = vmatprep.subr.bf16.mxu0 0
  %2707 = vmatpush1.bf16.msra.mxu0 %v2371
  %2708 = vmatprep.subr.bf16.mxu0 0
  %2709 = vmatpush1.bf16.msra.mxu0 %v2372
  %2710 = vmatprep.subr.bf16.mxu0 0
  %2711 = vmatpush1.bf16.msra.mxu0 %v2373
  %2712 = vmatprep.subr.bf16.mxu0 0
  %2713 = vmatpush1.bf16.msra.mxu0 %v2374
  %2714 = vmatprep.subr.bf16.mxu0 0
  %2715 = vmatpush1.bf16.msra.mxu0 %v2375
  %2716 = vmatprep.subr.bf16.mxu0 0
  %2717 = vmatpush1.bf16.msra.mxu0 %v2376
  %2718 = vmatprep.subr.bf16.mxu0 0
  %2719 = vmatpush1.bf16.msra.mxu0 %v2377
  %2720 = vmatprep.subr.bf16.mxu0 0
  %2721 = vmatpush1.bf16.msra.mxu0 %v2378
  %2722 = vmatprep.subr.bf16.mxu0 0
  %2723 = vmatpush1.bf16.msra.mxu0 %v2379
  %2724 = vmatprep.subr.bf16.mxu0 0
  %2725 = vmatpush1.bf16.msra.mxu0 %v2380
  %2726 = vmatprep.subr.bf16.mxu0 0
  %2727 = vmatpush1.bf16.msra.mxu0 %v2381
  %2728 = vmatprep.subr.bf16.mxu0 0
  %2729 = vmatpush1.bf16.msra.mxu0 %v2382
  %2730 = vmatprep.mubr.bf16.mxu0 %v1535
  %2731 = vmatmul.mubr.bf16.gmra.mrb[0].mxu0 %v1534
  %v2732 = vpop.f32.mrb[0].mxu0
  %v2733 = vadd.f32 %v2692, %v2732
  %v2734 = vpop.f32.mrb[0].mxu0
  %v2735 = vpop.f32.mrb[0].mxu0
  %v2736 = vadd.f32 %v2695, %v2735
  %v2737 = vpop.f32.mrb[0].mxu0
  %2738 = vdwg.mxu0
  %2739 = vmatprep.subr.bf16.mxu0 0
  %2740 = vmatpush1.bf16.msra.mxu0 %v2383
  %2741 = vmatprep.subr.bf16.mxu0 0
  %2742 = vmatpush1.bf16.msra.mxu0 %v2384
  %2743 = vmatprep.subr.bf16.mxu0 0
  %2744 = vmatpush1.bf16.msra.mxu0 %v2385
  %2745 = vmatprep.subr.bf16.mxu0 0
  %2746 = vmatpush1.bf16.msra.mxu0 %v2386
  %2747 = vmatprep.subr.bf16.mxu0 0
  %2748 = vmatpush1.bf16.msra.mxu0 %v2387
  %2749 = vmatprep.subr.bf16.mxu0 0
  %2750 = vmatpush1.bf16.msra.mxu0 %v2388
  %2751 = vmatprep.subr.bf16.mxu0 0
  %2752 = vmatpush1.bf16.msra.mxu0 %v2389
  %2753 = vmatprep.subr.bf16.mxu0 0
  %2754 = vmatpush1.bf16.msra.mxu0 %v2390
  %2755 = vmatprep.subr.bf16.mxu0 0
  %2756 = vmatpush1.bf16.msra.mxu0 %v2391
  %2757 = vmatprep.subr.bf16.mxu0 0
  %2758 = vmatpush1.bf16.msra.mxu0 %v2392
  %2759 = vmatprep.subr.bf16.mxu0 0
  %2760 = vmatpush1.bf16.msra.mxu0 %v2393
  %2761 = vmatprep.subr.bf16.mxu0 0
  %2762 = vmatpush1.bf16.msra.mxu0 %v2394
  %2763 = vmatprep.subr.bf16.mxu0 0
  %2764 = vmatpush1.bf16.msra.mxu0 %v2395
  %2765 = vmatprep.subr.bf16.mxu0 0
  %2766 = vmatpush1.bf16.msra.mxu0 %v2396
  %2767 = vmatprep.subr.bf16.mxu0 0
  %2768 = vmatpush1.bf16.msra.mxu0 %v2397
  %2769 = vmatprep.subr.bf16.mxu0 0
  %2770 = vmatpush1.bf16.msra.mxu0 %v2398
  %2771 = vmatprep.mubr.bf16.mxu0 %v1537
  %2772 = vmatmul.mubr.bf16.gmra.mrb[0].mxu0 %v1536
  %v2773 = vpop.f32.mrb[0].mxu0
  %v2774 = vadd.f32 %v2733, %v2773
  %v2775 = vpop.f32.mrb[0].mxu0
  %v2776 = vpop.f32.mrb[0].mxu0
  %v2777 = vadd.f32 %v2736, %v2776
  %v2778 = vpop.f32.mrb[0].mxu0
  %2779 = vdwg.mxu0
  %2780 = vmatprep.subr.bf16.mxu0 0
  %2781 = vmatpush1.bf16.msra.mxu0 %v2399
  %2782 = vmatprep.subr.bf16.mxu0 0
  %2783 = vmatpush1.bf16.msra.mxu0 %v2400
  %2784 = vmatprep.subr.bf16.mxu0 0
  %2785 = vmatpush1.bf16.msra.mxu0 %v2401
  %2786 = vmatprep.subr.bf16.mxu0 0
  %2787 = vmatpush1.bf16.msra.mxu0 %v2402
  %2788 = vmatprep.subr.bf16.mxu0 0
  %2789 = vmatpush1.bf16.msra.mxu0 %v2403
  %2790 = vmatprep.subr.bf16.mxu0 0
  %2791 = vmatpush1.bf16.msra.mxu0 %v2404
  %2792 = vmatprep.subr.bf16.mxu0 0
  %2793 = vmatpush1.bf16.msra.mxu0 %v2405
  %2794 = vmatprep.subr.bf16.mxu0 0
  %2795 = vmatpush1.bf16.msra.mxu0 %v2406
  %2796 = vmatprep.subr.bf16.mxu0 0
  %2797 = vmatpush1.bf16.msra.mxu0 %v2407
  %2798 = vmatprep.subr.bf16.mxu0 0
  %2799 = vmatpush1.bf16.msra.mxu0 %v2408
  %2800 = vmatprep.subr.bf16.mxu0 0
  %2801 = vmatpush1.bf16.msra.mxu0 %v2409
  %2802 = vmatprep.subr.bf16.mxu0 0
  %2803 = vmatpush1.bf16.msra.mxu0 %v2410
  %2804 = vmatprep.subr.bf16.mxu0 0
  %2805 = vmatpush1.bf16.msra.mxu0 %v2411
  %2806 = vmatprep.subr.bf16.mxu0 0
  %2807 = vmatpush1.bf16.msra.mxu0 %v2412
  %2808 = vmatprep.subr.bf16.mxu0 0
  %2809 = vmatpush1.bf16.msra.mxu0 %v2413
  %2810 = vmatprep.subr.bf16.mxu0 0
  %2811 = vmatpush1.bf16.msra.mxu0 %v2414
  %2812 = vmatprep.mubr.bf16.mxu0 %v1539
  %2813 = vmatmul.mubr.bf16.gmra.mrb[0].mxu0 %v1538
  %v2814 = vpop.f32.mrb[0].mxu0
  %v2815 = vadd.f32 %v2774, %v2814
  %v2816 = vpop.f32.mrb[0].mxu0
  %v2817 = vpop.f32.mrb[0].mxu0
  %v2818 = vadd.f32 %v2777, %v2817
  %v2819 = vpop.f32.mrb[0].mxu0
  %2820 = vdwg.mxu0
  %2821 = vmatprep.subr.bf16.mxu0 0
  %2822 = vmatpush1.bf16.msra.mxu0 %v2415
  %2823 = vmatprep.subr.bf16.mxu0 0
  %2824 = vmatpush1.bf16.msra.mxu0 %v2416
  %2825 = vmatprep.subr.bf16.mxu0 0
  %2826 = vmatpush1.bf16.msra.mxu0 %v2417
  %2827 = vmatprep.subr.bf16.mxu0 0
  %2828 = vmatpush1.bf16.msra.mxu0 %v2418
  %2829 = vmatprep.subr.bf16.mxu0 0
  %2830 = vmatpush1.bf16.msra.mxu0 %v2419
  %2831 = vmatprep.subr.bf16.mxu0 0
  %2832 = vmatpush1.bf16.msra.mxu0 %v2420
  %2833 = vmatprep.subr.bf16.mxu0 0
  %2834 = vmatpush1.bf16.msra.mxu0 %v2421
  %2835 = vmatprep.subr.bf16.mxu0 0
  %2836 = vmatpush1.bf16.msra.mxu0 %v2422
  %2837 = vmatprep.subr.bf16.mxu0 0
  %2838 = vmatpush1.bf16.msra.mxu0 %v2423
  %2839 = vmatprep.subr.bf16.mxu0 0
  %2840 = vmatpush1.bf16.msra.mxu0 %v2424
  %2841 = vmatprep.subr.bf16.mxu0 0
  %2842 = vmatpush1.bf16.msra.mxu0 %v2425
  %2843 = vmatprep.subr.bf16.mxu0 0
  %2844 = vmatpush1.bf16.msra.mxu0 %v2426
  %2845 = vmatprep.subr.bf16.mxu0 0
  %2846 = vmatpush1.bf16.msra.mxu0 %v2427
  %2847 = vmatprep.subr.bf16.mxu0 0
  %2848 = vmatpush1.bf16.msra.mxu0 %v2428
  %2849 = vmatprep.subr.bf16.mxu0 0
  %2850 = vmatpush1.bf16.msra.mxu0 %v2429
  %2851 = vmatprep.subr.bf16.mxu0 0
  %2852 = vmatpush1.bf16.msra.mxu0 %v2430
  %2853 = vmatprep.mubr.bf16.mxu0 %v1541
  %2854 = vmatmul.mubr.bf16.gmra.mrb[0].mxu0 %v1540
  %v2855 = vpop.f32.mrb[0].mxu0
  %v2856 = vadd.f32 %v2815, %v2855
  %v2857 = vpop.f32.mrb[0].mxu0
  %v2858 = vpop.f32.mrb[0].mxu0
  %v2859 = vadd.f32 %v2818, %v2858
  %v2860 = vpop.f32.mrb[0].mxu0
  %2861 = vdwg.mxu0
  %2862 = vmatprep.subr.bf16.mxu0 0
  %2863 = vmatpush1.bf16.msra.mxu0 %v2431
  %2864 = vmatprep.subr.bf16.mxu0 0
  %2865 = vmatpush1.bf16.msra.mxu0 %v2432
  %2866 = vmatprep.subr.bf16.mxu0 0
  %2867 = vmatpush1.bf16.msra.mxu0 %v2433
  %2868 = vmatprep.subr.bf16.mxu0 0
  %2869 = vmatpush1.bf16.msra.mxu0 %v2434
  %2870 = vmatprep.subr.bf16.mxu0 0
  %2871 = vmatpush1.bf16.msra.mxu0 %v2435
  %2872 = vmatprep.subr.bf16.mxu0 0
  %2873 = vmatpush1.bf16.msra.mxu0 %v2436
  %2874 = vmatprep.subr.bf16.mxu0 0
  %2875 = vmatpush1.bf16.msra.mxu0 %v2437
  %2876 = vmatprep.subr.bf16.mxu0 0
  %2877 = vmatpush1.bf16.msra.mxu0 %v2438
  %2878 = vmatprep.subr.bf16.mxu0 0
  %2879 = vmatpush1.bf16.msra.mxu0 %v2439
  %2880 = vmatprep.subr.bf16.mxu0 0
  %2881 = vmatpush1.bf16.msra.mxu0 %v2440
  %2882 = vmatprep.subr.bf16.mxu0 0
  %2883 = vmatpush1.bf16.msra.mxu0 %v2441
  %2884 = vmatprep.subr.bf16.mxu0 0
  %2885 = vmatpush1.bf16.msra.mxu0 %v2442
  %2886 = vmatprep.subr.bf16.mxu0 0
  %2887 = vmatpush1.bf16.msra.mxu0 %v2443
  %2888 = vmatprep.subr.bf16.mxu0 0
  %2889 = vmatpush1.bf16.msra.mxu0 %v2444
  %2890 = vmatprep.subr.bf16.mxu0 0
  %2891 = vmatpush1.bf16.msra.mxu0 %v2445
  %2892 = vmatprep.subr.bf16.mxu0 0
  %2893 = vmatpush1.bf16.msra.mxu0 %v2446
  %2894 = vmatprep.mubr.bf16.mxu0 %v1543
  %2895 = vmatmul.mubr.bf16.gmra.mrb[0].mxu0 %v1542
  %v2896 = vpop.f32.mrb[0].mxu0
  %v2897 = vadd.f32 %v2856, %v2896
  %v2898 = vpop.f32.mrb[0].mxu0
  %v2899 = vpop.f32.mrb[0].mxu0
  %v2900 = vadd.f32 %v2859, %v2899
  %v2901 = vpop.f32.mrb[0].mxu0
  %2902 = vdwg.mxu0
  %v2903 = vadd.f32 %v870, %v2897
  %v2904 = vadd.f32 %v871, %v2900
  %v2905 = vld [vmem:[%s12] sm:$0x1]
  %v2906 = vld [vmem:[%s13] sm:$0x1]
  %v2907 = vsel %vm187, %v2903, 0.0
  %2908 = vadd.xlane.f32.xlu0 %v2907
  %v2909 = vpop.xlane.xlu0 %2908
  %v2910 = vsel %vm187, %v2904, 0.0
  %2911 = vadd.xlane.f32.xlu0 %v2910
  %v2912 = vpop.xlane.xlu0 %2911
  %v2913 = vmul.f32 %v2909, %v835
  %v2914 = vmul.f32 %v2912, %v835
  %v2915 = vsub.f32 %v2903, %v2913
  %v2916 = vsub.f32 %v2904, %v2914
  %v2917 = vmul.f32 %v2915, %v2915
  %v2918 = vmul.f32 %v2916, %v2916
  %v2919 = vsel %vm187, %v2917, 0.0
  %2920 = vadd.xlane.f32.xlu0 %v2919
  %v2921 = vpop.xlane.xlu0 %2920
  %v2922 = vsel %vm187, %v2918, 0.0
  %2923 = vadd.xlane.f32.xlu0 %v2922
  %v2924 = vpop.xlane.xlu0 %2923
  %v2925 = vmul.f32 %v2921, %v835
  %v2926 = vmul.f32 %v2924, %v835
  %v2927 = vadd.f32 %v2925, 1e-05
  %v2928 = vadd.f32 %v2926, 1e-05
  %v2929 = vrsqrt.pop %v2927
  %v2930 = vrsqrt.pop %v2928
  %v2931 = vmul.f32 %v2915, %v2929
  %v2932 = vmul.f32 %v2916, %v2930
  %v2934 = vlaneseq
  %v2935 = vshrl.u32 %v2934, 7
  %v2936 = vsub.s32 0, %v2935
  %v2937 = vrot.slane %v2905, %v2936
  %v2939 = vmul.f32 %v2931, %v2937
  %v2940 = vmul.f32 %v2932, %v2937
  %v2942 = vlaneseq
  %v2943 = vshrl.u32 %v2942, 7
  %v2944 = vsub.s32 0, %v2943
  %v2945 = vrot.slane %v2906, %v2944
  %v2947 = vadd.f32 %v2939, %v2945
  %v2948 = vadd.f32 %v2940, %v2945
  %v2949 = vpack.c.bf16 %v2948, %v2947
  %s2950 = scalar_lea.vmem %s4, 16
  %v2951 = vld [vmem:[%s2950] sm:$0xf]
  %v2952 = vld [vmem:[%s2950 + $0x4] sm:$0xf]
  %v2953 = vld [vmem:[%s2950 + $0x8] sm:$0xf]
  %v2954 = vld [vmem:[%s2950 + $0xc] sm:$0xf]
  %s2955 = scalar_lea.vmem %s5, 1
  %v2956 = vld [vmem:[%s2955] sm:$0x1]
  %v2958 = vlaneseq
  %v2959 = vshrl.u32 %v2958, 7
  %v2960 = vsub.s32 0, %v2959
  %v2961 = vrot.slane %v2956, %v2960
  %v2967 = vunpack.c.l.b16 %v2951
  %v2968 = vunpack.c.l.b16 %v2952
  %v2969 = vunpack.c.l.b16 %v2953
  %v2970 = vunpack.c.l.b16 %v2954
  %v2971 = vpack.c.b16 %v2968, %v2967
  %v2972 = vpack.c.b16 %v2970, %v2969
  %v2976 = vsel %vm187, %v2949, 0
  %2978 = vmatprep.subr.bf16.mxu0 0
  %2979 = vmatpush1.bf16.msra.mxu0 %v2971
  %2980 = vmatprep.subr.bf16.mxu0 0
  %2981 = vmatpush1.bf16.msra.mxu0 %v2972
  %2982 = vmatprep.subr.bf16.mxu0 0
  %2983 = vmatpush1.bf16.msra.mxu0 0
  %2984 = vmatprep.subr.bf16.mxu0 0
  %2985 = vmatpush1.bf16.msra.mxu0 0
  %2986 = vmatprep.subr.bf16.mxu0 0
  %2987 = vmatpush1.bf16.msra.mxu0 0
  %2988 = vmatprep.subr.bf16.mxu0 0
  %2989 = vmatpush1.bf16.msra.mxu0 0
  %2990 = vmatprep.subr.bf16.mxu0 0
  %2991 = vmatpush1.bf16.msra.mxu0 0
  %2992 = vmatprep.subr.bf16.mxu0 0
  %2993 = vmatpush1.bf16.msra.mxu0 0
  %2994 = vmatprep.subr.bf16.mxu0 0
  %2995 = vmatpush1.bf16.msra.mxu0 0
  %2996 = vmatprep.subr.bf16.mxu0 0
  %2997 = vmatpush1.bf16.msra.mxu0 0
  %2998 = vmatprep.subr.bf16.mxu0 0
  %2999 = vmatpush1.bf16.msra.mxu0 0
  %3000 = vmatprep.subr.bf16.mxu0 0
  %3001 = vmatpush1.bf16.msra.mxu0 0
  %3002 = vmatprep.subr.bf16.mxu0 0
  %3003 = vmatpush1.bf16.msra.mxu0 0
  %3004 = vmatprep.subr.bf16.mxu0 0
  %3005 = vmatpush1.bf16.msra.mxu0 0
  %3006 = vmatprep.subr.bf16.mxu0 0
  %3007 = vmatpush1.bf16.msra.mxu0 0
  %3008 = vmatprep.subr.bf16.mxu0 0
  %3009 = vmatpush1.bf16.msra.mxu0 0
  %3010 = vmatprep.mubr.bf16.mxu0 0
  %3011 = vmatmul.mubr.bf16.gmra.mrb[0].mxu0 %v2976
  %v3012 = vpop.f32.mrb[0].mxu0
  %v3013 = vadd.f32 %v2961, %v3012
  %v3014 = vpop.f32.mrb[0].mxu0
  %v3015 = vpop.f32.mrb[0].mxu0
  %v3016 = vadd.f32 %v2961, %v3015
  %v3017 = vpop.f32.mrb[0].mxu0
  %3018 = vdwg.mxu0
  %v3019 = vpack.c.bf16 %v3016, %v3013
  %3021 = vrot.lane.b32.xlu0 %v3019, 96
  %v3022 = vpop.permute.xlu0 %3021
  %v3024 = vsel %vm236, %v3019, 0
  %v3027 = vsel %vm236, %v3022, 0
  %3029 = vmatprep.subr.bf16.mxu0 0
  %3030 = vmatpush1.bf16.xpose.msra.mxu0 %v3027
  %3031 = vmatprep.subr.bf16.mxu0 0
  %3032 = vmatpush1.bf16.xpose.msra.mxu0 0
  %3033 = vmatprep.subr.bf16.mxu0 0
  %3034 = vmatpush1.bf16.xpose.msra.mxu0 0
  %3035 = vmatprep.subr.bf16.mxu0 0
  %3036 = vmatpush1.bf16.xpose.msra.mxu0 0
  %3037 = vmatprep.subr.bf16.mxu0 0
  %3038 = vmatpush1.bf16.xpose.msra.mxu0 0
  %3039 = vmatprep.subr.bf16.mxu0 0
  %3040 = vmatpush1.bf16.xpose.msra.mxu0 0
  %3041 = vmatprep.subr.bf16.mxu0 0
  %3042 = vmatpush1.bf16.xpose.msra.mxu0 0
  %3043 = vmatprep.subr.bf16.mxu0 0
  %3044 = vmatpush1.bf16.xpose.msra.mxu0 0
  %3045 = vmatprep.subr.bf16.mxu0 0
  %3046 = vmatpush1.bf16.xpose.msra.mxu0 0
  %3047 = vmatprep.subr.bf16.mxu0 0
  %3048 = vmatpush1.bf16.xpose.msra.mxu0 0
  %3049 = vmatprep.subr.bf16.mxu0 0
  %3050 = vmatpush1.bf16.xpose.msra.mxu0 0
  %3051 = vmatprep.subr.bf16.mxu0 0
  %3052 = vmatpush1.bf16.xpose.msra.mxu0 0
  %3053 = vmatprep.subr.bf16.mxu0 0
  %3054 = vmatpush1.bf16.xpose.msra.mxu0 0
  %3055 = vmatprep.subr.bf16.mxu0 0
  %3056 = vmatpush1.bf16.xpose.msra.mxu0 0
  %3057 = vmatprep.subr.bf16.mxu0 0
  %3058 = vmatpush1.bf16.xpose.msra.mxu0 0
  %3059 = vmatprep.subr.bf16.mxu0 0
  %3060 = vmatpush1.bf16.xpose.msra.mxu0 0
  %3061 = vmatprep.mubr.bf16.mxu0 0
  %3062 = vmatmul.mubr.bf16.gmra.mrb[0].mxu0 %v3024
  %v3063 = vpop.f32.mrb[0].mxu0
  %v3064 = vadd.f32 0.0, %v3063
  %v3065 = vpop.f32.mrb[0].mxu0
  %v3066 = vpop.f32.mrb[0].mxu0
  %v3067 = vadd.f32 0.0, %v3066
  %v3068 = vpop.f32.mrb[0].mxu0
  %3069 = vdwg.mxu0
  %3070 = vrot.lane.b32.xlu0 %v3019, 120
  %v3071 = vpop.permute.xlu0 %3070
  %3072 = vrot.lane.b32.xlu0 %v3019, 88
  %v3073 = vpop.permute.xlu0 %3072
  %v3075 = vsel %vm236, %v3071, 0
  %v3078 = vsel %vm236, %v3073, 0
  %3080 = vmatprep.subr.bf16.mxu0 0
  %3081 = vmatpush1.bf16.xpose.msra.mxu0 %v3078
  %3082 = vmatprep.subr.bf16.mxu0 0
  %3083 = vmatpush1.bf16.xpose.msra.mxu0 0
  %3084 = vmatprep.subr.bf16.mxu0 0
  %3085 = vmatpush1.bf16.xpose.msra.mxu0 0
  %3086 = vmatprep.subr.bf16.mxu0 0
  %3087 = vmatpush1.bf16.xpose.msra.mxu0 0
  %3088 = vmatprep.subr.bf16.mxu0 0
  %3089 = vmatpush1.bf16.xpose.msra.mxu0 0
  %3090 = vmatprep.subr.bf16.mxu0 0
  %3091 = vmatpush1.bf16.xpose.msra.mxu0 0
  %3092 = vmatprep.subr.bf16.mxu0 0
  %3093 = vmatpush1.bf16.xpose.msra.mxu0 0
  %3094 = vmatprep.subr.bf16.mxu0 0
  %3095 = vmatpush1.bf16.xpose.msra.mxu0 0
  %3096 = vmatprep.subr.bf16.mxu0 0
  %3097 = vmatpush1.bf16.xpose.msra.mxu0 0
  %3098 = vmatprep.subr.bf16.mxu0 0
  %3099 = vmatpush1.bf16.xpose.msra.mxu0 0
  %3100 = vmatprep.subr.bf16.mxu0 0
  %3101 = vmatpush1.bf16.xpose.msra.mxu0 0
  %3102 = vmatprep.subr.bf16.mxu0 0
  %3103 = vmatpush1.bf16.xpose.msra.mxu0 0
  %3104 = vmatprep.subr.bf16.mxu0 0
  %3105 = vmatpush1.bf16.xpose.msra.mxu0 0
  %3106 = vmatprep.subr.bf16.mxu0 0
  %3107 = vmatpush1.bf16.xpose.msra.mxu0 0
  %3108 = vmatprep.subr.bf16.mxu0 0
  %3109 = vmatpush1.bf16.xpose.msra.mxu0 0
  %3110 = vmatprep.subr.bf16.mxu0 0
  %3111 = vmatpush1.bf16.xpose.msra.mxu0 0
  %3112 = vmatprep.mubr.bf16.mxu0 0
  %3113 = vmatmul.mubr.bf16.gmra.mrb[0].mxu0 %v3075
  %v3114 = vpop.f32.mrb[0].mxu0
  %v3115 = vadd.f32 0.0, %v3114
  %v3116 = vpop.f32.mrb[0].mxu0
  %v3117 = vpop.f32.mrb[0].mxu0
  %v3118 = vadd.f32 0.0, %v3117
  %v3119 = vpop.f32.mrb[0].mxu0
  %3120 = vdwg.mxu0
  %3121 = vrot.lane.b32.xlu0 %v3019, 112
  %v3122 = vpop.permute.xlu0 %3121
  %3123 = vrot.lane.b32.xlu0 %v3019, 80
  %v3124 = vpop.permute.xlu0 %3123
  %v3126 = vsel %vm236, %v3122, 0
  %v3129 = vsel %vm236, %v3124, 0
  %3131 = vmatprep.subr.bf16.mxu0 0
  %3132 = vmatpush1.bf16.xpose.msra.mxu0 %v3129
  %3133 = vmatprep.subr.bf16.mxu0 0
  %3134 = vmatpush1.bf16.xpose.msra.mxu0 0
  %3135 = vmatprep.subr.bf16.mxu0 0
  %3136 = vmatpush1.bf16.xpose.msra.mxu0 0
  %3137 = vmatprep.subr.bf16.mxu0 0
  %3138 = vmatpush1.bf16.xpose.msra.mxu0 0
  %3139 = vmatprep.subr.bf16.mxu0 0
  %3140 = vmatpush1.bf16.xpose.msra.mxu0 0
  %3141 = vmatprep.subr.bf16.mxu0 0
  %3142 = vmatpush1.bf16.xpose.msra.mxu0 0
  %3143 = vmatprep.subr.bf16.mxu0 0
  %3144 = vmatpush1.bf16.xpose.msra.mxu0 0
  %3145 = vmatprep.subr.bf16.mxu0 0
  %3146 = vmatpush1.bf16.xpose.msra.mxu0 0
  %3147 = vmatprep.subr.bf16.mxu0 0
  %3148 = vmatpush1.bf16.xpose.msra.mxu0 0
  %3149 = vmatprep.subr.bf16.mxu0 0
  %3150 = vmatpush1.bf16.xpose.msra.mxu0 0
  %3151 = vmatprep.subr.bf16.mxu0 0
  %3152 = vmatpush1.bf16.xpose.msra.mxu0 0
  %3153 = vmatprep.subr.bf16.mxu0 0
  %3154 = vmatpush1.bf16.xpose.msra.mxu0 0
  %3155 = vmatprep.subr.bf16.mxu0 0
  %3156 = vmatpush1.bf16.xpose.msra.mxu0 0
  %3157 = vmatprep.subr.bf16.mxu0 0
  %3158 = vmatpush1.bf16.xpose.msra.mxu0 0
  %3159 = vmatprep.subr.bf16.mxu0 0
  %3160 = vmatpush1.bf16.xpose.msra.mxu0 0
  %3161 = vmatprep.subr.bf16.mxu0 0
  %3162 = vmatpush1.bf16.xpose.msra.mxu0 0
  %3163 = vmatprep.mubr.bf16.mxu0 0
  %3164 = vmatmul.mubr.bf16.gmra.mrb[0].mxu0 %v3126
  %v3165 = vpop.f32.mrb[0].mxu0
  %v3166 = vadd.f32 0.0, %v3165
  %v3167 = vpop.f32.mrb[0].mxu0
  %v3168 = vpop.f32.mrb[0].mxu0
  %v3169 = vadd.f32 0.0, %v3168
  %v3170 = vpop.f32.mrb[0].mxu0
  %3171 = vdwg.mxu0
  %3172 = vrot.lane.b32.xlu0 %v3019, 104
  %v3173 = vpop.permute.xlu0 %3172
  %3174 = vrot.lane.b32.xlu0 %v3019, 72
  %v3175 = vpop.permute.xlu0 %3174
  %v3177 = vsel %vm236, %v3173, 0
  %v3180 = vsel %vm236, %v3175, 0
  %3182 = vmatprep.subr.bf16.mxu0 0
  %3183 = vmatpush1.bf16.xpose.msra.mxu0 %v3180
  %3184 = vmatprep.subr.bf16.mxu0 0
  %3185 = vmatpush1.bf16.xpose.msra.mxu0 0
  %3186 = vmatprep.subr.bf16.mxu0 0
  %3187 = vmatpush1.bf16.xpose.msra.mxu0 0
  %3188 = vmatprep.subr.bf16.mxu0 0
  %3189 = vmatpush1.bf16.xpose.msra.mxu0 0
  %3190 = vmatprep.subr.bf16.mxu0 0
  %3191 = vmatpush1.bf16.xpose.msra.mxu0 0
  %3192 = vmatprep.subr.bf16.mxu0 0
  %3193 = vmatpush1.bf16.xpose.msra.mxu0 0
  %3194 = vmatprep.subr.bf16.mxu0 0
  %3195 = vmatpush1.bf16.xpose.msra.mxu0 0
  %3196 = vmatprep.subr.bf16.mxu0 0
  %3197 = vmatpush1.bf16.xpose.msra.mxu0 0
  %3198 = vmatprep.subr.bf16.mxu0 0
  %3199 = vmatpush1.bf16.xpose.msra.mxu0 0
  %3200 = vmatprep.subr.bf16.mxu0 0
  %3201 = vmatpush1.bf16.xpose.msra.mxu0 0
  %3202 = vmatprep.subr.bf16.mxu0 0
  %3203 = vmatpush1.bf16.xpose.msra.mxu0 0
  %3204 = vmatprep.subr.bf16.mxu0 0
  %3205 = vmatpush1.bf16.xpose.msra.mxu0 0
  %3206 = vmatprep.subr.bf16.mxu0 0
  %3207 = vmatpush1.bf16.xpose.msra.mxu0 0
  %3208 = vmatprep.subr.bf16.mxu0 0
  %3209 = vmatpush1.bf16.xpose.msra.mxu0 0
  %3210 = vmatprep.subr.bf16.mxu0 0
  %3211 = vmatpush1.bf16.xpose.msra.mxu0 0
  %3212 = vmatprep.subr.bf16.mxu0 0
  %3213 = vmatpush1.bf16.xpose.msra.mxu0 0
  %3214 = vmatprep.mubr.bf16.mxu0 0
  %3215 = vmatmul.mubr.bf16.gmra.mrb[0].mxu0 %v3177
  %v3216 = vpop.f32.mrb[0].mxu0
  %v3217 = vadd.f32 0.0, %v3216
  %v3218 = vpop.f32.mrb[0].mxu0
  %v3219 = vpop.f32.mrb[0].mxu0
  %v3220 = vadd.f32 0.0, %v3219
  %v3221 = vpop.f32.mrb[0].mxu0
  %3222 = vdwg.mxu0
  %v3223 = vadd.f32 %v3064, %v155
  %v3224 = vadd.f32 %v3067, %v156
  %v3225 = vadd.f32 %v3115, %v157
  %v3226 = vadd.f32 %v3118, %v158
  %v3227 = vadd.f32 %v3166, %v159
  %v3228 = vadd.f32 %v3169, %v160
  %v3229 = vadd.f32 %v3217, %v161
  %v3230 = vadd.f32 %v3220, %v162
  %v3231 = vsel %vm445, %v3223, -inf
  %3232 = vmax.xlane.f32.xlu0 %v3231
  %v3233 = vpop.xlane.xlu0 %3232
  %v3234 = vsel %vm445, %v3224, -inf
  %3235 = vmax.xlane.f32.xlu0 %v3234
  %v3236 = vpop.xlane.xlu0 %3235
  %v3237 = vsel %vm445, %v3225, -inf
  %3238 = vmax.xlane.f32.xlu0 %v3237
  %v3239 = vpop.xlane.xlu0 %3238
  %v3240 = vsel %vm445, %v3226, -inf
  %3241 = vmax.xlane.f32.xlu0 %v3240
  %v3242 = vpop.xlane.xlu0 %3241
  %v3243 = vsel %vm445, %v3227, -inf
  %3244 = vmax.xlane.f32.xlu0 %v3243
  %v3245 = vpop.xlane.xlu0 %3244
  %v3246 = vsel %vm445, %v3228, -inf
  %3247 = vmax.xlane.f32.xlu0 %v3246
  %v3248 = vpop.xlane.xlu0 %3247
  %v3249 = vsel %vm445, %v3229, -inf
  %3250 = vmax.xlane.f32.xlu0 %v3249
  %v3251 = vpop.xlane.xlu0 %3250
  %v3252 = vsel %vm445, %v3230, -inf
  %3253 = vmax.xlane.f32.xlu0 %v3252
  %v3254 = vpop.xlane.xlu0 %3253
  %v3255 = vsub.f32 %v3223, %v3233
  %v3256 = vsub.f32 %v3224, %v3236
  %v3257 = vsub.f32 %v3225, %v3239
  %v3258 = vsub.f32 %v3226, %v3242
  %v3259 = vsub.f32 %v3227, %v3245
  %v3260 = vsub.f32 %v3228, %v3248
  %v3261 = vsub.f32 %v3229, %v3251
  %v3262 = vsub.f32 %v3230, %v3254
  %v3263 = vmul.f32 %v3255, 1.442695
  %v3264 = vpow.pop %v3263
  %v3265 = vmul.f32 %v3256, 1.442695
  %v3266 = vpow.pop %v3265
  %v3267 = vmul.f32 %v3257, 1.442695
  %v3268 = vpow.pop %v3267
  %v3269 = vmul.f32 %v3258, 1.442695
  %v3270 = vpow.pop %v3269
  %v3271 = vmul.f32 %v3259, 1.442695
  %v3272 = vpow.pop %v3271
  %v3273 = vmul.f32 %v3260, 1.442695
  %v3274 = vpow.pop %v3273
  %v3275 = vmul.f32 %v3261, 1.442695
  %v3276 = vpow.pop %v3275
  %v3277 = vmul.f32 %v3262, 1.442695
  %v3278 = vpow.pop %v3277
  %v3279 = vsel %vm445, %v3264, 0.0
  %3280 = vadd.xlane.f32.xlu0 %v3279
  %v3281 = vpop.xlane.xlu0 %3280
  %v3282 = vsel %vm445, %v3266, 0.0
  %3283 = vadd.xlane.f32.xlu0 %v3282
  %v3284 = vpop.xlane.xlu0 %3283
  %v3285 = vsel %vm445, %v3268, 0.0
  %3286 = vadd.xlane.f32.xlu0 %v3285
  %v3287 = vpop.xlane.xlu0 %3286
  %v3288 = vsel %vm445, %v3270, 0.0
  %3289 = vadd.xlane.f32.xlu0 %v3288
  %v3290 = vpop.xlane.xlu0 %3289
  %v3291 = vsel %vm445, %v3272, 0.0
  %3292 = vadd.xlane.f32.xlu0 %v3291
  %v3293 = vpop.xlane.xlu0 %3292
  %v3294 = vsel %vm445, %v3274, 0.0
  %3295 = vadd.xlane.f32.xlu0 %v3294
  %v3296 = vpop.xlane.xlu0 %3295
  %v3297 = vsel %vm445, %v3276, 0.0
  %3298 = vadd.xlane.f32.xlu0 %v3297
  %v3299 = vpop.xlane.xlu0 %3298
  %v3300 = vsel %vm445, %v3278, 0.0
  %3301 = vadd.xlane.f32.xlu0 %v3300
  %v3302 = vpop.xlane.xlu0 %3301
  %v3303 = vrcp.pop %v3281
  %v3304 = vrcp.pop %v3284
  %v3305 = vrcp.pop %v3287
  %v3306 = vrcp.pop %v3290
  %v3307 = vrcp.pop %v3293
  %v3308 = vrcp.pop %v3296
  %v3309 = vrcp.pop %v3299
  %v3310 = vrcp.pop %v3302
  %v3311 = vmul.f32 %v3264, %v3303
  %v3312 = vmul.f32 %v3266, %v3304
  %v3313 = vmul.f32 %v3268, %v3305
  %v3314 = vmul.f32 %v3270, %v3306
  %v3315 = vmul.f32 %v3272, %v3307
  %v3316 = vmul.f32 %v3274, %v3308
  %v3317 = vmul.f32 %v3276, %v3309
  %v3318 = vmul.f32 %v3278, %v3310
  %v3319 = vpack.c.bf16 %v3312, %v3311
  %v3320 = vpack.c.bf16 %v3314, %v3313
  %v3321 = vpack.c.bf16 %v3316, %v3315
  %v3322 = vpack.c.bf16 %v3318, %v3317
  %3323 = vrot.lane.b32.xlu0 %v3019, 64
  %v3324 = vpop.permute.xlu0 %3323
  %v3327 = vsel %vm445, %v3319, 0
  %3329 = vmatprep.subr.bf16.mxu0 0
  %3330 = vmatpush1.bf16.msra.mxu0 %v3324
  %3331 = vmatprep.subr.bf16.mxu0 0
  %3332 = vmatpush1.bf16.msra.mxu0 0
  %3333 = vmatprep.subr.bf16.mxu0 0
  %3334 = vmatpush1.bf16.msra.mxu0 0
  %3335 = vmatprep.subr.bf16.mxu0 0
  %3336 = vmatpush1.bf16.msra.mxu0 0
  %3337 = vmatprep.subr.bf16.mxu0 0
  %3338 = vmatpush1.bf16.msra.mxu0 0
  %3339 = vmatprep.subr.bf16.mxu0 0
  %3340 = vmatpush1.bf16.msra.mxu0 0
  %3341 = vmatprep.subr.bf16.mxu0 0
  %3342 = vmatpush1.bf16.msra.mxu0 0
  %3343 = vmatprep.subr.bf16.mxu0 0
  %3344 = vmatpush1.bf16.msra.mxu0 0
  %3345 = vmatprep.subr.bf16.mxu0 0
  %3346 = vmatpush1.bf16.msra.mxu0 0
  %3347 = vmatprep.subr.bf16.mxu0 0
  %3348 = vmatpush1.bf16.msra.mxu0 0
  %3349 = vmatprep.subr.bf16.mxu0 0
  %3350 = vmatpush1.bf16.msra.mxu0 0
  %3351 = vmatprep.subr.bf16.mxu0 0
  %3352 = vmatpush1.bf16.msra.mxu0 0
  %3353 = vmatprep.subr.bf16.mxu0 0
  %3354 = vmatpush1.bf16.msra.mxu0 0
  %3355 = vmatprep.subr.bf16.mxu0 0
  %3356 = vmatpush1.bf16.msra.mxu0 0
  %3357 = vmatprep.subr.bf16.mxu0 0
  %3358 = vmatpush1.bf16.msra.mxu0 0
  %3359 = vmatprep.subr.bf16.mxu0 0
  %3360 = vmatpush1.bf16.msra.mxu0 0
  %3361 = vmatprep.mubr.bf16.mxu0 0
  %3362 = vmatmul.mubr.bf16.gmra.mrb[0].mxu0 %v3327
  %v3363 = vpop.f32.mrb[0].mxu0
  %v3364 = vadd.f32 0.0, %v3363
  %v3365 = vpop.f32.mrb[0].mxu0
  %v3366 = vpop.f32.mrb[0].mxu0
  %v3367 = vadd.f32 0.0, %v3366
  %v3368 = vpop.f32.mrb[0].mxu0
  %3369 = vdwg.mxu0
  %3370 = vrot.lane.b32.xlu0 %v3019, 56
  %v3371 = vpop.permute.xlu0 %3370
  %v3374 = vsel %vm445, %v3320, 0
  %3376 = vmatprep.subr.bf16.mxu0 0
  %3377 = vmatpush1.bf16.msra.mxu0 %v3371
  %3378 = vmatprep.subr.bf16.mxu0 0
  %3379 = vmatpush1.bf16.msra.mxu0 0
  %3380 = vmatprep.subr.bf16.mxu0 0
  %3381 = vmatpush1.bf16.msra.mxu0 0
  %3382 = vmatprep.subr.bf16.mxu0 0
  %3383 = vmatpush1.bf16.msra.mxu0 0
  %3384 = vmatprep.subr.bf16.mxu0 0
  %3385 = vmatpush1.bf16.msra.mxu0 0
  %3386 = vmatprep.subr.bf16.mxu0 0
  %3387 = vmatpush1.bf16.msra.mxu0 0
  %3388 = vmatprep.subr.bf16.mxu0 0
  %3389 = vmatpush1.bf16.msra.mxu0 0
  %3390 = vmatprep.subr.bf16.mxu0 0
  %3391 = vmatpush1.bf16.msra.mxu0 0
  %3392 = vmatprep.subr.bf16.mxu0 0
  %3393 = vmatpush1.bf16.msra.mxu0 0
  %3394 = vmatprep.subr.bf16.mxu0 0
  %3395 = vmatpush1.bf16.msra.mxu0 0
  %3396 = vmatprep.subr.bf16.mxu0 0
  %3397 = vmatpush1.bf16.msra.mxu0 0
  %3398 = vmatprep.subr.bf16.mxu0 0
  %3399 = vmatpush1.bf16.msra.mxu0 0
  %3400 = vmatprep.subr.bf16.mxu0 0
  %3401 = vmatpush1.bf16.msra.mxu0 0
  %3402 = vmatprep.subr.bf16.mxu0 0
  %3403 = vmatpush1.bf16.msra.mxu0 0
  %3404 = vmatprep.subr.bf16.mxu0 0
  %3405 = vmatpush1.bf16.msra.mxu0 0
  %3406 = vmatprep.subr.bf16.mxu0 0
  %3407 = vmatpush1.bf16.msra.mxu0 0
  %3408 = vmatprep.mubr.bf16.mxu0 0
  %3409 = vmatmul.mubr.bf16.gmra.mrb[0].mxu0 %v3374
  %v3410 = vpop.f32.mrb[0].mxu0
  %v3411 = vadd.f32 0.0, %v3410
  %v3412 = vpop.f32.mrb[0].mxu0
  %v3413 = vpop.f32.mrb[0].mxu0
  %v3414 = vadd.f32 0.0, %v3413
  %v3415 = vpop.f32.mrb[0].mxu0
  %3416 = vdwg.mxu0
  %3417 = vrot.lane.b32.xlu0 %v3019, 48
  %v3418 = vpop.permute.xlu0 %3417
  %v3421 = vsel %vm445, %v3321, 0
  %3423 = vmatprep.subr.bf16.mxu0 0
  %3424 = vmatpush1.bf16.msra.mxu0 %v3418
  %3425 = vmatprep.subr.bf16.mxu0 0
  %3426 = vmatpush1.bf16.msra.mxu0 0
  %3427 = vmatprep.subr.bf16.mxu0 0
  %3428 = vmatpush1.bf16.msra.mxu0 0
  %3429 = vmatprep.subr.bf16.mxu0 0
  %3430 = vmatpush1.bf16.msra.mxu0 0
  %3431 = vmatprep.subr.bf16.mxu0 0
  %3432 = vmatpush1.bf16.msra.mxu0 0
  %3433 = vmatprep.subr.bf16.mxu0 0
  %3434 = vmatpush1.bf16.msra.mxu0 0
  %3435 = vmatprep.subr.bf16.mxu0 0
  %3436 = vmatpush1.bf16.msra.mxu0 0
  %3437 = vmatprep.subr.bf16.mxu0 0
  %3438 = vmatpush1.bf16.msra.mxu0 0
  %3439 = vmatprep.subr.bf16.mxu0 0
  %3440 = vmatpush1.bf16.msra.mxu0 0
  %3441 = vmatprep.subr.bf16.mxu0 0
  %3442 = vmatpush1.bf16.msra.mxu0 0
  %3443 = vmatprep.subr.bf16.mxu0 0
  %3444 = vmatpush1.bf16.msra.mxu0 0
  %3445 = vmatprep.subr.bf16.mxu0 0
  %3446 = vmatpush1.bf16.msra.mxu0 0
  %3447 = vmatprep.subr.bf16.mxu0 0
  %3448 = vmatpush1.bf16.msra.mxu0 0
  %3449 = vmatprep.subr.bf16.mxu0 0
  %3450 = vmatpush1.bf16.msra.mxu0 0
  %3451 = vmatprep.subr.bf16.mxu0 0
  %3452 = vmatpush1.bf16.msra.mxu0 0
  %3453 = vmatprep.subr.bf16.mxu0 0
  %3454 = vmatpush1.bf16.msra.mxu0 0
  %3455 = vmatprep.mubr.bf16.mxu0 0
  %3456 = vmatmul.mubr.bf16.gmra.mrb[0].mxu0 %v3421
  %v3457 = vpop.f32.mrb[0].mxu0
  %v3458 = vadd.f32 0.0, %v3457
  %v3459 = vpop.f32.mrb[0].mxu0
  %v3460 = vpop.f32.mrb[0].mxu0
  %v3461 = vadd.f32 0.0, %v3460
  %v3462 = vpop.f32.mrb[0].mxu0
  %3463 = vdwg.mxu0
  %3464 = vrot.lane.b32.xlu0 %v3019, 40
  %v3465 = vpop.permute.xlu0 %3464
  %v3468 = vsel %vm445, %v3322, 0
  %3470 = vmatprep.subr.bf16.mxu0 0
  %3471 = vmatpush1.bf16.msra.mxu0 %v3465
  %3472 = vmatprep.subr.bf16.mxu0 0
  %3473 = vmatpush1.bf16.msra.mxu0 0
  %3474 = vmatprep.subr.bf16.mxu0 0
  %3475 = vmatpush1.bf16.msra.mxu0 0
  %3476 = vmatprep.subr.bf16.mxu0 0
  %3477 = vmatpush1.bf16.msra.mxu0 0
  %3478 = vmatprep.subr.bf16.mxu0 0
  %3479 = vmatpush1.bf16.msra.mxu0 0
  %3480 = vmatprep.subr.bf16.mxu0 0
  %3481 = vmatpush1.bf16.msra.mxu0 0
  %3482 = vmatprep.subr.bf16.mxu0 0
  %3483 = vmatpush1.bf16.msra.mxu0 0
  %3484 = vmatprep.subr.bf16.mxu0 0
  %3485 = vmatpush1.bf16.msra.mxu0 0
  %3486 = vmatprep.subr.bf16.mxu0 0
  %3487 = vmatpush1.bf16.msra.mxu0 0
  %3488 = vmatprep.subr.bf16.mxu0 0
  %3489 = vmatpush1.bf16.msra.mxu0 0
  %3490 = vmatprep.subr.bf16.mxu0 0
  %3491 = vmatpush1.bf16.msra.mxu0 0
  %3492 = vmatprep.subr.bf16.mxu0 0
  %3493 = vmatpush1.bf16.msra.mxu0 0
  %3494 = vmatprep.subr.bf16.mxu0 0
  %3495 = vmatpush1.bf16.msra.mxu0 0
  %3496 = vmatprep.subr.bf16.mxu0 0
  %3497 = vmatpush1.bf16.msra.mxu0 0
  %3498 = vmatprep.subr.bf16.mxu0 0
  %3499 = vmatpush1.bf16.msra.mxu0 0
  %3500 = vmatprep.subr.bf16.mxu0 0
  %3501 = vmatpush1.bf16.msra.mxu0 0
  %3502 = vmatprep.mubr.bf16.mxu0 0
  %3503 = vmatmul.mubr.bf16.gmra.mrb[0].mxu0 %v3468
  %v3504 = vpop.f32.mrb[0].mxu0
  %v3505 = vadd.f32 0.0, %v3504
  %v3506 = vpop.f32.mrb[0].mxu0
  %v3507 = vpop.f32.mrb[0].mxu0
  %v3508 = vadd.f32 0.0, %v3507
  %v3509 = vpop.f32.mrb[0].mxu0
  %3510 = vdwg.mxu0
  %3513 = vrot.lane.b32.xlu0 %v3411, 8
  %v3514 = vpop.permute.xlu0 %3513
  %3515 = vrot.lane.b32.xlu0 %v3414, 8
  %v3516 = vpop.permute.xlu0 %3515
  %3521 = vrot.lane.b32.xlu0 %v3458, 16
  %v3522 = vpop.permute.xlu0 %3521
  %3523 = vrot.lane.b32.xlu0 %v3461, 16
  %v3524 = vpop.permute.xlu0 %3523
  %3529 = vrot.lane.b32.xlu0 %v3505, 24
  %v3530 = vpop.permute.xlu0 %3529
  %3531 = vrot.lane.b32.xlu0 %v3508, 24
  %v3532 = vpop.permute.xlu0 %3531
  %v3535 = vsel %vm236, %v3364, %v3514
  %v3536 = vsel %vm236, %v3367, %v3516
  %v3537 = vsel %vm445, %v3535, %v3522
  %v3538 = vsel %vm445, %v3536, %v3524
  %v3539 = vsel %vm754, %v3537, %v3530
  %v3540 = vsel %vm754, %v3538, %v3532
  %v3541 = vpack.c.bf16 %v3540, %v3539
  %s3542 = scalar_lea.vmem %s6, 16
  %v3543 = vld [vmem:[%s3542] sm:$0xf]
  %v3544 = vld [vmem:[%s3542 + $0x4] sm:$0xf]
  %v3545 = vld [vmem:[%s3542 + $0x8] sm:$0xf]
  %v3546 = vld [vmem:[%s3542 + $0xc] sm:$0xf]
  %s3547 = scalar_lea.vmem %s7, 1
  %v3548 = vld [vmem:[%s3547] sm:$0x1]
  %v3550 = vlaneseq
  %v3551 = vshrl.u32 %v3550, 7
  %v3552 = vsub.s32 0, %v3551
  %v3553 = vrot.slane %v3548, %v3552
  %v3559 = vunpack.c.l.b16 %v3543
  %v3560 = vunpack.c.l.b16 %v3544
  %v3561 = vunpack.c.l.b16 %v3545
  %v3562 = vunpack.c.l.b16 %v3546
  %v3563 = vpack.c.b16 %v3560, %v3559
  %v3564 = vpack.c.b16 %v3562, %v3561
  %v3568 = vsel %vm187, %v3541, 0
  %3570 = vmatprep.subr.bf16.mxu0 0
  %3571 = vmatpush1.bf16.msra.mxu0 %v3563
  %3572 = vmatprep.subr.bf16.mxu0 0
  %3573 = vmatpush1.bf16.msra.mxu0 %v3564
  %3574 = vmatprep.subr.bf16.mxu0 0
  %3575 = vmatpush1.bf16.msra.mxu0 0
  %3576 = vmatprep.subr.bf16.mxu0 0
  %3577 = vmatpush1.bf16.msra.mxu0 0
  %3578 = vmatprep.subr.bf16.mxu0 0
  %3579 = vmatpush1.bf16.msra.mxu0 0
  %3580 = vmatprep.subr.bf16.mxu0 0
  %3581 = vmatpush1.bf16.msra.mxu0 0
  %3582 = vmatprep.subr.bf16.mxu0 0
  %3583 = vmatpush1.bf16.msra.mxu0 0
  %3584 = vmatprep.subr.bf16.mxu0 0
  %3585 = vmatpush1.bf16.msra.mxu0 0
  %3586 = vmatprep.subr.bf16.mxu0 0
  %3587 = vmatpush1.bf16.msra.mxu0 0
  %3588 = vmatprep.subr.bf16.mxu0 0
  %3589 = vmatpush1.bf16.msra.mxu0 0
  %3590 = vmatprep.subr.bf16.mxu0 0
  %3591 = vmatpush1.bf16.msra.mxu0 0
  %3592 = vmatprep.subr.bf16.mxu0 0
  %3593 = vmatpush1.bf16.msra.mxu0 0
  %3594 = vmatprep.subr.bf16.mxu0 0
  %3595 = vmatpush1.bf16.msra.mxu0 0
  %3596 = vmatprep.subr.bf16.mxu0 0
  %3597 = vmatpush1.bf16.msra.mxu0 0
  %3598 = vmatprep.subr.bf16.mxu0 0
  %3599 = vmatpush1.bf16.msra.mxu0 0
  %3600 = vmatprep.subr.bf16.mxu0 0
  %3601 = vmatpush1.bf16.msra.mxu0 0
  %3602 = vmatprep.mubr.bf16.mxu0 0
  %3603 = vmatmul.mubr.bf16.gmra.mrb[0].mxu0 %v3568
  %v3604 = vpop.f32.mrb[0].mxu0
  %v3605 = vadd.f32 %v3553, %v3604
  %v3606 = vpop.f32.mrb[0].mxu0
  %v3607 = vpop.f32.mrb[0].mxu0
  %v3608 = vadd.f32 %v3553, %v3607
  %v3609 = vpop.f32.mrb[0].mxu0
  %3610 = vdwg.mxu0
  %v3611 = vadd.f32 %v2947, %v3605
  %v3612 = vadd.f32 %v2948, %v3608
  %s3613 = scalar_lea.vmem %s8, 1
  %v3614 = vld [vmem:[%s3613] sm:$0x1]
  %s3615 = scalar_lea.vmem %s9, 1
  %v3616 = vld [vmem:[%s3615] sm:$0x1]
  %v3617 = vsel %vm187, %v3611, 0.0
  %3618 = vadd.xlane.f32.xlu0 %v3617
  %v3619 = vpop.xlane.xlu0 %3618
  %v3620 = vsel %vm187, %v3612, 0.0
  %3621 = vadd.xlane.f32.xlu0 %v3620
  %v3622 = vpop.xlane.xlu0 %3621
  %v3623 = vmul.f32 %v3619, %v835
  %v3624 = vmul.f32 %v3622, %v835
  %v3625 = vsub.f32 %v3611, %v3623
  %v3626 = vsub.f32 %v3612, %v3624
  %v3627 = vmul.f32 %v3625, %v3625
  %v3628 = vmul.f32 %v3626, %v3626
  %v3629 = vsel %vm187, %v3627, 0.0
  %3630 = vadd.xlane.f32.xlu0 %v3629
  %v3631 = vpop.xlane.xlu0 %3630
  %v3632 = vsel %vm187, %v3628, 0.0
  %3633 = vadd.xlane.f32.xlu0 %v3632
  %v3634 = vpop.xlane.xlu0 %3633
  %v3635 = vmul.f32 %v3631, %v835
  %v3636 = vmul.f32 %v3634, %v835
  %v3637 = vadd.f32 %v3635, 1e-05
  %v3638 = vadd.f32 %v3636, 1e-05
  %v3639 = vrsqrt.pop %v3637
  %v3640 = vrsqrt.pop %v3638
  %v3641 = vmul.f32 %v3625, %v3639
  %v3642 = vmul.f32 %v3626, %v3640
  %v3644 = vlaneseq
  %v3645 = vshrl.u32 %v3644, 7
  %v3646 = vsub.s32 0, %v3645
  %v3647 = vrot.slane %v3614, %v3646
  %v3649 = vmul.f32 %v3641, %v3647
  %v3650 = vmul.f32 %v3642, %v3647
  %v3652 = vlaneseq
  %v3653 = vshrl.u32 %v3652, 7
  %v3654 = vsub.s32 0, %v3653
  %v3655 = vrot.slane %v3616, %v3654
  %v3657 = vadd.f32 %v3649, %v3655
  %v3658 = vadd.f32 %v3650, %v3655
  %v3659 = vpack.c.bf16 %v3658, %v3657
  %s3660 = scalar_lea.vmem %s20, 256
  %v3661 = vld [vmem:[%s3660] sm:$0xff]
  %v3662 = vld [vmem:[%s3660 + $0x8] sm:$0xff]
  %v3663 = vld [vmem:[%s3660 + $0x10] sm:$0xff]
  %v3664 = vld [vmem:[%s3660 + $0x18] sm:$0xff]
  %v3665 = vld [vmem:[%s3660 + $0x20] sm:$0xff]
  %v3666 = vld [vmem:[%s3660 + $0x28] sm:$0xff]
  %v3667 = vld [vmem:[%s3660 + $0x30] sm:$0xff]
  %v3668 = vld [vmem:[%s3660 + $0x38] sm:$0xff]
  %v3669 = vld [vmem:[%s3660 + $0x40] sm:$0xff]
  %v3670 = vld [vmem:[%s3660 + $0x48] sm:$0xff]
  %v3671 = vld [vmem:[%s3660 + $0x50] sm:$0xff]
  %v3672 = vld [vmem:[%s3660 + $0x58] sm:$0xff]
  %v3673 = vld [vmem:[%s3660 + $0x60] sm:$0xff]
  %v3674 = vld [vmem:[%s3660 + $0x68] sm:$0xff]
  %v3675 = vld [vmem:[%s3660 + $0x70] sm:$0xff]
  %v3676 = vld [vmem:[%s3660 + $0x78] sm:$0xff]
  %v3677 = vld [vmem:[%s3660 + $0x80] sm:$0xff]
  %v3678 = vld [vmem:[%s3660 + $0x88] sm:$0xff]
  %v3679 = vld [vmem:[%s3660 + $0x90] sm:$0xff]
  %v3680 = vld [vmem:[%s3660 + $0x98] sm:$0xff]
  %v3681 = vld [vmem:[%s3660 + $0xa0] sm:$0xff]
  %v3682 = vld [vmem:[%s3660 + $0xa8] sm:$0xff]
  %v3683 = vld [vmem:[%s3660 + $0xb0] sm:$0xff]
  %v3684 = vld [vmem:[%s3660 + $0xb8] sm:$0xff]
  %v3685 = vld [vmem:[%s3660 + $0xc0] sm:$0xff]
  %v3686 = vld [vmem:[%s3660 + $0xc8] sm:$0xff]
  %v3687 = vld [vmem:[%s3660 + $0xd0] sm:$0xff]
  %v3688 = vld [vmem:[%s3660 + $0xd8] sm:$0xff]
  %v3689 = vld [vmem:[%s3660 + $0xe0] sm:$0xff]
  %v3690 = vld [vmem:[%s3660 + $0xe8] sm:$0xff]
  %v3691 = vld [vmem:[%s3660 + $0xf0] sm:$0xff]
  %v3692 = vld [vmem:[%s3660 + $0xf8] sm:$0xff]
  %s3693 = scalar_lea.vmem %s10, 16
  %v3694 = vld [vmem:[%s3693] sm:$0xff]
  %v3695 = vld [vmem:[%s3693 + $0x8] sm:$0xff]
  %v3698 = vlaneseq
  %v3699 = vshrl.u32 %v3698, 7
  %v3700 = vsub.s32 0, %v3699
  %v3701 = vrot.slane %v3694, %v3700
  %v3702 = vlaneseq
  %v3703 = vshrl.u32 %v3702, 7
  %v3704 = vsub.s32 1, %v3703
  %v3705 = vrot.slane %v3694, %v3704
  %v3706 = vlaneseq
  %v3707 = vshrl.u32 %v3706, 7
  %v3708 = vsub.s32 2, %v3707
  %v3709 = vrot.slane %v3694, %v3708
  %v3710 = vlaneseq
  %v3711 = vshrl.u32 %v3710, 7
  %v3712 = vsub.s32 3, %v3711
  %v3713 = vrot.slane %v3694, %v3712
  %v3714 = vlaneseq
  %v3715 = vshrl.u32 %v3714, 7
  %v3716 = vsub.s32 4, %v3715
  %v3717 = vrot.slane %v3694, %v3716
  %v3718 = vlaneseq
  %v3719 = vshrl.u32 %v3718, 7
  %v3720 = vsub.s32 5, %v3719
  %v3721 = vrot.slane %v3694, %v3720
  %v3722 = vlaneseq
  %v3723 = vshrl.u32 %v3722, 7
  %v3724 = vsub.s32 6, %v3723
  %v3725 = vrot.slane %v3694, %v3724
  %v3726 = vlaneseq
  %v3727 = vshrl.u32 %v3726, 7
  %v3728 = vsub.s32 7, %v3727
  %v3729 = vrot.slane %v3694, %v3728
  %v3730 = vlaneseq
  %v3731 = vshrl.u32 %v3730, 7
  %v3732 = vsub.s32 0, %v3731
  %v3733 = vrot.slane %v3695, %v3732
  %v3734 = vlaneseq
  %v3735 = vshrl.u32 %v3734, 7
  %v3736 = vsub.s32 1, %v3735
  %v3737 = vrot.slane %v3695, %v3736
  %v3738 = vlaneseq
  %v3739 = vshrl.u32 %v3738, 7
  %v3740 = vsub.s32 2, %v3739
  %v3741 = vrot.slane %v3695, %v3740
  %v3742 = vlaneseq
  %v3743 = vshrl.u32 %v3742, 7
  %v3744 = vsub.s32 3, %v3743
  %v3745 = vrot.slane %v3695, %v3744
  %v3746 = vlaneseq
  %v3747 = vshrl.u32 %v3746, 7
  %v3748 = vsub.s32 4, %v3747
  %v3749 = vrot.slane %v3695, %v3748
  %v3750 = vlaneseq
  %v3751 = vshrl.u32 %v3750, 7
  %v3752 = vsub.s32 5, %v3751
  %v3753 = vrot.slane %v3695, %v3752
  %v3754 = vlaneseq
  %v3755 = vshrl.u32 %v3754, 7
  %v3756 = vsub.s32 6, %v3755
  %v3757 = vrot.slane %v3695, %v3756
  %v3758 = vlaneseq
  %v3759 = vshrl.u32 %v3758, 7
  %v3760 = vsub.s32 7, %v3759
  %v3761 = vrot.slane %v3695, %v3760
  %v3810 = vunpack.c.l.b16 %v3661
  %v3811 = vunpack.c.h.b16 %v3661
  %v3812 = vunpack.c.l.b16 %v3662
  %v3813 = vunpack.c.h.b16 %v3662
  %v3814 = vunpack.c.l.b16 %v3663
  %v3815 = vunpack.c.h.b16 %v3663
  %v3816 = vunpack.c.l.b16 %v3664
  %v3817 = vunpack.c.h.b16 %v3664
  %v3818 = vunpack.c.l.b16 %v3665
  %v3819 = vunpack.c.h.b16 %v3665
  %v3820 = vunpack.c.l.b16 %v3666
  %v3821 = vunpack.c.h.b16 %v3666
  %v3822 = vunpack.c.l.b16 %v3667
  %v3823 = vunpack.c.h.b16 %v3667
  %v3824 = vunpack.c.l.b16 %v3668
  %v3825 = vunpack.c.h.b16 %v3668
  %v3826 = vunpack.c.l.b16 %v3669
  %v3827 = vunpack.c.h.b16 %v3669
  %v3828 = vunpack.c.l.b16 %v3670
  %v3829 = vunpack.c.h.b16 %v3670
  %v3830 = vunpack.c.l.b16 %v3671
  %v3831 = vunpack.c.h.b16 %v3671
  %v3832 = vunpack.c.l.b16 %v3672
  %v3833 = vunpack.c.h.b16 %v3672
  %v3834 = vunpack.c.l.b16 %v3673
  %v3835 = vunpack.c.h.b16 %v3673
  %v3836 = vunpack.c.l.b16 %v3674
  %v3837 = vunpack.c.h.b16 %v3674
  %v3838 = vunpack.c.l.b16 %v3675
  %v3839 = vunpack.c.h.b16 %v3675
  %v3840 = vunpack.c.l.b16 %v3676
  %v3841 = vunpack.c.h.b16 %v3676
  %v3842 = vunpack.c.l.b16 %v3677
  %v3843 = vunpack.c.h.b16 %v3677
  %v3844 = vunpack.c.l.b16 %v3678
  %v3845 = vunpack.c.h.b16 %v3678
  %v3846 = vunpack.c.l.b16 %v3679
  %v3847 = vunpack.c.h.b16 %v3679
  %v3848 = vunpack.c.l.b16 %v3680
  %v3849 = vunpack.c.h.b16 %v3680
  %v3850 = vunpack.c.l.b16 %v3681
  %v3851 = vunpack.c.h.b16 %v3681
  %v3852 = vunpack.c.l.b16 %v3682
  %v3853 = vunpack.c.h.b16 %v3682
  %v3854 = vunpack.c.l.b16 %v3683
  %v3855 = vunpack.c.h.b16 %v3683
  %v3856 = vunpack.c.l.b16 %v3684
  %v3857 = vunpack.c.h.b16 %v3684
  %v3858 = vunpack.c.l.b16 %v3685
  %v3859 = vunpack.c.h.b16 %v3685
  %v3860 = vunpack.c.l.b16 %v3686
  %v3861 = vunpack.c.h.b16 %v3686
  %v3862 = vunpack.c.l.b16 %v3687
  %v3863 = vunpack.c.h.b16 %v3687
  %v3864 = vunpack.c.l.b16 %v3688
  %v3865 = vunpack.c.h.b16 %v3688
  %v3866 = vunpack.c.l.b16 %v3689
  %v3867 = vunpack.c.h.b16 %v3689
  %v3868 = vunpack.c.l.b16 %v3690
  %v3869 = vunpack.c.h.b16 %v3690
  %v3870 = vunpack.c.l.b16 %v3691
  %v3871 = vunpack.c.h.b16 %v3691
  %v3872 = vunpack.c.l.b16 %v3692
  %v3873 = vunpack.c.h.b16 %v3692
  %v3874 = vpack.c.b16 %v3826, %v3810
  %v3875 = vpack.c.b16 %v3827, %v3811
  %v3876 = vpack.c.b16 %v3828, %v3812
  %v3877 = vpack.c.b16 %v3829, %v3813
  %v3878 = vpack.c.b16 %v3830, %v3814
  %v3879 = vpack.c.b16 %v3831, %v3815
  %v3880 = vpack.c.b16 %v3832, %v3816
  %v3881 = vpack.c.b16 %v3833, %v3817
  %v3882 = vpack.c.b16 %v3834, %v3818
  %v3883 = vpack.c.b16 %v3835, %v3819
  %v3884 = vpack.c.b16 %v3836, %v3820
  %v3885 = vpack.c.b16 %v3837, %v3821
  %v3886 = vpack.c.b16 %v3838, %v3822
  %v3887 = vpack.c.b16 %v3839, %v3823
  %v3888 = vpack.c.b16 %v3840, %v3824
  %v3889 = vpack.c.b16 %v3841, %v3825
  %v3890 = vpack.c.b16 %v3858, %v3842
  %v3891 = vpack.c.b16 %v3859, %v3843
  %v3892 = vpack.c.b16 %v3860, %v3844
  %v3893 = vpack.c.b16 %v3861, %v3845
  %v3894 = vpack.c.b16 %v3862, %v3846
  %v3895 = vpack.c.b16 %v3863, %v3847
  %v3896 = vpack.c.b16 %v3864, %v3848
  %v3897 = vpack.c.b16 %v3865, %v3849
  %v3898 = vpack.c.b16 %v3866, %v3850
  %v3899 = vpack.c.b16 %v3867, %v3851
  %v3900 = vpack.c.b16 %v3868, %v3852
  %v3901 = vpack.c.b16 %v3869, %v3853
  %v3902 = vpack.c.b16 %v3870, %v3854
  %v3903 = vpack.c.b16 %v3871, %v3855
  %v3904 = vpack.c.b16 %v3872, %v3856
  %v3905 = vpack.c.b16 %v3873, %v3857
  %v3939 = vsel %vm187, %v3659, 0
  %3941 = vmatprep.subr.bf16.mxu0 %v3875
  %3942 = vmatpush1.bf16.msra.mxu0 %v3874
  %3943 = vmatprep.subr.bf16.mxu0 %v3891
  %3944 = vmatpush1.bf16.msra.mxu0 %v3890
  %3945 = vmatprep.subr.bf16.mxu0 0
  %3946 = vmatpush1.bf16.msra.mxu0 0
  %3947 = vmatprep.subr.bf16.mxu0 0
  %3948 = vmatpush1.bf16.msra.mxu0 0
  %3949 = vmatprep.subr.bf16.mxu0 0
  %3950 = vmatpush1.bf16.msra.mxu0 0
  %3951 = vmatprep.subr.bf16.mxu0 0
  %3952 = vmatpush1.bf16.msra.mxu0 0
  %3953 = vmatprep.subr.bf16.mxu0 0
  %3954 = vmatpush1.bf16.msra.mxu0 0
  %3955 = vmatprep.subr.bf16.mxu0 0
  %3956 = vmatpush1.bf16.msra.mxu0 0
  %3957 = vmatprep.subr.bf16.mxu0 0
  %3958 = vmatpush1.bf16.msra.mxu0 0
  %3959 = vmatprep.subr.bf16.mxu0 0
  %3960 = vmatpush1.bf16.msra.mxu0 0
  %3961 = vmatprep.subr.bf16.mxu0 0
  %3962 = vmatpush1.bf16.msra.mxu0 0
  %3963 = vmatprep.subr.bf16.mxu0 0
  %3964 = vmatpush1.bf16.msra.mxu0 0
  %3965 = vmatprep.subr.bf16.mxu0 0
  %3966 = vmatpush1.bf16.msra.mxu0 0
  %3967 = vmatprep.subr.bf16.mxu0 0
  %3968 = vmatpush1.bf16.msra.mxu0 0
  %3969 = vmatprep.subr.bf16.mxu0 0
  %3970 = vmatpush1.bf16.msra.mxu0 0
  %3971 = vmatprep.subr.bf16.mxu0 0
  %3972 = vmatpush1.bf16.msra.mxu0 0
  %3973 = vmatprep.mubr.bf16.mxu0 0
  %3974 = vmatmul.mubr.bf16.gmra.mrb[0].mxu0 %v3939
  %v3975 = vpop.f32.mrb[0].mxu0
  %v3976 = vadd.f32 %v3701, %v3975
  %v3977 = vpop.f32.mrb[0].mxu0
  %v3978 = vadd.f32 %v3705, %v3977
  %v3979 = vpop.f32.mrb[0].mxu0
  %v3980 = vadd.f32 %v3701, %v3979
  %v3981 = vpop.f32.mrb[0].mxu0
  %v3982 = vadd.f32 %v3705, %v3981
  %3983 = vdwg.mxu0
  %3984 = vmatprep.subr.bf16.mxu0 %v3877
  %3985 = vmatpush1.bf16.msra.mxu0 %v3876
  %3986 = vmatprep.subr.bf16.mxu0 %v3893
  %3987 = vmatpush1.bf16.msra.mxu0 %v3892
  %3988 = vmatprep.subr.bf16.mxu0 0
  %3989 = vmatpush1.bf16.msra.mxu0 0
  %3990 = vmatprep.subr.bf16.mxu0 0
  %3991 = vmatpush1.bf16.msra.mxu0 0
  %3992 = vmatprep.subr.bf16.mxu0 0
  %3993 = vmatpush1.bf16.msra.mxu0 0
  %3994 = vmatprep.subr.bf16.mxu0 0
  %3995 = vmatpush1.bf16.msra.mxu0 0
  %3996 = vmatprep.subr.bf16.mxu0 0
  %3997 = vmatpush1.bf16.msra.mxu0 0
  %3998 = vmatprep.subr.bf16.mxu0 0
  %3999 = vmatpush1.bf16.msra.mxu0 0
  %4000 = vmatprep.subr.bf16.mxu0 0
  %4001 = vmatpush1.bf16.msra.mxu0 0
  %4002 = vmatprep.subr.bf16.mxu0 0
  %4003 = vmatpush1.bf16.msra.mxu0 0
  %4004 = vmatprep.subr.bf16.mxu0 0
  %4005 = vmatpush1.bf16.msra.mxu0 0
  %4006 = vmatprep.subr.bf16.mxu0 0
  %4007 = vmatpush1.bf16.msra.mxu0 0
  %4008 = vmatprep.subr.bf16.mxu0 0
  %4009 = vmatpush1.bf16.msra.mxu0 0
  %4010 = vmatprep.subr.bf16.mxu0 0
  %4011 = vmatpush1.bf16.msra.mxu0 0
  %4012 = vmatprep.subr.bf16.mxu0 0
  %4013 = vmatpush1.bf16.msra.mxu0 0
  %4014 = vmatprep.subr.bf16.mxu0 0
  %4015 = vmatpush1.bf16.msra.mxu0 0
  %4016 = vmatprep.mubr.bf16.mxu0 0
  %4017 = vmatmul.mubr.bf16.gmra.mrb[0].mxu0 %v3939
  %v4018 = vpop.f32.mrb[0].mxu0
  %v4019 = vadd.f32 %v3709, %v4018
  %v4020 = vpop.f32.mrb[0].mxu0
  %v4021 = vadd.f32 %v3713, %v4020
  %v4022 = vpop.f32.mrb[0].mxu0
  %v4023 = vadd.f32 %v3709, %v4022
  %v4024 = vpop.f32.mrb[0].mxu0
  %v4025 = vadd.f32 %v3713, %v4024
  %4026 = vdwg.mxu0
  %4027 = vmatprep.subr.bf16.mxu0 %v3879
  %4028 = vmatpush1.bf16.msra.mxu0 %v3878
  %4029 = vmatprep.subr.bf16.mxu0 %v3895
  %4030 = vmatpush1.bf16.msra.mxu0 %v3894
  %4031 = vmatprep.subr.bf16.mxu0 0
  %4032 = vmatpush1.bf16.msra.mxu0 0
  %4033 = vmatprep.subr.bf16.mxu0 0
  %4034 = vmatpush1.bf16.msra.mxu0 0
  %4035 = vmatprep.subr.bf16.mxu0 0
  %4036 = vmatpush1.bf16.msra.mxu0 0
  %4037 = vmatprep.subr.bf16.mxu0 0
  %4038 = vmatpush1.bf16.msra.mxu0 0
  %4039 = vmatprep.subr.bf16.mxu0 0
  %4040 = vmatpush1.bf16.msra.mxu0 0
  %4041 = vmatprep.subr.bf16.mxu0 0
  %4042 = vmatpush1.bf16.msra.mxu0 0
  %4043 = vmatprep.subr.bf16.mxu0 0
  %4044 = vmatpush1.bf16.msra.mxu0 0
  %4045 = vmatprep.subr.bf16.mxu0 0
  %4046 = vmatpush1.bf16.msra.mxu0 0
  %4047 = vmatprep.subr.bf16.mxu0 0
  %4048 = vmatpush1.bf16.msra.mxu0 0
  %4049 = vmatprep.subr.bf16.mxu0 0
  %4050 = vmatpush1.bf16.msra.mxu0 0
  %4051 = vmatprep.subr.bf16.mxu0 0
  %4052 = vmatpush1.bf16.msra.mxu0 0
  %4053 = vmatprep.subr.bf16.mxu0 0
  %4054 = vmatpush1.bf16.msra.mxu0 0
  %4055 = vmatprep.subr.bf16.mxu0 0
  %4056 = vmatpush1.bf16.msra.mxu0 0
  %4057 = vmatprep.subr.bf16.mxu0 0
  %4058 = vmatpush1.bf16.msra.mxu0 0
  %4059 = vmatprep.mubr.bf16.mxu0 0
  %4060 = vmatmul.mubr.bf16.gmra.mrb[0].mxu0 %v3939
  %v4061 = vpop.f32.mrb[0].mxu0
  %v4062 = vadd.f32 %v3717, %v4061
  %v4063 = vpop.f32.mrb[0].mxu0
  %v4064 = vadd.f32 %v3721, %v4063
  %v4065 = vpop.f32.mrb[0].mxu0
  %v4066 = vadd.f32 %v3717, %v4065
  %v4067 = vpop.f32.mrb[0].mxu0
  %v4068 = vadd.f32 %v3721, %v4067
  %4069 = vdwg.mxu0
  %4070 = vmatprep.subr.bf16.mxu0 %v3881
  %4071 = vmatpush1.bf16.msra.mxu0 %v3880
  %4072 = vmatprep.subr.bf16.mxu0 %v3897
  %4073 = vmatpush1.bf16.msra.mxu0 %v3896
  %4074 = vmatprep.subr.bf16.mxu0 0
  %4075 = vmatpush1.bf16.msra.mxu0 0
  %4076 = vmatprep.subr.bf16.mxu0 0
  %4077 = vmatpush1.bf16.msra.mxu0 0
  %4078 = vmatprep.subr.bf16.mxu0 0
  %4079 = vmatpush1.bf16.msra.mxu0 0
  %4080 = vmatprep.subr.bf16.mxu0 0
  %4081 = vmatpush1.bf16.msra.mxu0 0
  %4082 = vmatprep.subr.bf16.mxu0 0
  %4083 = vmatpush1.bf16.msra.mxu0 0
  %4084 = vmatprep.subr.bf16.mxu0 0
  %4085 = vmatpush1.bf16.msra.mxu0 0
  %4086 = vmatprep.subr.bf16.mxu0 0
  %4087 = vmatpush1.bf16.msra.mxu0 0
  %4088 = vmatprep.subr.bf16.mxu0 0
  %4089 = vmatpush1.bf16.msra.mxu0 0
  %4090 = vmatprep.subr.bf16.mxu0 0
  %4091 = vmatpush1.bf16.msra.mxu0 0
  %4092 = vmatprep.subr.bf16.mxu0 0
  %4093 = vmatpush1.bf16.msra.mxu0 0
  %4094 = vmatprep.subr.bf16.mxu0 0
  %4095 = vmatpush1.bf16.msra.mxu0 0
  %4096 = vmatprep.subr.bf16.mxu0 0
  %4097 = vmatpush1.bf16.msra.mxu0 0
  %4098 = vmatprep.subr.bf16.mxu0 0
  %4099 = vmatpush1.bf16.msra.mxu0 0
  %4100 = vmatprep.subr.bf16.mxu0 0
  %4101 = vmatpush1.bf16.msra.mxu0 0
  %4102 = vmatprep.mubr.bf16.mxu0 0
  %4103 = vmatmul.mubr.bf16.gmra.mrb[0].mxu0 %v3939
  %v4104 = vpop.f32.mrb[0].mxu0
  %v4105 = vadd.f32 %v3725, %v4104
  %v4106 = vpop.f32.mrb[0].mxu0
  %v4107 = vadd.f32 %v3729, %v4106
  %v4108 = vpop.f32.mrb[0].mxu0
  %v4109 = vadd.f32 %v3725, %v4108
  %v4110 = vpop.f32.mrb[0].mxu0
  %v4111 = vadd.f32 %v3729, %v4110
  %4112 = vdwg.mxu0
  %4113 = vmatprep.subr.bf16.mxu0 %v3883
  %4114 = vmatpush1.bf16.msra.mxu0 %v3882
  %4115 = vmatprep.subr.bf16.mxu0 %v3899
  %4116 = vmatpush1.bf16.msra.mxu0 %v3898
  %4117 = vmatprep.subr.bf16.mxu0 0
  %4118 = vmatpush1.bf16.msra.mxu0 0
  %4119 = vmatprep.subr.bf16.mxu0 0
  %4120 = vmatpush1.bf16.msra.mxu0 0
  %4121 = vmatprep.subr.bf16.mxu0 0
  %4122 = vmatpush1.bf16.msra.mxu0 0
  %4123 = vmatprep.subr.bf16.mxu0 0
  %4124 = vmatpush1.bf16.msra.mxu0 0
  %4125 = vmatprep.subr.bf16.mxu0 0
  %4126 = vmatpush1.bf16.msra.mxu0 0
  %4127 = vmatprep.subr.bf16.mxu0 0
  %4128 = vmatpush1.bf16.msra.mxu0 0
  %4129 = vmatprep.subr.bf16.mxu0 0
  %4130 = vmatpush1.bf16.msra.mxu0 0
  %4131 = vmatprep.subr.bf16.mxu0 0
  %4132 = vmatpush1.bf16.msra.mxu0 0
  %4133 = vmatprep.subr.bf16.mxu0 0
  %4134 = vmatpush1.bf16.msra.mxu0 0
  %4135 = vmatprep.subr.bf16.mxu0 0
  %4136 = vmatpush1.bf16.msra.mxu0 0
  %4137 = vmatprep.subr.bf16.mxu0 0
  %4138 = vmatpush1.bf16.msra.mxu0 0
  %4139 = vmatprep.subr.bf16.mxu0 0
  %4140 = vmatpush1.bf16.msra.mxu0 0
  %4141 = vmatprep.subr.bf16.mxu0 0
  %4142 = vmatpush1.bf16.msra.mxu0 0
  %4143 = vmatprep.subr.bf16.mxu0 0
  %4144 = vmatpush1.bf16.msra.mxu0 0
  %4145 = vmatprep.mubr.bf16.mxu0 0
  %4146 = vmatmul.mubr.bf16.gmra.mrb[0].mxu0 %v3939
  %v4147 = vpop.f32.mrb[0].mxu0
  %v4148 = vadd.f32 %v3733, %v4147
  %v4149 = vpop.f32.mrb[0].mxu0
  %v4150 = vadd.f32 %v3737, %v4149
  %v4151 = vpop.f32.mrb[0].mxu0
  %v4152 = vadd.f32 %v3733, %v4151
  %v4153 = vpop.f32.mrb[0].mxu0
  %v4154 = vadd.f32 %v3737, %v4153
  %4155 = vdwg.mxu0
  %4156 = vmatprep.subr.bf16.mxu0 %v3885
  %4157 = vmatpush1.bf16.msra.mxu0 %v3884
  %4158 = vmatprep.subr.bf16.mxu0 %v3901
  %4159 = vmatpush1.bf16.msra.mxu0 %v3900
  %4160 = vmatprep.subr.bf16.mxu0 0
  %4161 = vmatpush1.bf16.msra.mxu0 0
  %4162 = vmatprep.subr.bf16.mxu0 0
  %4163 = vmatpush1.bf16.msra.mxu0 0
  %4164 = vmatprep.subr.bf16.mxu0 0
  %4165 = vmatpush1.bf16.msra.mxu0 0
  %4166 = vmatprep.subr.bf16.mxu0 0
  %4167 = vmatpush1.bf16.msra.mxu0 0
  %4168 = vmatprep.subr.bf16.mxu0 0
  %4169 = vmatpush1.bf16.msra.mxu0 0
  %4170 = vmatprep.subr.bf16.mxu0 0
  %4171 = vmatpush1.bf16.msra.mxu0 0
  %4172 = vmatprep.subr.bf16.mxu0 0
  %4173 = vmatpush1.bf16.msra.mxu0 0
  %4174 = vmatprep.subr.bf16.mxu0 0
  %4175 = vmatpush1.bf16.msra.mxu0 0
  %4176 = vmatprep.subr.bf16.mxu0 0
  %4177 = vmatpush1.bf16.msra.mxu0 0
  %4178 = vmatprep.subr.bf16.mxu0 0
  %4179 = vmatpush1.bf16.msra.mxu0 0
  %4180 = vmatprep.subr.bf16.mxu0 0
  %4181 = vmatpush1.bf16.msra.mxu0 0
  %4182 = vmatprep.subr.bf16.mxu0 0
  %4183 = vmatpush1.bf16.msra.mxu0 0
  %4184 = vmatprep.subr.bf16.mxu0 0
  %4185 = vmatpush1.bf16.msra.mxu0 0
  %4186 = vmatprep.subr.bf16.mxu0 0
  %4187 = vmatpush1.bf16.msra.mxu0 0
  %4188 = vmatprep.mubr.bf16.mxu0 0
  %4189 = vmatmul.mubr.bf16.gmra.mrb[0].mxu0 %v3939
  %v4190 = vpop.f32.mrb[0].mxu0
  %v4191 = vadd.f32 %v3741, %v4190
  %v4192 = vpop.f32.mrb[0].mxu0
  %v4193 = vadd.f32 %v3745, %v4192
  %v4194 = vpop.f32.mrb[0].mxu0
  %v4195 = vadd.f32 %v3741, %v4194
  %v4196 = vpop.f32.mrb[0].mxu0
  %v4197 = vadd.f32 %v3745, %v4196
  %4198 = vdwg.mxu0
  %4199 = vmatprep.subr.bf16.mxu0 %v3887
  %4200 = vmatpush1.bf16.msra.mxu0 %v3886
  %4201 = vmatprep.subr.bf16.mxu0 %v3903
  %4202 = vmatpush1.bf16.msra.mxu0 %v3902
  %4203 = vmatprep.subr.bf16.mxu0 0
  %4204 = vmatpush1.bf16.msra.mxu0 0
  %4205 = vmatprep.subr.bf16.mxu0 0
  %4206 = vmatpush1.bf16.msra.mxu0 0
  %4207 = vmatprep.subr.bf16.mxu0 0
  %4208 = vmatpush1.bf16.msra.mxu0 0
  %4209 = vmatprep.subr.bf16.mxu0 0
  %4210 = vmatpush1.bf16.msra.mxu0 0
  %4211 = vmatprep.subr.bf16.mxu0 0
  %4212 = vmatpush1.bf16.msra.mxu0 0
  %4213 = vmatprep.subr.bf16.mxu0 0
  %4214 = vmatpush1.bf16.msra.mxu0 0
  %4215 = vmatprep.subr.bf16.mxu0 0
  %4216 = vmatpush1.bf16.msra.mxu0 0
  %4217 = vmatprep.subr.bf16.mxu0 0
  %4218 = vmatpush1.bf16.msra.mxu0 0
  %4219 = vmatprep.subr.bf16.mxu0 0
  %4220 = vmatpush1.bf16.msra.mxu0 0
  %4221 = vmatprep.subr.bf16.mxu0 0
  %4222 = vmatpush1.bf16.msra.mxu0 0
  %4223 = vmatprep.subr.bf16.mxu0 0
  %4224 = vmatpush1.bf16.msra.mxu0 0
  %4225 = vmatprep.subr.bf16.mxu0 0
  %4226 = vmatpush1.bf16.msra.mxu0 0
  %4227 = vmatprep.subr.bf16.mxu0 0
  %4228 = vmatpush1.bf16.msra.mxu0 0
  %4229 = vmatprep.subr.bf16.mxu0 0
  %4230 = vmatpush1.bf16.msra.mxu0 0
  %4231 = vmatprep.mubr.bf16.mxu0 0
  %4232 = vmatmul.mubr.bf16.gmra.mrb[0].mxu0 %v3939
  %v4233 = vpop.f32.mrb[0].mxu0
  %v4234 = vadd.f32 %v3749, %v4233
  %v4235 = vpop.f32.mrb[0].mxu0
  %v4236 = vadd.f32 %v3753, %v4235
  %v4237 = vpop.f32.mrb[0].mxu0
  %v4238 = vadd.f32 %v3749, %v4237
  %v4239 = vpop.f32.mrb[0].mxu0
  %v4240 = vadd.f32 %v3753, %v4239
  %4241 = vdwg.mxu0
  %4242 = vmatprep.subr.bf16.mxu0 %v3889
  %4243 = vmatpush1.bf16.msra.mxu0 %v3888
  %4244 = vmatprep.subr.bf16.mxu0 %v3905
  %4245 = vmatpush1.bf16.msra.mxu0 %v3904
  %4246 = vmatprep.subr.bf16.mxu0 0
  %4247 = vmatpush1.bf16.msra.mxu0 0
  %4248 = vmatprep.subr.bf16.mxu0 0
  %4249 = vmatpush1.bf16.msra.mxu0 0
  %4250 = vmatprep.subr.bf16.mxu0 0
  %4251 = vmatpush1.bf16.msra.mxu0 0
  %4252 = vmatprep.subr.bf16.mxu0 0
  %4253 = vmatpush1.bf16.msra.mxu0 0
  %4254 = vmatprep.subr.bf16.mxu0 0
  %4255 = vmatpush1.bf16.msra.mxu0 0
  %4256 = vmatprep.subr.bf16.mxu0 0
  %4257 = vmatpush1.bf16.msra.mxu0 0
  %4258 = vmatprep.subr.bf16.mxu0 0
  %4259 = vmatpush1.bf16.msra.mxu0 0
  %4260 = vmatprep.subr.bf16.mxu0 0
  %4261 = vmatpush1.bf16.msra.mxu0 0
  %4262 = vmatprep.subr.bf16.mxu0 0
  %4263 = vmatpush1.bf16.msra.mxu0 0
  %4264 = vmatprep.subr.bf16.mxu0 0
  %4265 = vmatpush1.bf16.msra.mxu0 0
  %4266 = vmatprep.subr.bf16.mxu0 0
  %4267 = vmatpush1.bf16.msra.mxu0 0
  %4268 = vmatprep.subr.bf16.mxu0 0
  %4269 = vmatpush1.bf16.msra.mxu0 0
  %4270 = vmatprep.subr.bf16.mxu0 0
  %4271 = vmatpush1.bf16.msra.mxu0 0
  %4272 = vmatprep.subr.bf16.mxu0 0
  %4273 = vmatpush1.bf16.msra.mxu0 0
  %4274 = vmatprep.mubr.bf16.mxu0 0
  %4275 = vmatmul.mubr.bf16.gmra.mrb[0].mxu0 %v3939
  %v4276 = vpop.f32.mrb[0].mxu0
  %v4277 = vadd.f32 %v3757, %v4276
  %v4278 = vpop.f32.mrb[0].mxu0
  %v4279 = vadd.f32 %v3761, %v4278
  %v4280 = vpop.f32.mrb[0].mxu0
  %v4281 = vadd.f32 %v3757, %v4280
  %v4282 = vpop.f32.mrb[0].mxu0
  %v4283 = vadd.f32 %v3761, %v4282
  %4284 = vdwg.mxu0
  %v4285 = vmax.f32 %v3976, 0.0
  %v4286 = vmax.f32 %v3978, 0.0
  %v4287 = vmax.f32 %v4019, 0.0
  %v4288 = vmax.f32 %v4021, 0.0
  %v4289 = vmax.f32 %v4062, 0.0
  %v4290 = vmax.f32 %v4064, 0.0
  %v4291 = vmax.f32 %v4105, 0.0
  %v4292 = vmax.f32 %v4107, 0.0
  %v4293 = vmax.f32 %v4148, 0.0
  %v4294 = vmax.f32 %v4150, 0.0
  %v4295 = vmax.f32 %v4191, 0.0
  %v4296 = vmax.f32 %v4193, 0.0
  %v4297 = vmax.f32 %v4234, 0.0
  %v4298 = vmax.f32 %v4236, 0.0
  %v4299 = vmax.f32 %v4277, 0.0
  %v4300 = vmax.f32 %v4279, 0.0
  %v4301 = vmax.f32 %v3980, 0.0
  %v4302 = vmax.f32 %v3982, 0.0
  %v4303 = vmax.f32 %v4023, 0.0
  %v4304 = vmax.f32 %v4025, 0.0
  %v4305 = vmax.f32 %v4066, 0.0
  %v4306 = vmax.f32 %v4068, 0.0
  %v4307 = vmax.f32 %v4109, 0.0
  %v4308 = vmax.f32 %v4111, 0.0
  %v4309 = vmax.f32 %v4152, 0.0
  %v4310 = vmax.f32 %v4154, 0.0
  %v4311 = vmax.f32 %v4195, 0.0
  %v4312 = vmax.f32 %v4197, 0.0
  %v4313 = vmax.f32 %v4238, 0.0
  %v4314 = vmax.f32 %v4240, 0.0
  %v4315 = vmax.f32 %v4281, 0.0
  %v4316 = vmax.f32 %v4283, 0.0
  %v4317 = vpack.c.bf16 %v4301, %v4285
  %v4318 = vpack.c.bf16 %v4302, %v4286
  %v4319 = vpack.c.bf16 %v4303, %v4287
  %v4320 = vpack.c.bf16 %v4304, %v4288
  %v4321 = vpack.c.bf16 %v4305, %v4289
  %v4322 = vpack.c.bf16 %v4306, %v4290
  %v4323 = vpack.c.bf16 %v4307, %v4291
  %v4324 = vpack.c.bf16 %v4308, %v4292
  %v4325 = vpack.c.bf16 %v4309, %v4293
  %v4326 = vpack.c.bf16 %v4310, %v4294
  %v4327 = vpack.c.bf16 %v4311, %v4295
  %v4328 = vpack.c.bf16 %v4312, %v4296
  %v4329 = vpack.c.bf16 %v4313, %v4297
  %v4330 = vpack.c.bf16 %v4314, %v4298
  %v4331 = vpack.c.bf16 %v4315, %v4299
  %v4332 = vpack.c.bf16 %v4316, %v4300
  %s4333 = scalar_lea.vmem %s21, 1024
  %v4334 = vld [vmem:[%s4333] sm:$0xf]
  %v4335 = vld [vmem:[%s4333 + $0x4] sm:$0xf]
  %v4336 = vld [vmem:[%s4333 + $0x8] sm:$0xf]
  %v4337 = vld [vmem:[%s4333 + $0xc] sm:$0xf]
  %v4338 = vld [vmem:[%s4333 + $0x10] sm:$0xf]
  %v4339 = vld [vmem:[%s4333 + $0x14] sm:$0xf]
  %v4340 = vld [vmem:[%s4333 + $0x18] sm:$0xf]
  %v4341 = vld [vmem:[%s4333 + $0x1c] sm:$0xf]
  %v4342 = vld [vmem:[%s4333 + $0x20] sm:$0xf]
  %v4343 = vld [vmem:[%s4333 + $0x24] sm:$0xf]
  %v4344 = vld [vmem:[%s4333 + $0x28] sm:$0xf]
  %v4345 = vld [vmem:[%s4333 + $0x2c] sm:$0xf]
  %v4346 = vld [vmem:[%s4333 + $0x30] sm:$0xf]
  %v4347 = vld [vmem:[%s4333 + $0x34] sm:$0xf]
  %v4348 = vld [vmem:[%s4333 + $0x38] sm:$0xf]
  %v4349 = vld [vmem:[%s4333 + $0x3c] sm:$0xf]
  %v4350 = vld [vmem:[%s4333 + $0x40] sm:$0xf]
  %v4351 = vld [vmem:[%s4333 + $0x44] sm:$0xf]
  %v4352 = vld [vmem:[%s4333 + $0x48] sm:$0xf]
  %v4353 = vld [vmem:[%s4333 + $0x4c] sm:$0xf]
  %v4354 = vld [vmem:[%s4333 + $0x50] sm:$0xf]
  %v4355 = vld [vmem:[%s4333 + $0x54] sm:$0xf]
  %v4356 = vld [vmem:[%s4333 + $0x58] sm:$0xf]
  %v4357 = vld [vmem:[%s4333 + $0x5c] sm:$0xf]
  %v4358 = vld [vmem:[%s4333 + $0x60] sm:$0xf]
  %v4359 = vld [vmem:[%s4333 + $0x64] sm:$0xf]
  %v4360 = vld [vmem:[%s4333 + $0x68] sm:$0xf]
  %v4361 = vld [vmem:[%s4333 + $0x6c] sm:$0xf]
  %v4362 = vld [vmem:[%s4333 + $0x70] sm:$0xf]
  %v4363 = vld [vmem:[%s4333 + $0x74] sm:$0xf]
  %v4364 = vld [vmem:[%s4333 + $0x78] sm:$0xf]
  %v4365 = vld [vmem:[%s4333 + $0x7c] sm:$0xf]
  %v4366 = vld [vmem:[%s4333 + $0x80] sm:$0xf]
  %v4367 = vld [vmem:[%s4333 + $0x84] sm:$0xf]
  %v4368 = vld [vmem:[%s4333 + $0x88] sm:$0xf]
  %v4369 = vld [vmem:[%s4333 + $0x8c] sm:$0xf]
  %v4370 = vld [vmem:[%s4333 + $0x90] sm:$0xf]
  %v4371 = vld [vmem:[%s4333 + $0x94] sm:$0xf]
  %v4372 = vld [vmem:[%s4333 + $0x98] sm:$0xf]
  %v4373 = vld [vmem:[%s4333 + $0x9c] sm:$0xf]
  %v4374 = vld [vmem:[%s4333 + $0xa0] sm:$0xf]
  %v4375 = vld [vmem:[%s4333 + $0xa4] sm:$0xf]
  %v4376 = vld [vmem:[%s4333 + $0xa8] sm:$0xf]
  %v4377 = vld [vmem:[%s4333 + $0xac] sm:$0xf]
  %v4378 = vld [vmem:[%s4333 + $0xb0] sm:$0xf]
  %v4379 = vld [vmem:[%s4333 + $0xb4] sm:$0xf]
  %v4380 = vld [vmem:[%s4333 + $0xb8] sm:$0xf]
  %v4381 = vld [vmem:[%s4333 + $0xbc] sm:$0xf]
  %v4382 = vld [vmem:[%s4333 + $0xc0] sm:$0xf]
  %v4383 = vld [vmem:[%s4333 + $0xc4] sm:$0xf]
  %v4384 = vld [vmem:[%s4333 + $0xc8] sm:$0xf]
  %v4385 = vld [vmem:[%s4333 + $0xcc] sm:$0xf]
  %v4386 = vld [vmem:[%s4333 + $0xd0] sm:$0xf]
  %v4387 = vld [vmem:[%s4333 + $0xd4] sm:$0xf]
  %v4388 = vld [vmem:[%s4333 + $0xd8] sm:$0xf]
  %v4389 = vld [vmem:[%s4333 + $0xdc] sm:$0xf]
  %v4390 = vld [vmem:[%s4333 + $0xe0] sm:$0xf]
  %v4391 = vld [vmem:[%s4333 + $0xe4] sm:$0xf]
  %v4392 = vld [vmem:[%s4333 + $0xe8] sm:$0xf]
  %v4393 = vld [vmem:[%s4333 + $0xec] sm:$0xf]
  %v4394 = vld [vmem:[%s4333 + $0xf0] sm:$0xf]
  %v4395 = vld [vmem:[%s4333 + $0xf4] sm:$0xf]
  %v4396 = vld [vmem:[%s4333 + $0xf8] sm:$0xf]
  %v4397 = vld [vmem:[%s4333 + $0xfc] sm:$0xf]
  %v4398 = vld [vmem:[%s4333 + $0x100] sm:$0xf]
  %v4399 = vld [vmem:[%s4333 + $0x104] sm:$0xf]
  %v4400 = vld [vmem:[%s4333 + $0x108] sm:$0xf]
  %v4401 = vld [vmem:[%s4333 + $0x10c] sm:$0xf]
  %v4402 = vld [vmem:[%s4333 + $0x110] sm:$0xf]
  %v4403 = vld [vmem:[%s4333 + $0x114] sm:$0xf]
  %v4404 = vld [vmem:[%s4333 + $0x118] sm:$0xf]
  %v4405 = vld [vmem:[%s4333 + $0x11c] sm:$0xf]
  %v4406 = vld [vmem:[%s4333 + $0x120] sm:$0xf]
  %v4407 = vld [vmem:[%s4333 + $0x124] sm:$0xf]
  %v4408 = vld [vmem:[%s4333 + $0x128] sm:$0xf]
  %v4409 = vld [vmem:[%s4333 + $0x12c] sm:$0xf]
  %v4410 = vld [vmem:[%s4333 + $0x130] sm:$0xf]
  %v4411 = vld [vmem:[%s4333 + $0x134] sm:$0xf]
  %v4412 = vld [vmem:[%s4333 + $0x138] sm:$0xf]
  %v4413 = vld [vmem:[%s4333 + $0x13c] sm:$0xf]
  %v4414 = vld [vmem:[%s4333 + $0x140] sm:$0xf]
  %v4415 = vld [vmem:[%s4333 + $0x144] sm:$0xf]
  %v4416 = vld [vmem:[%s4333 + $0x148] sm:$0xf]
  %v4417 = vld [vmem:[%s4333 + $0x14c] sm:$0xf]
  %v4418 = vld [vmem:[%s4333 + $0x150] sm:$0xf]
  %v4419 = vld [vmem:[%s4333 + $0x154] sm:$0xf]
  %v4420 = vld [vmem:[%s4333 + $0x158] sm:$0xf]
  %v4421 = vld [vmem:[%s4333 + $0x15c] sm:$0xf]
  %v4422 = vld [vmem:[%s4333 + $0x160] sm:$0xf]
  %v4423 = vld [vmem:[%s4333 + $0x164] sm:$0xf]
  %v4424 = vld [vmem:[%s4333 + $0x168] sm:$0xf]
  %v4425 = vld [vmem:[%s4333 + $0x16c] sm:$0xf]
  %v4426 = vld [vmem:[%s4333 + $0x170] sm:$0xf]
  %v4427 = vld [vmem:[%s4333 + $0x174] sm:$0xf]
  %v4428 = vld [vmem:[%s4333 + $0x178] sm:$0xf]
  %v4429 = vld [vmem:[%s4333 + $0x17c] sm:$0xf]
  %v4430 = vld [vmem:[%s4333 + $0x180] sm:$0xf]
  %v4431 = vld [vmem:[%s4333 + $0x184] sm:$0xf]
  %v4432 = vld [vmem:[%s4333 + $0x188] sm:$0xf]
  %v4433 = vld [vmem:[%s4333 + $0x18c] sm:$0xf]
  %v4434 = vld [vmem:[%s4333 + $0x190] sm:$0xf]
  %v4435 = vld [vmem:[%s4333 + $0x194] sm:$0xf]
  %v4436 = vld [vmem:[%s4333 + $0x198] sm:$0xf]
  %v4437 = vld [vmem:[%s4333 + $0x19c] sm:$0xf]
  %v4438 = vld [vmem:[%s4333 + $0x1a0] sm:$0xf]
  %v4439 = vld [vmem:[%s4333 + $0x1a4] sm:$0xf]
  %v4440 = vld [vmem:[%s4333 + $0x1a8] sm:$0xf]
  %v4441 = vld [vmem:[%s4333 + $0x1ac] sm:$0xf]
  %v4442 = vld [vmem:[%s4333 + $0x1b0] sm:$0xf]
  %v4443 = vld [vmem:[%s4333 + $0x1b4] sm:$0xf]
  %v4444 = vld [vmem:[%s4333 + $0x1b8] sm:$0xf]
  %v4445 = vld [vmem:[%s4333 + $0x1bc] sm:$0xf]
  %v4446 = vld [vmem:[%s4333 + $0x1c0] sm:$0xf]
  %v4447 = vld [vmem:[%s4333 + $0x1c4] sm:$0xf]
  %v4448 = vld [vmem:[%s4333 + $0x1c8] sm:$0xf]
  %v4449 = vld [vmem:[%s4333 + $0x1cc] sm:$0xf]
  %v4450 = vld [vmem:[%s4333 + $0x1d0] sm:$0xf]
  %v4451 = vld [vmem:[%s4333 + $0x1d4] sm:$0xf]
  %v4452 = vld [vmem:[%s4333 + $0x1d8] sm:$0xf]
  %v4453 = vld [vmem:[%s4333 + $0x1dc] sm:$0xf]
  %v4454 = vld [vmem:[%s4333 + $0x1e0] sm:$0xf]
  %v4455 = vld [vmem:[%s4333 + $0x1e4] sm:$0xf]
  %v4456 = vld [vmem:[%s4333 + $0x1e8] sm:$0xf]
  %v4457 = vld [vmem:[%s4333 + $0x1ec] sm:$0xf]
  %v4458 = vld [vmem:[%s4333 + $0x1f0] sm:$0xf]
  %v4459 = vld [vmem:[%s4333 + $0x1f4] sm:$0xf]
  %v4460 = vld [vmem:[%s4333 + $0x1f8] sm:$0xf]
  %v4461 = vld [vmem:[%s4333 + $0x1fc] sm:$0xf]
  %v4462 = vld [vmem:[%s4333 + $0x200] sm:$0xf]
  %v4463 = vld [vmem:[%s4333 + $0x204] sm:$0xf]
  %v4464 = vld [vmem:[%s4333 + $0x208] sm:$0xf]
  %v4465 = vld [vmem:[%s4333 + $0x20c] sm:$0xf]
  %v4466 = vld [vmem:[%s4333 + $0x210] sm:$0xf]
  %v4467 = vld [vmem:[%s4333 + $0x214] sm:$0xf]
  %v4468 = vld [vmem:[%s4333 + $0x218] sm:$0xf]
  %v4469 = vld [vmem:[%s4333 + $0x21c] sm:$0xf]
  %v4470 = vld [vmem:[%s4333 + $0x220] sm:$0xf]
  %v4471 = vld [vmem:[%s4333 + $0x224] sm:$0xf]
  %v4472 = vld [vmem:[%s4333 + $0x228] sm:$0xf]
  %v4473 = vld [vmem:[%s4333 + $0x22c] sm:$0xf]
  %v4474 = vld [vmem:[%s4333 + $0x230] sm:$0xf]
  %v4475 = vld [vmem:[%s4333 + $0x234] sm:$0xf]
  %v4476 = vld [vmem:[%s4333 + $0x238] sm:$0xf]
  %v4477 = vld [vmem:[%s4333 + $0x23c] sm:$0xf]
  %v4478 = vld [vmem:[%s4333 + $0x240] sm:$0xf]
  %v4479 = vld [vmem:[%s4333 + $0x244] sm:$0xf]
  %v4480 = vld [vmem:[%s4333 + $0x248] sm:$0xf]
  %v4481 = vld [vmem:[%s4333 + $0x24c] sm:$0xf]
  %v4482 = vld [vmem:[%s4333 + $0x250] sm:$0xf]
  %v4483 = vld [vmem:[%s4333 + $0x254] sm:$0xf]
  %v4484 = vld [vmem:[%s4333 + $0x258] sm:$0xf]
  %v4485 = vld [vmem:[%s4333 + $0x25c] sm:$0xf]
  %v4486 = vld [vmem:[%s4333 + $0x260] sm:$0xf]
  %v4487 = vld [vmem:[%s4333 + $0x264] sm:$0xf]
  %v4488 = vld [vmem:[%s4333 + $0x268] sm:$0xf]
  %v4489 = vld [vmem:[%s4333 + $0x26c] sm:$0xf]
  %v4490 = vld [vmem:[%s4333 + $0x270] sm:$0xf]
  %v4491 = vld [vmem:[%s4333 + $0x274] sm:$0xf]
  %v4492 = vld [vmem:[%s4333 + $0x278] sm:$0xf]
  %v4493 = vld [vmem:[%s4333 + $0x27c] sm:$0xf]
  %v4494 = vld [vmem:[%s4333 + $0x280] sm:$0xf]
  %v4495 = vld [vmem:[%s4333 + $0x284] sm:$0xf]
  %v4496 = vld [vmem:[%s4333 + $0x288] sm:$0xf]
  %v4497 = vld [vmem:[%s4333 + $0x28c] sm:$0xf]
  %v4498 = vld [vmem:[%s4333 + $0x290] sm:$0xf]
  %v4499 = vld [vmem:[%s4333 + $0x294] sm:$0xf]
  %v4500 = vld [vmem:[%s4333 + $0x298] sm:$0xf]
  %v4501 = vld [vmem:[%s4333 + $0x29c] sm:$0xf]
  %v4502 = vld [vmem:[%s4333 + $0x2a0] sm:$0xf]
  %v4503 = vld [vmem:[%s4333 + $0x2a4] sm:$0xf]
  %v4504 = vld [vmem:[%s4333 + $0x2a8] sm:$0xf]
  %v4505 = vld [vmem:[%s4333 + $0x2ac] sm:$0xf]
  %v4506 = vld [vmem:[%s4333 + $0x2b0] sm:$0xf]
  %v4507 = vld [vmem:[%s4333 + $0x2b4] sm:$0xf]
  %v4508 = vld [vmem:[%s4333 + $0x2b8] sm:$0xf]
  %v4509 = vld [vmem:[%s4333 + $0x2bc] sm:$0xf]
  %v4510 = vld [vmem:[%s4333 + $0x2c0] sm:$0xf]
  %v4511 = vld [vmem:[%s4333 + $0x2c4] sm:$0xf]
  %v4512 = vld [vmem:[%s4333 + $0x2c8] sm:$0xf]
  %v4513 = vld [vmem:[%s4333 + $0x2cc] sm:$0xf]
  %v4514 = vld [vmem:[%s4333 + $0x2d0] sm:$0xf]
  %v4515 = vld [vmem:[%s4333 + $0x2d4] sm:$0xf]
  %v4516 = vld [vmem:[%s4333 + $0x2d8] sm:$0xf]
  %v4517 = vld [vmem:[%s4333 + $0x2dc] sm:$0xf]
  %v4518 = vld [vmem:[%s4333 + $0x2e0] sm:$0xf]
  %v4519 = vld [vmem:[%s4333 + $0x2e4] sm:$0xf]
  %v4520 = vld [vmem:[%s4333 + $0x2e8] sm:$0xf]
  %v4521 = vld [vmem:[%s4333 + $0x2ec] sm:$0xf]
  %v4522 = vld [vmem:[%s4333 + $0x2f0] sm:$0xf]
  %v4523 = vld [vmem:[%s4333 + $0x2f4] sm:$0xf]
  %v4524 = vld [vmem:[%s4333 + $0x2f8] sm:$0xf]
  %v4525 = vld [vmem:[%s4333 + $0x2fc] sm:$0xf]
  %v4526 = vld [vmem:[%s4333 + $0x300] sm:$0xf]
  %v4527 = vld [vmem:[%s4333 + $0x304] sm:$0xf]
  %v4528 = vld [vmem:[%s4333 + $0x308] sm:$0xf]
  %v4529 = vld [vmem:[%s4333 + $0x30c] sm:$0xf]
  %v4530 = vld [vmem:[%s4333 + $0x310] sm:$0xf]
  %v4531 = vld [vmem:[%s4333 + $0x314] sm:$0xf]
  %v4532 = vld [vmem:[%s4333 + $0x318] sm:$0xf]
  %v4533 = vld [vmem:[%s4333 + $0x31c] sm:$0xf]
  %v4534 = vld [vmem:[%s4333 + $0x320] sm:$0xf]
  %v4535 = vld [vmem:[%s4333 + $0x324] sm:$0xf]
  %v4536 = vld [vmem:[%s4333 + $0x328] sm:$0xf]
  %v4537 = vld [vmem:[%s4333 + $0x32c] sm:$0xf]
  %v4538 = vld [vmem:[%s4333 + $0x330] sm:$0xf]
  %v4539 = vld [vmem:[%s4333 + $0x334] sm:$0xf]
  %v4540 = vld [vmem:[%s4333 + $0x338] sm:$0xf]
  %v4541 = vld [vmem:[%s4333 + $0x33c] sm:$0xf]
  %v4542 = vld [vmem:[%s4333 + $0x340] sm:$0xf]
  %v4543 = vld [vmem:[%s4333 + $0x344] sm:$0xf]
  %v4544 = vld [vmem:[%s4333 + $0x348] sm:$0xf]
  %v4545 = vld [vmem:[%s4333 + $0x34c] sm:$0xf]
  %v4546 = vld [vmem:[%s4333 + $0x350] sm:$0xf]
  %v4547 = vld [vmem:[%s4333 + $0x354] sm:$0xf]
  %v4548 = vld [vmem:[%s4333 + $0x358] sm:$0xf]
  %v4549 = vld [vmem:[%s4333 + $0x35c] sm:$0xf]
  %v4550 = vld [vmem:[%s4333 + $0x360] sm:$0xf]
  %v4551 = vld [vmem:[%s4333 + $0x364] sm:$0xf]
  %v4552 = vld [vmem:[%s4333 + $0x368] sm:$0xf]
  %v4553 = vld [vmem:[%s4333 + $0x36c] sm:$0xf]
  %v4554 = vld [vmem:[%s4333 + $0x370] sm:$0xf]
  %v4555 = vld [vmem:[%s4333 + $0x374] sm:$0xf]
  %v4556 = vld [vmem:[%s4333 + $0x378] sm:$0xf]
  %v4557 = vld [vmem:[%s4333 + $0x37c] sm:$0xf]
  %v4558 = vld [vmem:[%s4333 + $0x380] sm:$0xf]
  %v4559 = vld [vmem:[%s4333 + $0x384] sm:$0xf]
  %v4560 = vld [vmem:[%s4333 + $0x388] sm:$0xf]
  %v4561 = vld [vmem:[%s4333 + $0x38c] sm:$0xf]
  %v4562 = vld [vmem:[%s4333 + $0x390] sm:$0xf]
  %v4563 = vld [vmem:[%s4333 + $0x394] sm:$0xf]
  %v4564 = vld [vmem:[%s4333 + $0x398] sm:$0xf]
  %v4565 = vld [vmem:[%s4333 + $0x39c] sm:$0xf]
  %v4566 = vld [vmem:[%s4333 + $0x3a0] sm:$0xf]
  %v4567 = vld [vmem:[%s4333 + $0x3a4] sm:$0xf]
  %v4568 = vld [vmem:[%s4333 + $0x3a8] sm:$0xf]
  %v4569 = vld [vmem:[%s4333 + $0x3ac] sm:$0xf]
  %v4570 = vld [vmem:[%s4333 + $0x3b0] sm:$0xf]
  %v4571 = vld [vmem:[%s4333 + $0x3b4] sm:$0xf]
  %v4572 = vld [vmem:[%s4333 + $0x3b8] sm:$0xf]
  %v4573 = vld [vmem:[%s4333 + $0x3bc] sm:$0xf]
  %v4574 = vld [vmem:[%s4333 + $0x3c0] sm:$0xf]
  %v4575 = vld [vmem:[%s4333 + $0x3c4] sm:$0xf]
  %v4576 = vld [vmem:[%s4333 + $0x3c8] sm:$0xf]
  %v4577 = vld [vmem:[%s4333 + $0x3cc] sm:$0xf]
  %v4578 = vld [vmem:[%s4333 + $0x3d0] sm:$0xf]
  %v4579 = vld [vmem:[%s4333 + $0x3d4] sm:$0xf]
  %v4580 = vld [vmem:[%s4333 + $0x3d8] sm:$0xf]
  %v4581 = vld [vmem:[%s4333 + $0x3dc] sm:$0xf]
  %v4582 = vld [vmem:[%s4333 + $0x3e0] sm:$0xf]
  %v4583 = vld [vmem:[%s4333 + $0x3e4] sm:$0xf]
  %v4584 = vld [vmem:[%s4333 + $0x3e8] sm:$0xf]
  %v4585 = vld [vmem:[%s4333 + $0x3ec] sm:$0xf]
  %v4586 = vld [vmem:[%s4333 + $0x3f0] sm:$0xf]
  %v4587 = vld [vmem:[%s4333 + $0x3f4] sm:$0xf]
  %v4588 = vld [vmem:[%s4333 + $0x3f8] sm:$0xf]
  %v4589 = vld [vmem:[%s4333 + $0x3fc] sm:$0xf]
  %s4590 = scalar_lea.vmem %s11, 1
  %v4591 = vld [vmem:[%s4590] sm:$0x1]
  %v4593 = vlaneseq
  %v4594 = vshrl.u32 %v4593, 7
  %v4595 = vsub.s32 0, %v4594
  %v4596 = vrot.slane %v4591, %v4595
  %v4854 = vunpack.c.l.b16 %v4334
  %v4855 = vunpack.c.l.b16 %v4335
  %v4856 = vunpack.c.l.b16 %v4336
  %v4857 = vunpack.c.l.b16 %v4337
  %v4858 = vunpack.c.l.b16 %v4338
  %v4859 = vunpack.c.l.b16 %v4339
  %v4860 = vunpack.c.l.b16 %v4340
  %v4861 = vunpack.c.l.b16 %v4341
  %v4862 = vunpack.c.l.b16 %v4342
  %v4863 = vunpack.c.l.b16 %v4343
  %v4864 = vunpack.c.l.b16 %v4344
  %v4865 = vunpack.c.l.b16 %v4345
  %v4866 = vunpack.c.l.b16 %v4346
  %v4867 = vunpack.c.l.b16 %v4347
  %v4868 = vunpack.c.l.b16 %v4348
  %v4869 = vunpack.c.l.b16 %v4349
  %v4870 = vunpack.c.l.b16 %v4350
  %v4871 = vunpack.c.l.b16 %v4351
  %v4872 = vunpack.c.l.b16 %v4352
  %v4873 = vunpack.c.l.b16 %v4353
  %v4874 = vunpack.c.l.b16 %v4354
  %v4875 = vunpack.c.l.b16 %v4355
  %v4876 = vunpack.c.l.b16 %v4356
  %v4877 = vunpack.c.l.b16 %v4357
  %v4878 = vunpack.c.l.b16 %v4358
  %v4879 = vunpack.c.l.b16 %v4359
  %v4880 = vunpack.c.l.b16 %v4360
  %v4881 = vunpack.c.l.b16 %v4361
  %v4882 = vunpack.c.l.b16 %v4362
  %v4883 = vunpack.c.l.b16 %v4363
  %v4884 = vunpack.c.l.b16 %v4364
  %v4885 = vunpack.c.l.b16 %v4365
  %v4886 = vunpack.c.l.b16 %v4366
  %v4887 = vunpack.c.l.b16 %v4367
  %v4888 = vunpack.c.l.b16 %v4368
  %v4889 = vunpack.c.l.b16 %v4369
  %v4890 = vunpack.c.l.b16 %v4370
  %v4891 = vunpack.c.l.b16 %v4371
  %v4892 = vunpack.c.l.b16 %v4372
  %v4893 = vunpack.c.l.b16 %v4373
  %v4894 = vunpack.c.l.b16 %v4374
  %v4895 = vunpack.c.l.b16 %v4375
  %v4896 = vunpack.c.l.b16 %v4376
  %v4897 = vunpack.c.l.b16 %v4377
  %v4898 = vunpack.c.l.b16 %v4378
  %v4899 = vunpack.c.l.b16 %v4379
  %v4900 = vunpack.c.l.b16 %v4380
  %v4901 = vunpack.c.l.b16 %v4381
  %v4902 = vunpack.c.l.b16 %v4382
  %v4903 = vunpack.c.l.b16 %v4383
  %v4904 = vunpack.c.l.b16 %v4384
  %v4905 = vunpack.c.l.b16 %v4385
  %v4906 = vunpack.c.l.b16 %v4386
  %v4907 = vunpack.c.l.b16 %v4387
  %v4908 = vunpack.c.l.b16 %v4388
  %v4909 = vunpack.c.l.b16 %v4389
  %v4910 = vunpack.c.l.b16 %v4390
  %v4911 = vunpack.c.l.b16 %v4391
  %v4912 = vunpack.c.l.b16 %v4392
  %v4913 = vunpack.c.l.b16 %v4393
  %v4914 = vunpack.c.l.b16 %v4394
  %v4915 = vunpack.c.l.b16 %v4395
  %v4916 = vunpack.c.l.b16 %v4396
  %v4917 = vunpack.c.l.b16 %v4397
  %v4918 = vunpack.c.l.b16 %v4398
  %v4919 = vunpack.c.l.b16 %v4399
  %v4920 = vunpack.c.l.b16 %v4400
  %v4921 = vunpack.c.l.b16 %v4401
  %v4922 = vunpack.c.l.b16 %v4402
  %v4923 = vunpack.c.l.b16 %v4403
  %v4924 = vunpack.c.l.b16 %v4404
  %v4925 = vunpack.c.l.b16 %v4405
  %v4926 = vunpack.c.l.b16 %v4406
  %v4927 = vunpack.c.l.b16 %v4407
  %v4928 = vunpack.c.l.b16 %v4408
  %v4929 = vunpack.c.l.b16 %v4409
  %v4930 = vunpack.c.l.b16 %v4410
  %v4931 = vunpack.c.l.b16 %v4411
  %v4932 = vunpack.c.l.b16 %v4412
  %v4933 = vunpack.c.l.b16 %v4413
  %v4934 = vunpack.c.l.b16 %v4414
  %v4935 = vunpack.c.l.b16 %v4415
  %v4936 = vunpack.c.l.b16 %v4416
  %v4937 = vunpack.c.l.b16 %v4417
  %v4938 = vunpack.c.l.b16 %v4418
  %v4939 = vunpack.c.l.b16 %v4419
  %v4940 = vunpack.c.l.b16 %v4420
  %v4941 = vunpack.c.l.b16 %v4421
  %v4942 = vunpack.c.l.b16 %v4422
  %v4943 = vunpack.c.l.b16 %v4423
  %v4944 = vunpack.c.l.b16 %v4424
  %v4945 = vunpack.c.l.b16 %v4425
  %v4946 = vunpack.c.l.b16 %v4426
  %v4947 = vunpack.c.l.b16 %v4427
  %v4948 = vunpack.c.l.b16 %v4428
  %v4949 = vunpack.c.l.b16 %v4429
  %v4950 = vunpack.c.l.b16 %v4430
  %v4951 = vunpack.c.l.b16 %v4431
  %v4952 = vunpack.c.l.b16 %v4432
  %v4953 = vunpack.c.l.b16 %v4433
  %v4954 = vunpack.c.l.b16 %v4434
  %v4955 = vunpack.c.l.b16 %v4435
  %v4956 = vunpack.c.l.b16 %v4436
  %v4957 = vunpack.c.l.b16 %v4437
  %v4958 = vunpack.c.l.b16 %v4438
  %v4959 = vunpack.c.l.b16 %v4439
  %v4960 = vunpack.c.l.b16 %v4440
  %v4961 = vunpack.c.l.b16 %v4441
  %v4962 = vunpack.c.l.b16 %v4442
  %v4963 = vunpack.c.l.b16 %v4443
  %v4964 = vunpack.c.l.b16 %v4444
  %v4965 = vunpack.c.l.b16 %v4445
  %v4966 = vunpack.c.l.b16 %v4446
  %v4967 = vunpack.c.l.b16 %v4447
  %v4968 = vunpack.c.l.b16 %v4448
  %v4969 = vunpack.c.l.b16 %v4449
  %v4970 = vunpack.c.l.b16 %v4450
  %v4971 = vunpack.c.l.b16 %v4451
  %v4972 = vunpack.c.l.b16 %v4452
  %v4973 = vunpack.c.l.b16 %v4453
  %v4974 = vunpack.c.l.b16 %v4454
  %v4975 = vunpack.c.l.b16 %v4455
  %v4976 = vunpack.c.l.b16 %v4456
  %v4977 = vunpack.c.l.b16 %v4457
  %v4978 = vunpack.c.l.b16 %v4458
  %v4979 = vunpack.c.l.b16 %v4459
  %v4980 = vunpack.c.l.b16 %v4460
  %v4981 = vunpack.c.l.b16 %v4461
  %v4982 = vunpack.c.l.b16 %v4462
  %v4983 = vunpack.c.l.b16 %v4463
  %v4984 = vunpack.c.l.b16 %v4464
  %v4985 = vunpack.c.l.b16 %v4465
  %v4986 = vunpack.c.l.b16 %v4466
  %v4987 = vunpack.c.l.b16 %v4467
  %v4988 = vunpack.c.l.b16 %v4468
  %v4989 = vunpack.c.l.b16 %v4469
  %v4990 = vunpack.c.l.b16 %v4470
  %v4991 = vunpack.c.l.b16 %v4471
  %v4992 = vunpack.c.l.b16 %v4472
  %v4993 = vunpack.c.l.b16 %v4473
  %v4994 = vunpack.c.l.b16 %v4474
  %v4995 = vunpack.c.l.b16 %v4475
  %v4996 = vunpack.c.l.b16 %v4476
  %v4997 = vunpack.c.l.b16 %v4477
  %v4998 = vunpack.c.l.b16 %v4478
  %v4999 = vunpack.c.l.b16 %v4479
  %v5000 = vunpack.c.l.b16 %v4480
  %v5001 = vunpack.c.l.b16 %v4481
  %v5002 = vunpack.c.l.b16 %v4482
  %v5003 = vunpack.c.l.b16 %v4483
  %v5004 = vunpack.c.l.b16 %v4484
  %v5005 = vunpack.c.l.b16 %v4485
  %v5006 = vunpack.c.l.b16 %v4486
  %v5007 = vunpack.c.l.b16 %v4487
  %v5008 = vunpack.c.l.b16 %v4488
  %v5009 = vunpack.c.l.b16 %v4489
  %v5010 = vunpack.c.l.b16 %v4490
  %v5011 = vunpack.c.l.b16 %v4491
  %v5012 = vunpack.c.l.b16 %v4492
  %v5013 = vunpack.c.l.b16 %v4493
  %v5014 = vunpack.c.l.b16 %v4494
  %v5015 = vunpack.c.l.b16 %v4495
  %v5016 = vunpack.c.l.b16 %v4496
  %v5017 = vunpack.c.l.b16 %v4497
  %v5018 = vunpack.c.l.b16 %v4498
  %v5019 = vunpack.c.l.b16 %v4499
  %v5020 = vunpack.c.l.b16 %v4500
  %v5021 = vunpack.c.l.b16 %v4501
  %v5022 = vunpack.c.l.b16 %v4502
  %v5023 = vunpack.c.l.b16 %v4503
  %v5024 = vunpack.c.l.b16 %v4504
  %v5025 = vunpack.c.l.b16 %v4505
  %v5026 = vunpack.c.l.b16 %v4506
  %v5027 = vunpack.c.l.b16 %v4507
  %v5028 = vunpack.c.l.b16 %v4508
  %v5029 = vunpack.c.l.b16 %v4509
  %v5030 = vunpack.c.l.b16 %v4510
  %v5031 = vunpack.c.l.b16 %v4511
  %v5032 = vunpack.c.l.b16 %v4512
  %v5033 = vunpack.c.l.b16 %v4513
  %v5034 = vunpack.c.l.b16 %v4514
  %v5035 = vunpack.c.l.b16 %v4515
  %v5036 = vunpack.c.l.b16 %v4516
  %v5037 = vunpack.c.l.b16 %v4517
  %v5038 = vunpack.c.l.b16 %v4518
  %v5039 = vunpack.c.l.b16 %v4519
  %v5040 = vunpack.c.l.b16 %v4520
  %v5041 = vunpack.c.l.b16 %v4521
  %v5042 = vunpack.c.l.b16 %v4522
  %v5043 = vunpack.c.l.b16 %v4523
  %v5044 = vunpack.c.l.b16 %v4524
  %v5045 = vunpack.c.l.b16 %v4525
  %v5046 = vunpack.c.l.b16 %v4526
  %v5047 = vunpack.c.l.b16 %v4527
  %v5048 = vunpack.c.l.b16 %v4528
  %v5049 = vunpack.c.l.b16 %v4529
  %v5050 = vunpack.c.l.b16 %v4530
  %v5051 = vunpack.c.l.b16 %v4531
  %v5052 = vunpack.c.l.b16 %v4532
  %v5053 = vunpack.c.l.b16 %v4533
  %v5054 = vunpack.c.l.b16 %v4534
  %v5055 = vunpack.c.l.b16 %v4535
  %v5056 = vunpack.c.l.b16 %v4536
  %v5057 = vunpack.c.l.b16 %v4537
  %v5058 = vunpack.c.l.b16 %v4538
  %v5059 = vunpack.c.l.b16 %v4539
  %v5060 = vunpack.c.l.b16 %v4540
  %v5061 = vunpack.c.l.b16 %v4541
  %v5062 = vunpack.c.l.b16 %v4542
  %v5063 = vunpack.c.l.b16 %v4543
  %v5064 = vunpack.c.l.b16 %v4544
  %v5065 = vunpack.c.l.b16 %v4545
  %v5066 = vunpack.c.l.b16 %v4546
  %v5067 = vunpack.c.l.b16 %v4547
  %v5068 = vunpack.c.l.b16 %v4548
  %v5069 = vunpack.c.l.b16 %v4549
  %v5070 = vunpack.c.l.b16 %v4550
  %v5071 = vunpack.c.l.b16 %v4551
  %v5072 = vunpack.c.l.b16 %v4552
  %v5073 = vunpack.c.l.b16 %v4553
  %v5074 = vunpack.c.l.b16 %v4554
  %v5075 = vunpack.c.l.b16 %v4555
  %v5076 = vunpack.c.l.b16 %v4556
  %v5077 = vunpack.c.l.b16 %v4557
  %v5078 = vunpack.c.l.b16 %v4558
  %v5079 = vunpack.c.l.b16 %v4559
  %v5080 = vunpack.c.l.b16 %v4560
  %v5081 = vunpack.c.l.b16 %v4561
  %v5082 = vunpack.c.l.b16 %v4562
  %v5083 = vunpack.c.l.b16 %v4563
  %v5084 = vunpack.c.l.b16 %v4564
  %v5085 = vunpack.c.l.b16 %v4565
  %v5086 = vunpack.c.l.b16 %v4566
  %v5087 = vunpack.c.l.b16 %v4567
  %v5088 = vunpack.c.l.b16 %v4568
  %v5089 = vunpack.c.l.b16 %v4569
  %v5090 = vunpack.c.l.b16 %v4570
  %v5091 = vunpack.c.l.b16 %v4571
  %v5092 = vunpack.c.l.b16 %v4572
  %v5093 = vunpack.c.l.b16 %v4573
  %v5094 = vunpack.c.l.b16 %v4574
  %v5095 = vunpack.c.l.b16 %v4575
  %v5096 = vunpack.c.l.b16 %v4576
  %v5097 = vunpack.c.l.b16 %v4577
  %v5098 = vunpack.c.l.b16 %v4578
  %v5099 = vunpack.c.l.b16 %v4579
  %v5100 = vunpack.c.l.b16 %v4580
  %v5101 = vunpack.c.l.b16 %v4581
  %v5102 = vunpack.c.l.b16 %v4582
  %v5103 = vunpack.c.l.b16 %v4583
  %v5104 = vunpack.c.l.b16 %v4584
  %v5105 = vunpack.c.l.b16 %v4585
  %v5106 = vunpack.c.l.b16 %v4586
  %v5107 = vunpack.c.l.b16 %v4587
  %v5108 = vunpack.c.l.b16 %v4588
  %v5109 = vunpack.c.l.b16 %v4589
  %v5110 = vpack.c.b16 %v4855, %v4854
  %v5111 = vpack.c.b16 %v4857, %v4856
  %v5112 = vpack.c.b16 %v4859, %v4858
  %v5113 = vpack.c.b16 %v4861, %v4860
  %v5114 = vpack.c.b16 %v4863, %v4862
  %v5115 = vpack.c.b16 %v4865, %v4864
  %v5116 = vpack.c.b16 %v4867, %v4866
  %v5117 = vpack.c.b16 %v4869, %v4868
  %v5118 = vpack.c.b16 %v4871, %v4870
  %v5119 = vpack.c.b16 %v4873, %v4872
  %v5120 = vpack.c.b16 %v4875, %v4874
  %v5121 = vpack.c.b16 %v4877, %v4876
  %v5122 = vpack.c.b16 %v4879, %v4878
  %v5123 = vpack.c.b16 %v4881, %v4880
  %v5124 = vpack.c.b16 %v4883, %v4882
  %v5125 = vpack.c.b16 %v4885, %v4884
  %v5126 = vpack.c.b16 %v4887, %v4886
  %v5127 = vpack.c.b16 %v4889, %v4888
  %v5128 = vpack.c.b16 %v4891, %v4890
  %v5129 = vpack.c.b16 %v4893, %v4892
  %v5130 = vpack.c.b16 %v4895, %v4894
  %v5131 = vpack.c.b16 %v4897, %v4896
  %v5132 = vpack.c.b16 %v4899, %v4898
  %v5133 = vpack.c.b16 %v4901, %v4900
  %v5134 = vpack.c.b16 %v4903, %v4902
  %v5135 = vpack.c.b16 %v4905, %v4904
  %v5136 = vpack.c.b16 %v4907, %v4906
  %v5137 = vpack.c.b16 %v4909, %v4908
  %v5138 = vpack.c.b16 %v4911, %v4910
  %v5139 = vpack.c.b16 %v4913, %v4912
  %v5140 = vpack.c.b16 %v4915, %v4914
  %v5141 = vpack.c.b16 %v4917, %v4916
  %v5142 = vpack.c.b16 %v4919, %v4918
  %v5143 = vpack.c.b16 %v4921, %v4920
  %v5144 = vpack.c.b16 %v4923, %v4922
  %v5145 = vpack.c.b16 %v4925, %v4924
  %v5146 = vpack.c.b16 %v4927, %v4926
  %v5147 = vpack.c.b16 %v4929, %v4928
  %v5148 = vpack.c.b16 %v4931, %v4930
  %v5149 = vpack.c.b16 %v4933, %v4932
  %v5150 = vpack.c.b16 %v4935, %v4934
  %v5151 = vpack.c.b16 %v4937, %v4936
  %v5152 = vpack.c.b16 %v4939, %v4938
  %v5153 = vpack.c.b16 %v4941, %v4940
  %v5154 = vpack.c.b16 %v4943, %v4942
  %v5155 = vpack.c.b16 %v4945, %v4944
  %v5156 = vpack.c.b16 %v4947, %v4946
  %v5157 = vpack.c.b16 %v4949, %v4948
  %v5158 = vpack.c.b16 %v4951, %v4950
  %v5159 = vpack.c.b16 %v4953, %v4952
  %v5160 = vpack.c.b16 %v4955, %v4954
  %v5161 = vpack.c.b16 %v4957, %v4956
  %v5162 = vpack.c.b16 %v4959, %v4958
  %v5163 = vpack.c.b16 %v4961, %v4960
  %v5164 = vpack.c.b16 %v4963, %v4962
  %v5165 = vpack.c.b16 %v4965, %v4964
  %v5166 = vpack.c.b16 %v4967, %v4966
  %v5167 = vpack.c.b16 %v4969, %v4968
  %v5168 = vpack.c.b16 %v4971, %v4970
  %v5169 = vpack.c.b16 %v4973, %v4972
  %v5170 = vpack.c.b16 %v4975, %v4974
  %v5171 = vpack.c.b16 %v4977, %v4976
  %v5172 = vpack.c.b16 %v4979, %v4978
  %v5173 = vpack.c.b16 %v4981, %v4980
  %v5174 = vpack.c.b16 %v4983, %v4982
  %v5175 = vpack.c.b16 %v4985, %v4984
  %v5176 = vpack.c.b16 %v4987, %v4986
  %v5177 = vpack.c.b16 %v4989, %v4988
  %v5178 = vpack.c.b16 %v4991, %v4990
  %v5179 = vpack.c.b16 %v4993, %v4992
  %v5180 = vpack.c.b16 %v4995, %v4994
  %v5181 = vpack.c.b16 %v4997, %v4996
  %v5182 = vpack.c.b16 %v4999, %v4998
  %v5183 = vpack.c.b16 %v5001, %v5000
  %v5184 = vpack.c.b16 %v5003, %v5002
  %v5185 = vpack.c.b16 %v5005, %v5004
  %v5186 = vpack.c.b16 %v5007, %v5006
  %v5187 = vpack.c.b16 %v5009, %v5008
  %v5188 = vpack.c.b16 %v5011, %v5010
  %v5189 = vpack.c.b16 %v5013, %v5012
  %v5190 = vpack.c.b16 %v5015, %v5014
  %v5191 = vpack.c.b16 %v5017, %v5016
  %v5192 = vpack.c.b16 %v5019, %v5018
  %v5193 = vpack.c.b16 %v5021, %v5020
  %v5194 = vpack.c.b16 %v5023, %v5022
  %v5195 = vpack.c.b16 %v5025, %v5024
  %v5196 = vpack.c.b16 %v5027, %v5026
  %v5197 = vpack.c.b16 %v5029, %v5028
  %v5198 = vpack.c.b16 %v5031, %v5030
  %v5199 = vpack.c.b16 %v5033, %v5032
  %v5200 = vpack.c.b16 %v5035, %v5034
  %v5201 = vpack.c.b16 %v5037, %v5036
  %v5202 = vpack.c.b16 %v5039, %v5038
  %v5203 = vpack.c.b16 %v5041, %v5040
  %v5204 = vpack.c.b16 %v5043, %v5042
  %v5205 = vpack.c.b16 %v5045, %v5044
  %v5206 = vpack.c.b16 %v5047, %v5046
  %v5207 = vpack.c.b16 %v5049, %v5048
  %v5208 = vpack.c.b16 %v5051, %v5050
  %v5209 = vpack.c.b16 %v5053, %v5052
  %v5210 = vpack.c.b16 %v5055, %v5054
  %v5211 = vpack.c.b16 %v5057, %v5056
  %v5212 = vpack.c.b16 %v5059, %v5058
  %v5213 = vpack.c.b16 %v5061, %v5060
  %v5214 = vpack.c.b16 %v5063, %v5062
  %v5215 = vpack.c.b16 %v5065, %v5064
  %v5216 = vpack.c.b16 %v5067, %v5066
  %v5217 = vpack.c.b16 %v5069, %v5068
  %v5218 = vpack.c.b16 %v5071, %v5070
  %v5219 = vpack.c.b16 %v5073, %v5072
  %v5220 = vpack.c.b16 %v5075, %v5074
  %v5221 = vpack.c.b16 %v5077, %v5076
  %v5222 = vpack.c.b16 %v5079, %v5078
  %v5223 = vpack.c.b16 %v5081, %v5080
  %v5224 = vpack.c.b16 %v5083, %v5082
  %v5225 = vpack.c.b16 %v5085, %v5084
  %v5226 = vpack.c.b16 %v5087, %v5086
  %v5227 = vpack.c.b16 %v5089, %v5088
  %v5228 = vpack.c.b16 %v5091, %v5090
  %v5229 = vpack.c.b16 %v5093, %v5092
  %v5230 = vpack.c.b16 %v5095, %v5094
  %v5231 = vpack.c.b16 %v5097, %v5096
  %v5232 = vpack.c.b16 %v5099, %v5098
  %v5233 = vpack.c.b16 %v5101, %v5100
  %v5234 = vpack.c.b16 %v5103, %v5102
  %v5235 = vpack.c.b16 %v5105, %v5104
  %v5236 = vpack.c.b16 %v5107, %v5106
  %v5237 = vpack.c.b16 %v5109, %v5108
  %5366 = vmatprep.subr.bf16.mxu0 0
  %5367 = vmatpush1.bf16.msra.mxu0 %v5110
  %5368 = vmatprep.subr.bf16.mxu0 0
  %5369 = vmatpush1.bf16.msra.mxu0 %v5111
  %5370 = vmatprep.subr.bf16.mxu0 0
  %5371 = vmatpush1.bf16.msra.mxu0 %v5112
  %5372 = vmatprep.subr.bf16.mxu0 0
  %5373 = vmatpush1.bf16.msra.mxu0 %v5113
  %5374 = vmatprep.subr.bf16.mxu0 0
  %5375 = vmatpush1.bf16.msra.mxu0 %v5114
  %5376 = vmatprep.subr.bf16.mxu0 0
  %5377 = vmatpush1.bf16.msra.mxu0 %v5115
  %5378 = vmatprep.subr.bf16.mxu0 0
  %5379 = vmatpush1.bf16.msra.mxu0 %v5116
  %5380 = vmatprep.subr.bf16.mxu0 0
  %5381 = vmatpush1.bf16.msra.mxu0 %v5117
  %5382 = vmatprep.subr.bf16.mxu0 0
  %5383 = vmatpush1.bf16.msra.mxu0 %v5118
  %5384 = vmatprep.subr.bf16.mxu0 0
  %5385 = vmatpush1.bf16.msra.mxu0 %v5119
  %5386 = vmatprep.subr.bf16.mxu0 0
  %5387 = vmatpush1.bf16.msra.mxu0 %v5120
  %5388 = vmatprep.subr.bf16.mxu0 0
  %5389 = vmatpush1.bf16.msra.mxu0 %v5121
  %5390 = vmatprep.subr.bf16.mxu0 0
  %5391 = vmatpush1.bf16.msra.mxu0 %v5122
  %5392 = vmatprep.subr.bf16.mxu0 0
  %5393 = vmatpush1.bf16.msra.mxu0 %v5123
  %5394 = vmatprep.subr.bf16.mxu0 0
  %5395 = vmatpush1.bf16.msra.mxu0 %v5124
  %5396 = vmatprep.subr.bf16.mxu0 0
  %5397 = vmatpush1.bf16.msra.mxu0 %v5125
  %5398 = vmatprep.mubr.bf16.mxu0 %v4318
  %5399 = vmatmul.mubr.bf16.gmra.mrb[0].mxu0 %v4317
  %v5400 = vpop.f32.mrb[0].mxu0
  %v5401 = vadd.f32 %v4596, %v5400
  %v5402 = vpop.f32.mrb[0].mxu0
  %v5403 = vpop.f32.mrb[0].mxu0
  %v5404 = vadd.f32 %v4596, %v5403
  %v5405 = vpop.f32.mrb[0].mxu0
  %5406 = vdwg.mxu0
  %5407 = vmatprep.subr.bf16.mxu0 0
  %5408 = vmatpush1.bf16.msra.mxu0 %v5126
  %5409 = vmatprep.subr.bf16.mxu0 0
  %5410 = vmatpush1.bf16.msra.mxu0 %v5127
  %5411 = vmatprep.subr.bf16.mxu0 0
  %5412 = vmatpush1.bf16.msra.mxu0 %v5128
  %5413 = vmatprep.subr.bf16.mxu0 0
  %5414 = vmatpush1.bf16.msra.mxu0 %v5129
  %5415 = vmatprep.subr.bf16.mxu0 0
  %5416 = vmatpush1.bf16.msra.mxu0 %v5130
  %5417 = vmatprep.subr.bf16.mxu0 0
  %5418 = vmatpush1.bf16.msra.mxu0 %v5131
  %5419 = vmatprep.subr.bf16.mxu0 0
  %5420 = vmatpush1.bf16.msra.mxu0 %v5132
  %5421 = vmatprep.subr.bf16.mxu0 0
  %5422 = vmatpush1.bf16.msra.mxu0 %v5133
  %5423 = vmatprep.subr.bf16.mxu0 0
  %5424 = vmatpush1.bf16.msra.mxu0 %v5134
  %5425 = vmatprep.subr.bf16.mxu0 0
  %5426 = vmatpush1.bf16.msra.mxu0 %v5135
  %5427 = vmatprep.subr.bf16.mxu0 0
  %5428 = vmatpush1.bf16.msra.mxu0 %v5136
  %5429 = vmatprep.subr.bf16.mxu0 0
  %5430 = vmatpush1.bf16.msra.mxu0 %v5137
  %5431 = vmatprep.subr.bf16.mxu0 0
  %5432 = vmatpush1.bf16.msra.mxu0 %v5138
  %5433 = vmatprep.subr.bf16.mxu0 0
  %5434 = vmatpush1.bf16.msra.mxu0 %v5139
  %5435 = vmatprep.subr.bf16.mxu0 0
  %5436 = vmatpush1.bf16.msra.mxu0 %v5140
  %5437 = vmatprep.subr.bf16.mxu0 0
  %5438 = vmatpush1.bf16.msra.mxu0 %v5141
  %5439 = vmatprep.mubr.bf16.mxu0 %v4320
  %5440 = vmatmul.mubr.bf16.gmra.mrb[0].mxu0 %v4319
  %v5441 = vpop.f32.mrb[0].mxu0
  %v5442 = vadd.f32 %v5401, %v5441
  %v5443 = vpop.f32.mrb[0].mxu0
  %v5444 = vpop.f32.mrb[0].mxu0
  %v5445 = vadd.f32 %v5404, %v5444
  %v5446 = vpop.f32.mrb[0].mxu0
  %5447 = vdwg.mxu0
  %5448 = vmatprep.subr.bf16.mxu0 0
  %5449 = vmatpush1.bf16.msra.mxu0 %v5142
  %5450 = vmatprep.subr.bf16.mxu0 0
  %5451 = vmatpush1.bf16.msra.mxu0 %v5143
  %5452 = vmatprep.subr.bf16.mxu0 0
  %5453 = vmatpush1.bf16.msra.mxu0 %v5144
  %5454 = vmatprep.subr.bf16.mxu0 0
  %5455 = vmatpush1.bf16.msra.mxu0 %v5145
  %5456 = vmatprep.subr.bf16.mxu0 0
  %5457 = vmatpush1.bf16.msra.mxu0 %v5146
  %5458 = vmatprep.subr.bf16.mxu0 0
  %5459 = vmatpush1.bf16.msra.mxu0 %v5147
  %5460 = vmatprep.subr.bf16.mxu0 0
  %5461 = vmatpush1.bf16.msra.mxu0 %v5148
  %5462 = vmatprep.subr.bf16.mxu0 0
  %5463 = vmatpush1.bf16.msra.mxu0 %v5149
  %5464 = vmatprep.subr.bf16.mxu0 0
  %5465 = vmatpush1.bf16.msra.mxu0 %v5150
  %5466 = vmatprep.subr.bf16.mxu0 0
  %5467 = vmatpush1.bf16.msra.mxu0 %v5151
  %5468 = vmatprep.subr.bf16.mxu0 0
  %5469 = vmatpush1.bf16.msra.mxu0 %v5152
  %5470 = vmatprep.subr.bf16.mxu0 0
  %5471 = vmatpush1.bf16.msra.mxu0 %v5153
  %5472 = vmatprep.subr.bf16.mxu0 0
  %5473 = vmatpush1.bf16.msra.mxu0 %v5154
  %5474 = vmatprep.subr.bf16.mxu0 0
  %5475 = vmatpush1.bf16.msra.mxu0 %v5155
  %5476 = vmatprep.subr.bf16.mxu0 0
  %5477 = vmatpush1.bf16.msra.mxu0 %v5156
  %5478 = vmatprep.subr.bf16.mxu0 0
  %5479 = vmatpush1.bf16.msra.mxu0 %v5157
  %5480 = vmatprep.mubr.bf16.mxu0 %v4322
  %5481 = vmatmul.mubr.bf16.gmra.mrb[0].mxu0 %v4321
  %v5482 = vpop.f32.mrb[0].mxu0
  %v5483 = vadd.f32 %v5442, %v5482
  %v5484 = vpop.f32.mrb[0].mxu0
  %v5485 = vpop.f32.mrb[0].mxu0
  %v5486 = vadd.f32 %v5445, %v5485
  %v5487 = vpop.f32.mrb[0].mxu0
  %5488 = vdwg.mxu0
  %5489 = vmatprep.subr.bf16.mxu0 0
  %5490 = vmatpush1.bf16.msra.mxu0 %v5158
  %5491 = vmatprep.subr.bf16.mxu0 0
  %5492 = vmatpush1.bf16.msra.mxu0 %v5159
  %5493 = vmatprep.subr.bf16.mxu0 0
  %5494 = vmatpush1.bf16.msra.mxu0 %v5160
  %5495 = vmatprep.subr.bf16.mxu0 0
  %5496 = vmatpush1.bf16.msra.mxu0 %v5161
  %5497 = vmatprep.subr.bf16.mxu0 0
  %5498 = vmatpush1.bf16.msra.mxu0 %v5162
  %5499 = vmatprep.subr.bf16.mxu0 0
  %5500 = vmatpush1.bf16.msra.mxu0 %v5163
  %5501 = vmatprep.subr.bf16.mxu0 0
  %5502 = vmatpush1.bf16.msra.mxu0 %v5164
  %5503 = vmatprep.subr.bf16.mxu0 0
  %5504 = vmatpush1.bf16.msra.mxu0 %v5165
  %5505 = vmatprep.subr.bf16.mxu0 0
  %5506 = vmatpush1.bf16.msra.mxu0 %v5166
  %5507 = vmatprep.subr.bf16.mxu0 0
  %5508 = vmatpush1.bf16.msra.mxu0 %v5167
  %5509 = vmatprep.subr.bf16.mxu0 0
  %5510 = vmatpush1.bf16.msra.mxu0 %v5168
  %5511 = vmatprep.subr.bf16.mxu0 0
  %5512 = vmatpush1.bf16.msra.mxu0 %v5169
  %5513 = vmatprep.subr.bf16.mxu0 0
  %5514 = vmatpush1.bf16.msra.mxu0 %v5170
  %5515 = vmatprep.subr.bf16.mxu0 0
  %5516 = vmatpush1.bf16.msra.mxu0 %v5171
  %5517 = vmatprep.subr.bf16.mxu0 0
  %5518 = vmatpush1.bf16.msra.mxu0 %v5172
  %5519 = vmatprep.subr.bf16.mxu0 0
  %5520 = vmatpush1.bf16.msra.mxu0 %v5173
  %5521 = vmatprep.mubr.bf16.mxu0 %v4324
  %5522 = vmatmul.mubr.bf16.gmra.mrb[0].mxu0 %v4323
  %v5523 = vpop.f32.mrb[0].mxu0
  %v5524 = vadd.f32 %v5483, %v5523
  %v5525 = vpop.f32.mrb[0].mxu0
  %v5526 = vpop.f32.mrb[0].mxu0
  %v5527 = vadd.f32 %v5486, %v5526
  %v5528 = vpop.f32.mrb[0].mxu0
  %5529 = vdwg.mxu0
  %5530 = vmatprep.subr.bf16.mxu0 0
  %5531 = vmatpush1.bf16.msra.mxu0 %v5174
  %5532 = vmatprep.subr.bf16.mxu0 0
  %5533 = vmatpush1.bf16.msra.mxu0 %v5175
  %5534 = vmatprep.subr.bf16.mxu0 0
  %5535 = vmatpush1.bf16.msra.mxu0 %v5176
  %5536 = vmatprep.subr.bf16.mxu0 0
  %5537 = vmatpush1.bf16.msra.mxu0 %v5177
  %5538 = vmatprep.subr.bf16.mxu0 0
  %5539 = vmatpush1.bf16.msra.mxu0 %v5178
  %5540 = vmatprep.subr.bf16.mxu0 0
  %5541 = vmatpush1.bf16.msra.mxu0 %v5179
  %5542 = vmatprep.subr.bf16.mxu0 0
  %5543 = vmatpush1.bf16.msra.mxu0 %v5180
  %5544 = vmatprep.subr.bf16.mxu0 0
  %5545 = vmatpush1.bf16.msra.mxu0 %v5181
  %5546 = vmatprep.subr.bf16.mxu0 0
  %5547 = vmatpush1.bf16.msra.mxu0 %v5182
  %5548 = vmatprep.subr.bf16.mxu0 0
  %5549 = vmatpush1.bf16.msra.mxu0 %v5183
  %5550 = vmatprep.subr.bf16.mxu0 0
  %5551 = vmatpush1.bf16.msra.mxu0 %v5184
  %5552 = vmatprep.subr.bf16.mxu0 0
  %5553 = vmatpush1.bf16.msra.mxu0 %v5185
  %5554 = vmatprep.subr.bf16.mxu0 0
  %5555 = vmatpush1.bf16.msra.mxu0 %v5186
  %5556 = vmatprep.subr.bf16.mxu0 0
  %5557 = vmatpush1.bf16.msra.mxu0 %v5187
  %5558 = vmatprep.subr.bf16.mxu0 0
  %5559 = vmatpush1.bf16.msra.mxu0 %v5188
  %5560 = vmatprep.subr.bf16.mxu0 0
  %5561 = vmatpush1.bf16.msra.mxu0 %v5189
  %5562 = vmatprep.mubr.bf16.mxu0 %v4326
  %5563 = vmatmul.mubr.bf16.gmra.mrb[0].mxu0 %v4325
  %v5564 = vpop.f32.mrb[0].mxu0
  %v5565 = vadd.f32 %v5524, %v5564
  %v5566 = vpop.f32.mrb[0].mxu0
  %v5567 = vpop.f32.mrb[0].mxu0
  %v5568 = vadd.f32 %v5527, %v5567
  %v5569 = vpop.f32.mrb[0].mxu0
  %5570 = vdwg.mxu0
  %5571 = vmatprep.subr.bf16.mxu0 0
  %5572 = vmatpush1.bf16.msra.mxu0 %v5190
  %5573 = vmatprep.subr.bf16.mxu0 0
  %5574 = vmatpush1.bf16.msra.mxu0 %v5191
  %5575 = vmatprep.subr.bf16.mxu0 0
  %5576 = vmatpush1.bf16.msra.mxu0 %v5192
  %5577 = vmatprep.subr.bf16.mxu0 0
  %5578 = vmatpush1.bf16.msra.mxu0 %v5193
  %5579 = vmatprep.subr.bf16.mxu0 0
  %5580 = vmatpush1.bf16.msra.mxu0 %v5194
  %5581 = vmatprep.subr.bf16.mxu0 0
  %5582 = vmatpush1.bf16.msra.mxu0 %v5195
  %5583 = vmatprep.subr.bf16.mxu0 0
  %5584 = vmatpush1.bf16.msra.mxu0 %v5196
  %5585 = vmatprep.subr.bf16.mxu0 0
  %5586 = vmatpush1.bf16.msra.mxu0 %v5197
  %5587 = vmatprep.subr.bf16.mxu0 0
  %5588 = vmatpush1.bf16.msra.mxu0 %v5198
  %5589 = vmatprep.subr.bf16.mxu0 0
  %5590 = vmatpush1.bf16.msra.mxu0 %v5199
  %5591 = vmatprep.subr.bf16.mxu0 0
  %5592 = vmatpush1.bf16.msra.mxu0 %v5200
  %5593 = vmatprep.subr.bf16.mxu0 0
  %5594 = vmatpush1.bf16.msra.mxu0 %v5201
  %5595 = vmatprep.subr.bf16.mxu0 0
  %5596 = vmatpush1.bf16.msra.mxu0 %v5202
  %5597 = vmatprep.subr.bf16.mxu0 0
  %5598 = vmatpush1.bf16.msra.mxu0 %v5203
  %5599 = vmatprep.subr.bf16.mxu0 0
  %5600 = vmatpush1.bf16.msra.mxu0 %v5204
  %5601 = vmatprep.subr.bf16.mxu0 0
  %5602 = vmatpush1.bf16.msra.mxu0 %v5205
  %5603 = vmatprep.mubr.bf16.mxu0 %v4328
  %5604 = vmatmul.mubr.bf16.gmra.mrb[0].mxu0 %v4327
  %v5605 = vpop.f32.mrb[0].mxu0
  %v5606 = vadd.f32 %v5565, %v5605
  %v5607 = vpop.f32.mrb[0].mxu0
  %v5608 = vpop.f32.mrb[0].mxu0
  %v5609 = vadd.f32 %v5568, %v5608
  %v5610 = vpop.f32.mrb[0].mxu0
  %5611 = vdwg.mxu0
  %5612 = vmatprep.subr.bf16.mxu0 0
  %5613 = vmatpush1.bf16.msra.mxu0 %v5206
  %5614 = vmatprep.subr.bf16.mxu0 0
  %5615 = vmatpush1.bf16.msra.mxu0 %v5207
  %5616 = vmatprep.subr.bf16.mxu0 0
  %5617 = vmatpush1.bf16.msra.mxu0 %v5208
  %5618 = vmatprep.subr.bf16.mxu0 0
  %5619 = vmatpush1.bf16.msra.mxu0 %v5209
  %5620 = vmatprep.subr.bf16.mxu0 0
  %5621 = vmatpush1.bf16.msra.mxu0 %v5210
  %5622 = vmatprep.subr.bf16.mxu0 0
  %5623 = vmatpush1.bf16.msra.mxu0 %v5211
  %5624 = vmatprep.subr.bf16.mxu0 0
  %5625 = vmatpush1.bf16.msra.mxu0 %v5212
  %5626 = vmatprep.subr.bf16.mxu0 0
  %5627 = vmatpush1.bf16.msra.mxu0 %v5213
  %5628 = vmatprep.subr.bf16.mxu0 0
  %5629 = vmatpush1.bf16.msra.mxu0 %v5214
  %5630 = vmatprep.subr.bf16.mxu0 0
  %5631 = vmatpush1.bf16.msra.mxu0 %v5215
  %5632 = vmatprep.subr.bf16.mxu0 0
  %5633 = vmatpush1.bf16.msra.mxu0 %v5216
  %5634 = vmatprep.subr.bf16.mxu0 0
  %5635 = vmatpush1.bf16.msra.mxu0 %v5217
  %5636 = vmatprep.subr.bf16.mxu0 0
  %5637 = vmatpush1.bf16.msra.mxu0 %v5218
  %5638 = vmatprep.subr.bf16.mxu0 0
  %5639 = vmatpush1.bf16.msra.mxu0 %v5219
  %5640 = vmatprep.subr.bf16.mxu0 0
  %5641 = vmatpush1.bf16.msra.mxu0 %v5220
  %5642 = vmatprep.subr.bf16.mxu0 0
  %5643 = vmatpush1.bf16.msra.mxu0 %v5221
  %5644 = vmatprep.mubr.bf16.mxu0 %v4330
  %5645 = vmatmul.mubr.bf16.gmra.mrb[0].mxu0 %v4329
  %v5646 = vpop.f32.mrb[0].mxu0
  %v5647 = vadd.f32 %v5606, %v5646
  %v5648 = vpop.f32.mrb[0].mxu0
  %v5649 = vpop.f32.mrb[0].mxu0
  %v5650 = vadd.f32 %v5609, %v5649
  %v5651 = vpop.f32.mrb[0].mxu0
  %5652 = vdwg.mxu0
  %5653 = vmatprep.subr.bf16.mxu0 0
  %5654 = vmatpush1.bf16.msra.mxu0 %v5222
  %5655 = vmatprep.subr.bf16.mxu0 0
  %5656 = vmatpush1.bf16.msra.mxu0 %v5223
  %5657 = vmatprep.subr.bf16.mxu0 0
  %5658 = vmatpush1.bf16.msra.mxu0 %v5224
  %5659 = vmatprep.subr.bf16.mxu0 0
  %5660 = vmatpush1.bf16.msra.mxu0 %v5225
  %5661 = vmatprep.subr.bf16.mxu0 0
  %5662 = vmatpush1.bf16.msra.mxu0 %v5226
  %5663 = vmatprep.subr.bf16.mxu0 0
  %5664 = vmatpush1.bf16.msra.mxu0 %v5227
  %5665 = vmatprep.subr.bf16.mxu0 0
  %5666 = vmatpush1.bf16.msra.mxu0 %v5228
  %5667 = vmatprep.subr.bf16.mxu0 0
  %5668 = vmatpush1.bf16.msra.mxu0 %v5229
  %5669 = vmatprep.subr.bf16.mxu0 0
  %5670 = vmatpush1.bf16.msra.mxu0 %v5230
  %5671 = vmatprep.subr.bf16.mxu0 0
  %5672 = vmatpush1.bf16.msra.mxu0 %v5231
  %5673 = vmatprep.subr.bf16.mxu0 0
  %5674 = vmatpush1.bf16.msra.mxu0 %v5232
  %5675 = vmatprep.subr.bf16.mxu0 0
  %5676 = vmatpush1.bf16.msra.mxu0 %v5233
  %5677 = vmatprep.subr.bf16.mxu0 0
  %5678 = vmatpush1.bf16.msra.mxu0 %v5234
  %5679 = vmatprep.subr.bf16.mxu0 0
  %5680 = vmatpush1.bf16.msra.mxu0 %v5235
  %5681 = vmatprep.subr.bf16.mxu0 0
  %5682 = vmatpush1.bf16.msra.mxu0 %v5236
  %5683 = vmatprep.subr.bf16.mxu0 0
  %5684 = vmatpush1.bf16.msra.mxu0 %v5237
  %5685 = vmatprep.mubr.bf16.mxu0 %v4332
  %5686 = vmatmul.mubr.bf16.gmra.mrb[0].mxu0 %v4331
  %v5687 = vpop.f32.mrb[0].mxu0
  %v5688 = vadd.f32 %v5647, %v5687
  %v5689 = vpop.f32.mrb[0].mxu0
  %v5690 = vpop.f32.mrb[0].mxu0
  %v5691 = vadd.f32 %v5650, %v5690
  %v5692 = vpop.f32.mrb[0].mxu0
  %5693 = vdwg.mxu0
  %v5694 = vadd.f32 %v3657, %v5688
  %v5695 = vadd.f32 %v3658, %v5691
  %s5696 = scalar_lea.vmem %s12, 1
  %v5697 = vld [vmem:[%s5696] sm:$0x1]
  %s5698 = scalar_lea.vmem %s13, 1
  %v5699 = vld [vmem:[%s5698] sm:$0x1]
  %v5700 = vsel %vm187, %v5694, 0.0
  %5701 = vadd.xlane.f32.xlu0 %v5700
  %v5702 = vpop.xlane.xlu0 %5701
  %v5703 = vsel %vm187, %v5695, 0.0
  %5704 = vadd.xlane.f32.xlu0 %v5703
  %v5705 = vpop.xlane.xlu0 %5704
  %v5706 = vmul.f32 %v5702, %v835
  %v5707 = vmul.f32 %v5705, %v835
  %v5708 = vsub.f32 %v5694, %v5706
  %v5709 = vsub.f32 %v5695, %v5707
  %v5710 = vmul.f32 %v5708, %v5708
  %v5711 = vmul.f32 %v5709, %v5709
  %v5712 = vsel %vm187, %v5710, 0.0
  %5713 = vadd.xlane.f32.xlu0 %v5712
  %v5714 = vpop.xlane.xlu0 %5713
  %v5715 = vsel %vm187, %v5711, 0.0
  %5716 = vadd.xlane.f32.xlu0 %v5715
  %v5717 = vpop.xlane.xlu0 %5716
  %v5718 = vmul.f32 %v5714, %v835
  %v5719 = vmul.f32 %v5717, %v835
  %v5720 = vadd.f32 %v5718, 1e-05
  %v5721 = vadd.f32 %v5719, 1e-05
  %v5722 = vrsqrt.pop %v5720
  %v5723 = vrsqrt.pop %v5721
  %v5724 = vmul.f32 %v5708, %v5722
  %v5725 = vmul.f32 %v5709, %v5723
  %v5727 = vlaneseq
  %v5728 = vshrl.u32 %v5727, 7
  %v5729 = vsub.s32 0, %v5728
  %v5730 = vrot.slane %v5697, %v5729
  %v5732 = vmul.f32 %v5724, %v5730
  %v5733 = vmul.f32 %v5725, %v5730
  %v5735 = vlaneseq
  %v5736 = vshrl.u32 %v5735, 7
  %v5737 = vsub.s32 0, %v5736
  %v5738 = vrot.slane %v5699, %v5737
  %v5740 = vadd.f32 %v5732, %v5738
  %v5741 = vadd.f32 %v5733, %v5738
  %v5742 = vpack.c.bf16 %v5741, %v5740
  %v5743 = vld [vmem:[%s14] sm:$0xff]
  %v5744 = vld [vmem:[%s14 + $0x8] sm:$0xff]
  %v5745 = vld [vmem:[%s14 + $0x10] sm:$0xff]
  %v5746 = vld [vmem:[%s14 + $0x18] sm:$0xff]
  %v5747 = vld [vmem:[%s15] sm:$0x3]
  %v5749 = vlaneseq
  %v5750 = vshrl.u32 %v5749, 7
  %v5751 = vsub.s32 0, %v5750
  %v5752 = vrot.slane %v5747, %v5751
  %v5753 = vlaneseq
  %v5754 = vshrl.u32 %v5753, 7
  %v5755 = vsub.s32 1, %v5754
  %v5756 = vrot.slane %v5747, %v5755
  %v5763 = vunpack.c.l.b16 %v5743
  %v5764 = vunpack.c.h.b16 %v5743
  %v5765 = vunpack.c.l.b16 %v5744
  %v5766 = vunpack.c.h.b16 %v5744
  %v5767 = vunpack.c.l.b16 %v5745
  %v5768 = vunpack.c.h.b16 %v5745
  %v5769 = vunpack.c.l.b16 %v5746
  %v5770 = vunpack.c.h.b16 %v5746
  %v5771 = vpack.c.b16 %v5765, %v5763
  %v5772 = vpack.c.b16 %v5766, %v5764
  %v5773 = vpack.c.b16 %v5769, %v5767
  %v5774 = vpack.c.b16 %v5770, %v5768
  %v5780 = vsel %vm187, %v5742, 0
  %5782 = vmatprep.subr.bf16.mxu0 %v5772
  %5783 = vmatpush1.bf16.msra.mxu0 %v5771
  %5784 = vmatprep.subr.bf16.mxu0 %v5774
  %5785 = vmatpush1.bf16.msra.mxu0 %v5773
  %5786 = vmatprep.subr.bf16.mxu0 0
  %5787 = vmatpush1.bf16.msra.mxu0 0
  %5788 = vmatprep.subr.bf16.mxu0 0
  %5789 = vmatpush1.bf16.msra.mxu0 0
  %5790 = vmatprep.subr.bf16.mxu0 0
  %5791 = vmatpush1.bf16.msra.mxu0 0
  %5792 = vmatprep.subr.bf16.mxu0 0
  %5793 = vmatpush1.bf16.msra.mxu0 0
  %5794 = vmatprep.subr.bf16.mxu0 0
  %5795 = vmatpush1.bf16.msra.mxu0 0
  %5796 = vmatprep.subr.bf16.mxu0 0
  %5797 = vmatpush1.bf16.msra.mxu0 0
  %5798 = vmatprep.subr.bf16.mxu0 0
  %5799 = vmatpush1.bf16.msra.mxu0 0
  %5800 = vmatprep.subr.bf16.mxu0 0
  %5801 = vmatpush1.bf16.msra.mxu0 0
  %5802 = vmatprep.subr.bf16.mxu0 0
  %5803 = vmatpush1.bf16.msra.mxu0 0
  %5804 = vmatprep.subr.bf16.mxu0 0
  %5805 = vmatpush1.bf16.msra.mxu0 0
  %5806 = vmatprep.subr.bf16.mxu0 0
  %5807 = vmatpush1.bf16.msra.mxu0 0
  %5808 = vmatprep.subr.bf16.mxu0 0
  %5809 = vmatpush1.bf16.msra.mxu0 0
  %5810 = vmatprep.subr.bf16.mxu0 0
  %5811 = vmatpush1.bf16.msra.mxu0 0
  %5812 = vmatprep.subr.bf16.mxu0 0
  %5813 = vmatpush1.bf16.msra.mxu0 0
  %5814 = vmatprep.mubr.bf16.mxu0 0
  %5815 = vmatmul.mubr.bf16.gmra.mrb[0].mxu0 %v5780
  %v5816 = vpop.f32.mrb[0].mxu0
  %v5817 = vadd.f32 %v5752, %v5816
  %v5818 = vpop.f32.mrb[0].mxu0
  %v5819 = vadd.f32 %v5756, %v5818
  %v5820 = vpop.f32.mrb[0].mxu0
  %v5821 = vadd.f32 %v5752, %v5820
  %v5822 = vpop.f32.mrb[0].mxu0
  %v5823 = vadd.f32 %v5756, %v5822
  %5824 = vdwg.mxu0
  %v5825 = vmax.f32 %v5817, 0.0
  %v5826 = vmax.f32 %v5819, 0.0
  %v5827 = vmax.f32 %v5821, 0.0
  %v5828 = vmax.f32 %v5823, 0.0
  %v5829 = vpack.c.bf16 %v5827, %v5825
  %v5830 = vpack.c.bf16 %v5828, %v5826
  %v5831 = vld [vmem:[%s16] sm:$0xff]
  %v5832 = vld [vmem:[%s16 + $0x8] sm:$0xff]
  %v5833 = vld [vmem:[%s16 + $0x10] sm:$0xff]
  %v5834 = vld [vmem:[%s16 + $0x18] sm:$0xff]
  %v5835 = vld [vmem:[%s16 + $0x20] sm:$0xff]
  %v5836 = vld [vmem:[%s16 + $0x28] sm:$0xff]
  %v5837 = vld [vmem:[%s16 + $0x30] sm:$0xff]
  %v5838 = vld [vmem:[%s16 + $0x38] sm:$0xff]
  %v5839 = vld [vmem:[%s16 + $0x40] sm:$0xff]
  %v5840 = vld [vmem:[%s16 + $0x48] sm:$0xff]
  %v5841 = vld [vmem:[%s16 + $0x50] sm:$0xff]
  %v5842 = vld [vmem:[%s16 + $0x58] sm:$0xff]
  %v5843 = vld [vmem:[%s16 + $0x60] sm:$0xff]
  %v5844 = vld [vmem:[%s16 + $0x68] sm:$0xff]
  %v5845 = vld [vmem:[%s16 + $0x70] sm:$0xff]
  %v5846 = vld [vmem:[%s16 + $0x78] sm:$0xff]
  %v5847 = vld [vmem:[%s16 + $0x80] sm:$0xff]
  %v5848 = vld [vmem:[%s16 + $0x88] sm:$0xff]
  %v5849 = vld [vmem:[%s16 + $0x90] sm:$0xff]
  %v5850 = vld [vmem:[%s16 + $0x98] sm:$0xff]
  %v5851 = vld [vmem:[%s16 + $0xa0] sm:$0xff]
  %v5852 = vld [vmem:[%s16 + $0xa8] sm:$0xff]
  %v5853 = vld [vmem:[%s16 + $0xb0] sm:$0xff]
  %v5854 = vld [vmem:[%s16 + $0xb8] sm:$0xff]
  %v5855 = vld [vmem:[%s16 + $0xc0] sm:$0xff]
  %v5856 = vld [vmem:[%s16 + $0xc8] sm:$0xff]
  %v5857 = vld [vmem:[%s16 + $0xd0] sm:$0xff]
  %v5858 = vld [vmem:[%s16 + $0xd8] sm:$0xff]
  %v5859 = vld [vmem:[%s16 + $0xe0] sm:$0xff]
  %v5860 = vld [vmem:[%s16 + $0xe8] sm:$0xff]
  %v5861 = vld [vmem:[%s16 + $0xf0] sm:$0xff]
  %v5862 = vld [vmem:[%s16 + $0xf8] sm:$0xff]
  %v5863 = vld [vmem:[%s17] sm:$0x3]
  %v5865 = vlaneseq
  %v5866 = vshrl.u32 %v5865, 7
  %v5867 = vsub.s32 0, %v5866
  %v5868 = vrot.slane %v5863, %v5867
  %v5869 = vlaneseq
  %v5870 = vshrl.u32 %v5869, 7
  %v5871 = vsub.s32 1, %v5870
  %v5872 = vrot.slane %v5863, %v5871
  %v5907 = vunpack.c.l.b16 %v5831
  %v5908 = vunpack.c.h.b16 %v5831
  %v5909 = vunpack.c.l.b16 %v5832
  %v5910 = vunpack.c.h.b16 %v5832
  %v5911 = vunpack.c.l.b16 %v5833
  %v5912 = vunpack.c.h.b16 %v5833
  %v5913 = vunpack.c.l.b16 %v5834
  %v5914 = vunpack.c.h.b16 %v5834
  %v5915 = vunpack.c.l.b16 %v5835
  %v5916 = vunpack.c.h.b16 %v5835
  %v5917 = vunpack.c.l.b16 %v5836
  %v5918 = vunpack.c.h.b16 %v5836
  %v5919 = vunpack.c.l.b16 %v5837
  %v5920 = vunpack.c.h.b16 %v5837
  %v5921 = vunpack.c.l.b16 %v5838
  %v5922 = vunpack.c.h.b16 %v5838
  %v5923 = vunpack.c.l.b16 %v5839
  %v5924 = vunpack.c.h.b16 %v5839
  %v5925 = vunpack.c.l.b16 %v5840
  %v5926 = vunpack.c.h.b16 %v5840
  %v5927 = vunpack.c.l.b16 %v5841
  %v5928 = vunpack.c.h.b16 %v5841
  %v5929 = vunpack.c.l.b16 %v5842
  %v5930 = vunpack.c.h.b16 %v5842
  %v5931 = vunpack.c.l.b16 %v5843
  %v5932 = vunpack.c.h.b16 %v5843
  %v5933 = vunpack.c.l.b16 %v5844
  %v5934 = vunpack.c.h.b16 %v5844
  %v5935 = vunpack.c.l.b16 %v5845
  %v5936 = vunpack.c.h.b16 %v5845
  %v5937 = vunpack.c.l.b16 %v5846
  %v5938 = vunpack.c.h.b16 %v5846
  %v5939 = vunpack.c.l.b16 %v5847
  %v5940 = vunpack.c.h.b16 %v5847
  %v5941 = vunpack.c.l.b16 %v5848
  %v5942 = vunpack.c.h.b16 %v5848
  %v5943 = vunpack.c.l.b16 %v5849
  %v5944 = vunpack.c.h.b16 %v5849
  %v5945 = vunpack.c.l.b16 %v5850
  %v5946 = vunpack.c.h.b16 %v5850
  %v5947 = vunpack.c.l.b16 %v5851
  %v5948 = vunpack.c.h.b16 %v5851
  %v5949 = vunpack.c.l.b16 %v5852
  %v5950 = vunpack.c.h.b16 %v5852
  %v5951 = vunpack.c.l.b16 %v5853
  %v5952 = vunpack.c.h.b16 %v5853
  %v5953 = vunpack.c.l.b16 %v5854
  %v5954 = vunpack.c.h.b16 %v5854
  %v5955 = vunpack.c.l.b16 %v5855
  %v5956 = vunpack.c.h.b16 %v5855
  %v5957 = vunpack.c.l.b16 %v5856
  %v5958 = vunpack.c.h.b16 %v5856
  %v5959 = vunpack.c.l.b16 %v5857
  %v5960 = vunpack.c.h.b16 %v5857
  %v5961 = vunpack.c.l.b16 %v5858
  %v5962 = vunpack.c.h.b16 %v5858
  %v5963 = vunpack.c.l.b16 %v5859
  %v5964 = vunpack.c.h.b16 %v5859
  %v5965 = vunpack.c.l.b16 %v5860
  %v5966 = vunpack.c.h.b16 %v5860
  %v5967 = vunpack.c.l.b16 %v5861
  %v5968 = vunpack.c.h.b16 %v5861
  %v5969 = vunpack.c.l.b16 %v5862
  %v5970 = vunpack.c.h.b16 %v5862
  %v5971 = vpack.c.b16 %v5909, %v5907
  %v5972 = vpack.c.b16 %v5910, %v5908
  %v5973 = vpack.c.b16 %v5913, %v5911
  %v5974 = vpack.c.b16 %v5914, %v5912
  %v5975 = vpack.c.b16 %v5917, %v5915
  %v5976 = vpack.c.b16 %v5918, %v5916
  %v5977 = vpack.c.b16 %v5921, %v5919
  %v5978 = vpack.c.b16 %v5922, %v5920
  %v5979 = vpack.c.b16 %v5925, %v5923
  %v5980 = vpack.c.b16 %v5926, %v5924
  %v5981 = vpack.c.b16 %v5929, %v5927
  %v5982 = vpack.c.b16 %v5930, %v5928
  %v5983 = vpack.c.b16 %v5933, %v5931
  %v5984 = vpack.c.b16 %v5934, %v5932
  %v5985 = vpack.c.b16 %v5937, %v5935
  %v5986 = vpack.c.b16 %v5938, %v5936
  %v5987 = vpack.c.b16 %v5941, %v5939
  %v5988 = vpack.c.b16 %v5942, %v5940
  %v5989 = vpack.c.b16 %v5945, %v5943
  %v5990 = vpack.c.b16 %v5946, %v5944
  %v5991 = vpack.c.b16 %v5949, %v5947
  %v5992 = vpack.c.b16 %v5950, %v5948
  %v5993 = vpack.c.b16 %v5953, %v5951
  %v5994 = vpack.c.b16 %v5954, %v5952
  %v5995 = vpack.c.b16 %v5957, %v5955
  %v5996 = vpack.c.b16 %v5958, %v5956
  %v5997 = vpack.c.b16 %v5961, %v5959
  %v5998 = vpack.c.b16 %v5962, %v5960
  %v5999 = vpack.c.b16 %v5965, %v5963
  %v6000 = vpack.c.b16 %v5966, %v5964
  %v6001 = vpack.c.b16 %v5969, %v5967
  %v6002 = vpack.c.b16 %v5970, %v5968
  %6035 = vmatprep.subr.bf16.mxu0 %v5972
  %6036 = vmatpush1.bf16.msra.mxu0 %v5971
  %6037 = vmatprep.subr.bf16.mxu0 %v5974
  %6038 = vmatpush1.bf16.msra.mxu0 %v5973
  %6039 = vmatprep.subr.bf16.mxu0 %v5976
  %6040 = vmatpush1.bf16.msra.mxu0 %v5975
  %6041 = vmatprep.subr.bf16.mxu0 %v5978
  %6042 = vmatpush1.bf16.msra.mxu0 %v5977
  %6043 = vmatprep.subr.bf16.mxu0 %v5980
  %6044 = vmatpush1.bf16.msra.mxu0 %v5979
  %6045 = vmatprep.subr.bf16.mxu0 %v5982
  %6046 = vmatpush1.bf16.msra.mxu0 %v5981
  %6047 = vmatprep.subr.bf16.mxu0 %v5984
  %6048 = vmatpush1.bf16.msra.mxu0 %v5983
  %6049 = vmatprep.subr.bf16.mxu0 %v5986
  %6050 = vmatpush1.bf16.msra.mxu0 %v5985
  %6051 = vmatprep.subr.bf16.mxu0 %v5988
  %6052 = vmatpush1.bf16.msra.mxu0 %v5987
  %6053 = vmatprep.subr.bf16.mxu0 %v5990
  %6054 = vmatpush1.bf16.msra.mxu0 %v5989
  %6055 = vmatprep.subr.bf16.mxu0 %v5992
  %6056 = vmatpush1.bf16.msra.mxu0 %v5991
  %6057 = vmatprep.subr.bf16.mxu0 %v5994
  %6058 = vmatpush1.bf16.msra.mxu0 %v5993
  %6059 = vmatprep.subr.bf16.mxu0 %v5996
  %6060 = vmatpush1.bf16.msra.mxu0 %v5995
  %6061 = vmatprep.subr.bf16.mxu0 %v5998
  %6062 = vmatpush1.bf16.msra.mxu0 %v5997
  %6063 = vmatprep.subr.bf16.mxu0 %v6000
  %6064 = vmatpush1.bf16.msra.mxu0 %v5999
  %6065 = vmatprep.subr.bf16.mxu0 %v6002
  %6066 = vmatpush1.bf16.msra.mxu0 %v6001
  %6067 = vmatprep.mubr.bf16.mxu0 %v5830
  %6068 = vmatmul.mubr.bf16.gmra.mrb[0].mxu0 %v5829
  %v6069 = vpop.f32.mrb[0].mxu0
  %v6070 = vadd.f32 %v5868, %v6069
  %v6071 = vpop.f32.mrb[0].mxu0
  %v6072 = vadd.f32 %v5872, %v6071
  %v6073 = vpop.f32.mrb[0].mxu0
  %v6074 = vadd.f32 %v5868, %v6073
  %v6075 = vpop.f32.mrb[0].mxu0
  %v6076 = vadd.f32 %v5872, %v6075
  %6077 = vdwg.mxu0
  %v6078 = vmax.f32 %v6070, 0.0
  %v6079 = vmax.f32 %v6072, 0.0
  %v6080 = vmax.f32 %v6074, 0.0
  %v6081 = vmax.f32 %v6076, 0.0
  %v6082 = vpack.c.bf16 %v6080, %v6078
  %v6083 = vpack.c.bf16 %v6081, %v6079
  %v6084 = vld [vmem:[%s18] sm:$0xf]
  %v6085 = vld [vmem:[%s18 + $0x4] sm:$0xf]
  %v6086 = vld [vmem:[%s18 + $0x8] sm:$0xf]
  %v6087 = vld [vmem:[%s18 + $0xc] sm:$0xf]
  %v6088 = vld [vmem:[%s18 + $0x10] sm:$0xf]
  %v6089 = vld [vmem:[%s18 + $0x14] sm:$0xf]
  %v6090 = vld [vmem:[%s18 + $0x18] sm:$0xf]
  %v6091 = vld [vmem:[%s18 + $0x1c] sm:$0xf]
  %v6092 = vld [vmem:[%s18 + $0x20] sm:$0xf]
  %v6093 = vld [vmem:[%s18 + $0x24] sm:$0xf]
  %v6094 = vld [vmem:[%s18 + $0x28] sm:$0xf]
  %v6095 = vld [vmem:[%s18 + $0x2c] sm:$0xf]
  %v6096 = vld [vmem:[%s18 + $0x30] sm:$0xf]
  %v6097 = vld [vmem:[%s18 + $0x34] sm:$0xf]
  %v6098 = vld [vmem:[%s18 + $0x38] sm:$0xf]
  %v6099 = vld [vmem:[%s18 + $0x3c] sm:$0xf]
  %v6100 = vld [vmem:[%s18 + $0x40] sm:$0xf]
  %v6101 = vld [vmem:[%s18 + $0x44] sm:$0xf]
  %v6102 = vld [vmem:[%s18 + $0x48] sm:$0xf]
  %v6103 = vld [vmem:[%s18 + $0x4c] sm:$0xf]
  %v6104 = vld [vmem:[%s18 + $0x50] sm:$0xf]
  %v6105 = vld [vmem:[%s18 + $0x54] sm:$0xf]
  %v6106 = vld [vmem:[%s18 + $0x58] sm:$0xf]
  %v6107 = vld [vmem:[%s18 + $0x5c] sm:$0xf]
  %v6108 = vld [vmem:[%s18 + $0x60] sm:$0xf]
  %v6109 = vld [vmem:[%s18 + $0x64] sm:$0xf]
  %v6110 = vld [vmem:[%s18 + $0x68] sm:$0xf]
  %v6111 = vld [vmem:[%s18 + $0x6c] sm:$0xf]
  %v6112 = vld [vmem:[%s18 + $0x70] sm:$0xf]
  %v6113 = vld [vmem:[%s18 + $0x74] sm:$0xf]
  %v6114 = vld [vmem:[%s18 + $0x78] sm:$0xf]
  %v6115 = vld [vmem:[%s18 + $0x7c] sm:$0xf]
  %v6116 = vld [vmem:[%s19] sm:$0x1]
  %v6118 = vlaneseq
  %v6119 = vshrl.u32 %v6118, 7
  %v6120 = vsub.s32 0, %v6119
  %v6121 = vrot.slane %v6116, %v6120
  %v6155 = vunpack.c.l.b16 %v6084
  %v6156 = vunpack.c.l.b16 %v6085
  %v6157 = vunpack.c.l.b16 %v6086
  %v6158 = vunpack.c.l.b16 %v6087
  %v6159 = vunpack.c.l.b16 %v6088
  %v6160 = vunpack.c.l.b16 %v6089
  %v6161 = vunpack.c.l.b16 %v6090
  %v6162 = vunpack.c.l.b16 %v6091
  %v6163 = vunpack.c.l.b16 %v6092
  %v6164 = vunpack.c.l.b16 %v6093
  %v6165 = vunpack.c.l.b16 %v6094
  %v6166 = vunpack.c.l.b16 %v6095
  %v6167 = vunpack.c.l.b16 %v6096
  %v6168 = vunpack.c.l.b16 %v6097
  %v6169 = vunpack.c.l.b16 %v6098
  %v6170 = vunpack.c.l.b16 %v6099
  %v6171 = vunpack.c.l.b16 %v6100
  %v6172 = vunpack.c.l.b16 %v6101
  %v6173 = vunpack.c.l.b16 %v6102
  %v6174 = vunpack.c.l.b16 %v6103
  %v6175 = vunpack.c.l.b16 %v6104
  %v6176 = vunpack.c.l.b16 %v6105
  %v6177 = vunpack.c.l.b16 %v6106
  %v6178 = vunpack.c.l.b16 %v6107
  %v6179 = vunpack.c.l.b16 %v6108
  %v6180 = vunpack.c.l.b16 %v6109
  %v6181 = vunpack.c.l.b16 %v6110
  %v6182 = vunpack.c.l.b16 %v6111
  %v6183 = vunpack.c.l.b16 %v6112
  %v6184 = vunpack.c.l.b16 %v6113
  %v6185 = vunpack.c.l.b16 %v6114
  %v6186 = vunpack.c.l.b16 %v6115
  %v6187 = vpack.c.b16 %v6156, %v6155
  %v6188 = vpack.c.b16 %v6158, %v6157
  %v6189 = vpack.c.b16 %v6160, %v6159
  %v6190 = vpack.c.b16 %v6162, %v6161
  %v6191 = vpack.c.b16 %v6164, %v6163
  %v6192 = vpack.c.b16 %v6166, %v6165
  %v6193 = vpack.c.b16 %v6168, %v6167
  %v6194 = vpack.c.b16 %v6170, %v6169
  %v6195 = vpack.c.b16 %v6172, %v6171
  %v6196 = vpack.c.b16 %v6174, %v6173
  %v6197 = vpack.c.b16 %v6176, %v6175
  %v6198 = vpack.c.b16 %v6178, %v6177
  %v6199 = vpack.c.b16 %v6180, %v6179
  %v6200 = vpack.c.b16 %v6182, %v6181
  %v6201 = vpack.c.b16 %v6184, %v6183
  %v6202 = vpack.c.b16 %v6186, %v6185
  %6219 = vmatprep.subr.bf16.mxu0 0
  %6220 = vmatpush1.bf16.msra.mxu0 %v6187
  %6221 = vmatprep.subr.bf16.mxu0 0
  %6222 = vmatpush1.bf16.msra.mxu0 %v6188
  %6223 = vmatprep.subr.bf16.mxu0 0
  %6224 = vmatpush1.bf16.msra.mxu0 %v6189
  %6225 = vmatprep.subr.bf16.mxu0 0
  %6226 = vmatpush1.bf16.msra.mxu0 %v6190
  %6227 = vmatprep.subr.bf16.mxu0 0
  %6228 = vmatpush1.bf16.msra.mxu0 %v6191
  %6229 = vmatprep.subr.bf16.mxu0 0
  %6230 = vmatpush1.bf16.msra.mxu0 %v6192
  %6231 = vmatprep.subr.bf16.mxu0 0
  %6232 = vmatpush1.bf16.msra.mxu0 %v6193
  %6233 = vmatprep.subr.bf16.mxu0 0
  %6234 = vmatpush1.bf16.msra.mxu0 %v6194
  %6235 = vmatprep.subr.bf16.mxu0 0
  %6236 = vmatpush1.bf16.msra.mxu0 %v6195
  %6237 = vmatprep.subr.bf16.mxu0 0
  %6238 = vmatpush1.bf16.msra.mxu0 %v6196
  %6239 = vmatprep.subr.bf16.mxu0 0
  %6240 = vmatpush1.bf16.msra.mxu0 %v6197
  %6241 = vmatprep.subr.bf16.mxu0 0
  %6242 = vmatpush1.bf16.msra.mxu0 %v6198
  %6243 = vmatprep.subr.bf16.mxu0 0
  %6244 = vmatpush1.bf16.msra.mxu0 %v6199
  %6245 = vmatprep.subr.bf16.mxu0 0
  %6246 = vmatpush1.bf16.msra.mxu0 %v6200
  %6247 = vmatprep.subr.bf16.mxu0 0
  %6248 = vmatpush1.bf16.msra.mxu0 %v6201
  %6249 = vmatprep.subr.bf16.mxu0 0
  %6250 = vmatpush1.bf16.msra.mxu0 %v6202
  %6251 = vmatprep.mubr.bf16.mxu0 %v6083
  %6252 = vmatmul.mubr.bf16.gmra.mrb[0].mxu0 %v6082
  %v6253 = vpop.f32.mrb[0].mxu0
  %v6254 = vadd.f32 %v6121, %v6253
  %v6255 = vpop.f32.mrb[0].mxu0
  %v6256 = vpop.f32.mrb[0].mxu0
  %v6257 = vadd.f32 %v6121, %v6256
  %v6258 = vpop.f32.mrb[0].mxu0
  %6259 = vdwg.mxu0
  %6262 = vrot.lane.b32.xlu0 %v6254, 32
  %v6263 = vpop.permute.xlu0 %6262
  %6264 = vrot.lane.b32.xlu0 %v6257, 32
  %v6265 = vpop.permute.xlu0 %6264
  %v6268 = vsel %vm187, %v5740, %v6263
  %v6269 = vsel %vm187, %v5741, %v6265
  %6270 = vst [vmem:[%s22] sm:$0xff] %v6268
  %6271 = vst [vmem:[%s22 + $0x8] sm:$0xff] %v6269
  // Predicated region
  $region90: #{_forward.1} parent=0 // pred_check
    _
  $region91: #{_forward.1} parent=0 // pred_check_branch
    %6273 = sbr.rel (0) target = $region93
  $region92: #{_forward.1} parent=0 // pred_region
    _
  $region93: #{_forward.1} parent=0 // pred_fallthru
    _
  // Predicated region
  $region94: #{_forward.1} parent=0 // pred_check
    _
  $region95: #{_forward.1} parent=0 // pred_check_branch
    %6275 = sbr.rel (0) target = $region97
  $region96: #{_forward.1} parent=0 // pred_region
    _
  $region97: #{_forward.1} parent=0 // pred_fallthru
    _

</llo_original>
